<compile_context>
chip_gen: v7x
topology: tpu7x:2x2x1
jax: 0.10.0
libtpu: 0.0.40
codegen_flags: <defaults>
</compile_context>

<pallas_src>
import functools

import jax
import jax.numpy as jnp
from jax.experimental import pallas as pl
from jax.experimental.pallas import tpu as pltpu


# ----------------------------------------------------------------------------- model config

PATCH = 4            # patch-embedding patch size
EMBED_C = 32         # backbone channel dim (swin_b uses 128)
HEADS = 4
HEAD_DIM = EMBED_C // HEADS
WIN = 4              # window size (swin_b uses 7)
MLP_HIDDEN = 4 * EMBED_C
EMBED_DIM = 64       # SwinReID embedding_dim (2048 in the original module)
NUM_CLASSES = 10
CLS_PAD = 128        # classifier output padded to lane width
ROW_TILE = 512       # max rows per grid step for token-level kernels (VMEM-safe on v7x too)


# ----------------------------------------------------------------------------- Pallas kernels

def _patch_embed_ln_kernel(x_ref, w_ref, wb_ref, g_ref, b_ref, o_ref):
    # (patch-flattened pixels) @ W + b  ->  LayerNorm
    h = jnp.dot(x_ref[...].astype(jnp.bfloat16), w_ref[...].astype(jnp.bfloat16),
                preferred_element_type=jnp.float32) + wb_ref[...]
    m = jnp.mean(h, axis=-1, keepdims=True)
    v = jnp.mean((h - m) ** 2, axis=-1, keepdims=True)
    o_ref[...] = ((h - m) * jax.lax.rsqrt(v + 1e-5) * g_ref[...] + b_ref[...]).astype(o_ref.dtype)


def _ln_qkv_kernel(x_ref, g_ref, b_ref, w_ref, wb_ref, o_ref):
    # LayerNorm -> qkv Linear, fused
    x = x_ref[...]
    m = jnp.mean(x, axis=-1, keepdims=True)
    v = jnp.mean((x - m) ** 2, axis=-1, keepdims=True)
    h = (x - m) * jax.lax.rsqrt(v + 1e-5) * g_ref[...] + b_ref[...]
    o_ref[...] = (jnp.dot(h.astype(jnp.bfloat16), w_ref[...].astype(jnp.bfloat16),
                          preferred_element_type=jnp.float32) + wb_ref[...]).astype(o_ref.dtype)


def _ln_mlp_res_kernel(x_ref, g_ref, b_ref, w1_ref, b1_ref, w2_ref, b2_ref, o_ref):
    # LayerNorm -> Linear -> GELU -> Linear -> +residual, fused
    x = x_ref[...]
    m = jnp.mean(x, axis=-1, keepdims=True)
    v = jnp.mean((x - m) ** 2, axis=-1, keepdims=True)
    h = (x - m) * jax.lax.rsqrt(v + 1e-5) * g_ref[...] + b_ref[...]
    h = jnp.dot(h.astype(jnp.bfloat16), w1_ref[...].astype(jnp.bfloat16),
                preferred_element_type=jnp.float32) + b1_ref[...]
    # TODO(synk): torchvision Swin uses exact (erf) GELU; tanh approximation used here.
    h = jax.nn.gelu(h, approximate=True)
    h = jnp.dot(h.astype(jnp.bfloat16), w2_ref[...].astype(jnp.bfloat16),
                preferred_element_type=jnp.float32) + b2_ref[...]
    o_ref[...] = (x + h).astype(o_ref.dtype)


def _win_attn_proj_kernel(qkv_ref, resid_ref, bias_ref, pw_ref, pb_ref, o_ref,
                          *, scale, heads, head_dim):
    # Batched windows per grid step.  q/k/v and per-head splits are static in-kernel slices;
    # attention output is folded into the proj matmul per head (no head concat / reshape),
    # proj bias + residual are added here so the stored output is lane-dense width C.
    wb, L, _ = qkv_ref.shape
    C = heads * head_dim
    qkv = qkv_ref[...]                                    # (wb, L, 3C) f32
    bias = bias_ref[...]                                  # (H, L, L)   f32
    pw = pw_ref[...].astype(jnp.bfloat16)                 # (C, C)
    acc = jnp.zeros((wb, L, C), jnp.float32)
    for h in range(heads):
        lo = h * head_dim
        q = qkv[..., lo:lo + head_dim] * scale
        k = qkv[..., C + lo:C + lo + head_dim]
        v = qkv[..., 2 * C + lo:2 * C + lo + head_dim]
        s = jnp.einsum("bld,bmd->blm", q, k, preferred_element_type=jnp.float32)
        s = s + bias[h][None]
        s = s - jnp.max(s, axis=-1, keepdims=True)
        p = jnp.exp(s)
        p = p * pl.reciprocal(jnp.sum(p, axis=-1, keepdims=True), approx=True)
        o_h = jnp.einsum("blm,bmd->bld", p, v, preferred_element_type=jnp.float32)
        pw_h = jnp.broadcast_to(pw[lo:lo + head_dim, :][None], (wb, head_dim, C))
        acc = acc + jnp.einsum("bld,bdc->blc", o_h.astype(jnp.bfloat16), pw_h,
                               preferred_element_type=jnp.float32)
    o_ref[...] = (resid_ref[...] + acc + pb_ref[...][None]).astype(o_ref.dtype)


def _ln_pool_kernel(x_ref, g_ref, b_ref, o_ref):
    # final LayerNorm -> global average pool over tokens
    x = x_ref[...]                                        # (B, L, C)
    m = jnp.mean(x, axis=-1, keepdims=True)
    v = jnp.mean((x - m) ** 2, axis=-1, keepdims=True)
    y = (x - m) * jax.lax.rsqrt(v + 1e-5) * g_ref[...] + b_ref[...]
    o_ref[...] = jnp.mean(y, axis=1).astype(o_ref.dtype)


def _head_bn_cls_kernel(x_ref, hw_ref, hb_ref, g_ref, b_ref, cw_ref,
                        ft_ref, fi_ref, out_ref):
    # head Linear -> BatchNorm1d (training-mode batch stats) -> bias-free classifier, fused
    f_t = jnp.dot(x_ref[...], hw_ref[...], preferred_element_type=jnp.float32) + hb_ref[...]
    m = jnp.mean(f_t, axis=0, keepdims=True)
    var = jnp.mean((f_t - m) ** 2, axis=0, keepdims=True)
    f_i = (f_t - m) * jax.lax.rsqrt(var + 1e-5) * g_ref[...] + b_ref[...]
    ft_ref[...] = f_t.astype(ft_ref.dtype)
    fi_ref[...] = f_i.astype(fi_ref.dtype)
    out_ref[...] = jnp.dot(f_i, cw_ref[...], preferred_element_type=jnp.float32).astype(out_ref.dtype)


# ----------------------------------------------------------------------------- pallas_call wrappers

def _pick_row_tile(m, target):
    if m <= target:
        return m
    for t in range(target, 7, -8):
        if m % t == 0:
            return t
    return m


def _row_tiled_call(kernel, x, params2d, n_out, tile_target=ROW_TILE):
    """Row-parallel fused kernel: x (M, K) is tiled along rows, params are full per-tile."""
    M, K = x.shape
    tm = _pick_row_tile(M, tile_target)
    in_specs = [pl.BlockSpec((tm, K), lambda i: (i, 0))]
    in_specs += [pl.BlockSpec(a.shape, lambda i: (0, 0)) for a in params2d]
    return pl.pallas_call(
        kernel,
        out_shape=jax.ShapeDtypeStruct((M, n_out), jnp.float32),
        grid=(M // tm,),
        in_specs=in_specs,
        out_specs=pl.BlockSpec((tm, n_out), lambda i: (i, 0)),
        compiler_params=pltpu.CompilerParams(dimension_semantics=("parallel",)),
    )(x, *params2d)


def window_attention_block(qkv_win, resid_win, bias, proj_w, proj_b2d, *, scale):
    """qkv_win: (BW, L, 3C), resid_win: (BW, L, C), bias: (H, L, L).  Returns (BW, L, C)."""
    BW, L, C3 = qkv_win.shape
    C = C3 // 3
    H = bias.shape[0]
    wb = _pick_row_tile(BW, 16)                           # many windows per grid step
    kern = functools.partial(_win_attn_proj_kernel, scale=scale, heads=H, head_dim=C // H)
    return pl.pallas_call(
        kern,
        out_shape=jax.ShapeDtypeStruct((BW, L, C), jnp.float32),
        grid=(BW // wb,),
        in_specs=[
            pl.BlockSpec((wb, L, C3), lambda i: (i, 0, 0)),
            pl.BlockSpec((wb, L, C), lambda i: (i, 0, 0)),
            pl.BlockSpec((H, L, L), lambda i: (0, 0, 0)),
            pl.BlockSpec(proj_w.shape, lambda i: (0, 0)),
            pl.BlockSpec(proj_b2d.shape, lambda i: (0, 0)),
        ],
        out_specs=pl.BlockSpec((wb, L, C), lambda i: (i, 0, 0)),
        compiler_params=pltpu.CompilerParams(dimension_semantics=("parallel",)),
    )(qkv_win, resid_win, bias, proj_w, proj_b2d)


def final_ln_pool(tok3d, g, b):
    B, L, C = tok3d.shape
    return pl.pallas_call(
        _ln_pool_kernel,
        out_shape=jax.ShapeDtypeStruct((B, C), jnp.float32),
        in_specs=[pl.BlockSpec(memory_space=pltpu.MemorySpace.VMEM)] * 3,
        out_specs=pl.BlockSpec(memory_space=pltpu.MemorySpace.VMEM),
    )(tok3d, g.reshape(1, 1, C), b.reshape(1, 1, C))


def head_bn_classifier(feat, head_w, head_b, bn_g, bn_b, cls_w_pad):
    B, _ = feat.shape
    E = head_w.shape[1]
    npad = cls_w_pad.shape[1]
    return pl.pallas_call(
        _head_bn_cls_kernel,
        out_shape=(jax.ShapeDtypeStruct((B, E), jnp.float32),
                   jax.ShapeDtypeStruct((B, E), jnp.float32),
                   jax.ShapeDtypeStruct((B, npad), jnp.float32)),
        in_specs=[pl.BlockSpec(memory_space=pltpu.MemorySpace.VMEM)] * 6,
        out_specs=(pl.BlockSpec(memory_space=pltpu.MemorySpace.VMEM),) * 3,
    )(feat, head_w, head_b.reshape(1, E), bn_g.reshape(1, E), bn_b.reshape(1, E), cls_w_pad)


# ----------------------------------------------------------------------------- params

def init_params(key, in_chans=3):
    ks = list(jax.random.split(key, 32))

    def nrm(shape, std):
        return jax.random.normal(ks.pop(), shape, jnp.float32) * std

    p = {}
    # patch embedding (Conv2d(3, C, 4, 4) expressed as matmul over flattened patches)
    p["pe_w"] = nrm((in_chans * PATCH * PATCH, EMBED_C), 0.02)
    p["pe_b"] = jnp.zeros((EMBED_C,), jnp.float32)
    p["ln_pe_g"] = jnp.ones((EMBED_C,), jnp.float32)
    p["ln_pe_b"] = jnp.zeros((EMBED_C,), jnp.float32)
    # one swin block (non-shifted)
    p["ln1_g"] = jnp.ones((EMBED_C,), jnp.float32)
    p["ln1_b"] = jnp.zeros((EMBED_C,), jnp.float32)
    p["qkv_w"] = nrm((EMBED_C, 3 * EMBED_C), 0.02)
    p["qkv_b"] = jnp.zeros((3 * EMBED_C,), jnp.float32)
    rel_bias_table = nrm(((2 * WIN - 1) ** 2, HEADS), 0.02)
    p["proj_w"] = nrm((EMBED_C, EMBED_C), 0.02)
    p["proj_b"] = jnp.zeros((EMBED_C,), jnp.float32)
    p["ln2_g"] = jnp.ones((EMBED_C,), jnp.float32)
    p["ln2_b"] = jnp.zeros((EMBED_C,), jnp.float32)
    p["mlp_w1"] = nrm((EMBED_C, MLP_HIDDEN), 0.02)
    p["mlp_b1"] = jnp.zeros((MLP_HIDDEN,), jnp.float32)
    p["mlp_w2"] = nrm((MLP_HIDDEN, EMBED_C), 0.02)
    p["mlp_b2"] = jnp.zeros((EMBED_C,), jnp.float32)
    # final backbone norm
    p["lnf_g"] = jnp.ones((EMBED_C,), jnp.float32)
    p["lnf_b"] = jnp.zeros((EMBED_C,), jnp.float32)
    # SwinReID head (swin.head replaced by Linear(in_features, embedding_dim))
    p["head_w"] = nrm((EMBED_C, EMBED_DIM), 0.02)
    p["head_b"] = jnp.zeros((EMBED_DIM,), jnp.float32)
    # bottleneck = BatchNorm1d(embedding_dim), weights_init_kaiming -> weight 1, bias 0
    p["bn_g"] = jnp.ones((EMBED_DIM,), jnp.float32)
    p["bn_b"] = jnp.zeros((EMBED_DIM,), jnp.float32)
    # classifier = Linear(embedding_dim, num_classes, bias=False), init normal std=0.001
    cls_w = nrm((EMBED_DIM, NUM_CLASSES), 0.001)
    # zero-pad classifier output columns to lane width; sliced back outside the kernel
    p["cls_w_pad"] = jnp.zeros((EMBED_DIM, CLS_PAD), jnp.float32).at[:, :NUM_CLASSES].set(cls_w)

    # precompute the relative-position bias once (depends only on the table and static WIN)
    coords = jnp.stack(
        jnp.meshgrid(jnp.arange(WIN), jnp.arange(WIN), indexing="ij"), axis=-1
    ).reshape(-1, 2)                                      # (L, 2)
    rel = coords[:, None, :] - coords[None, :, :] + (WIN - 1)
    idx = rel[..., 0] * (2 * WIN - 1) + rel[..., 1]       # (L, L)
    p["rel_bias"] = jnp.transpose(rel_bias_table[idx], (2, 0, 1))  # (H, L, L)
    return p


# ----------------------------------------------------------------------------- forward

def swin_reid_forward(x, p):
    """x: (B, 3, H, W) float32 NCHW.  Returns (f_t, f_i, out)."""
    B, Cin, H, W = x.shape
    Hp, Wp = H // PATCH, W // PATCH
    L_img = Hp * Wp
    M = B * L_img

    # ---- patch embedding (Conv2d(3,C,4,4) == per-patch flatten + matmul) fused with LayerNorm
    xp = x.reshape(B, Cin, Hp, PATCH, Wp, PATCH)
    xp = jnp.transpose(xp, (0, 2, 4, 1, 3, 5)).reshape(M, Cin * PATCH * PATCH)
    tok = _row_tiled_call(
        _patch_embed_ln_kernel, xp,
        [p["pe_w"], p["pe_b"].reshape(1, -1),
         p["ln_pe_g"].reshape(1, -1), p["ln_pe_b"].reshape(1, -1)],
        EMBED_C)

    # ---- one (non-shifted) swin transformer block
    # TODO(synk): real swin_b has 24 blocks across 4 stages with alternating shifted windows
    #             and patch merging; only a single non-shifted block is modeled here.
    L_win = WIN * WIN
    nW = (Hp // WIN) * (Wp // WIN)
    BW = B * nW

    # fused LN1 -> qkv linear
    qkv = _row_tiled_call(
        _ln_qkv_kernel, tok,
        [p["ln1_g"].reshape(1, -1), p["ln1_b"].reshape(1, -1),
         p["qkv_w"], p["qkv_b"].reshape(1, -1)],
        3 * EMBED_C)

    def window_partition(t, c):
        t = t.reshape(B, Hp // WIN, WIN, Wp // WIN, WIN, c)
        return jnp.transpose(t, (0, 1, 3, 2, 4, 5)).reshape(BW, L_win, c)

    def window_reverse(t, c):
        t = t.reshape(B, Hp // WIN, Wp // WIN, WIN, WIN, c)
        return jnp.transpose(t, (0, 1, 3, 2, 4, 5)).reshape(M, c)

    qkv_win = window_partition(qkv, 3 * EMBED_C)
    resid_win = window_partition(tok, EMBED_C)

    # fused windowed MHSA (rel-pos bias, online per-head proj) + proj bias + residual
    attn = window_attention_block(qkv_win, resid_win, p["rel_bias"],
                                  p["proj_w"], p["proj_b"].reshape(1, -1),
                                  scale=HEAD_DIM ** -0.5)
    tok = window_reverse(attn, EMBED_C)

    # fused LN2 -> MLP -> +residual
    tok = _row_tiled_call(
        _ln_mlp_res_kernel, tok,
        [p["ln2_g"].reshape(1, -1), p["ln2_b"].reshape(1, -1),
         p["mlp_w1"], p["mlp_b1"].reshape(1, -1),
         p["mlp_w2"], p["mlp_b2"].reshape(1, -1)],
        EMBED_C)

    # ---- fused final norm + global average pool (torchvision: norm -> avgpool -> flatten)
    feat = final_ln_pool(tok.reshape(B, L_img, EMBED_C), p["lnf_g"], p["lnf_b"])

    # ---- fused SwinReID head / bottleneck / classifier (exact semantics)
    # TODO(synk): BatchNorm1d uses training-mode batch statistics only (no running mean/var).
    f_t, f_i, out_pad = head_bn_classifier(feat, p["head_w"], p["head_b"],
                                           p["bn_g"], p["bn_b"], p["cls_w_pad"])
    return f_t, f_i, out_pad[:, :NUM_CLASSES]


# ----------------------------------------------------------------------------- main

if __name__ == "__main__":
    key = jax.random.PRNGKey(0)
    k_param, k_x = jax.random.split(key)

    params = init_params(k_param)
    x = jax.random.normal(k_x, (2, 3, 16, 16), jnp.float32)   # NCHW, like PyTorch

    fwd = jax.jit(swin_reid_forward)
    f_t, f_i, out = fwd(x, params)
    jax.block_until_ready((f_t, f_i, out))

    assert f_t.shape == (2, EMBED_DIM)
    assert f_i.shape == (2, EMBED_DIM)
    assert out.shape == (2, NUM_CLASSES)
    assert bool(jnp.all(jnp.isfinite(f_t))) and bool(jnp.all(jnp.isfinite(f_i))) \
        and bool(jnp.all(jnp.isfinite(out)))
    print("KERNEL_OK")
</pallas_src>

<mosaic_0001>
module attributes {stable_mosaic.version = 11 : i64} {
  func.func @_patch_embed_ln_kernel(%arg0: i32, %arg1: memref<32x48xf32, #tpu.memory_space<vmem>>, %arg2: memref<48x32xf32, #tpu.memory_space<vmem>>, %arg3: memref<1x32xf32, #tpu.memory_space<vmem>>, %arg4: memref<1x32xf32, #tpu.memory_space<vmem>>, %arg5: memref<1x32xf32, #tpu.memory_space<vmem>>, %arg6: memref<32x32xf32, #tpu.memory_space<vmem>>) attributes {dimension_semantics = [#tpu.dimension_semantics<parallel>], iteration_bounds = array<i64: 1>, scalar_prefetch = 0 : i64, scratch_operands = 0 : i64, tpu.core_type = #tpu.core_type<tc>, window_params = [{transform_indices = @transform_0, window_bounds = array<i64: 32, 48>}, {pipeline_mode = #tpu.pipeline_mode<synchronous>, transform_indices = @transform_1, window_bounds = array<i64: 48, 32>}, {pipeline_mode = #tpu.pipeline_mode<synchronous>, transform_indices = @transform_2, window_bounds = array<i64: 1, 32>}, {pipeline_mode = #tpu.pipeline_mode<synchronous>, transform_indices = @transform_3, window_bounds = array<i64: 1, 32>}, {pipeline_mode = #tpu.pipeline_mode<synchronous>, transform_indices = @transform_4, window_bounds = array<i64: 1, 32>}, {transform_indices = @transform_5, window_bounds = array<i64: 32, 32>}]} {
    %c0 = arith.constant 0 : index
    %c0_0 = arith.constant 0 : index
    %0 = vector.load %arg1[%c0, %c0_0] : memref<32x48xf32, #tpu.memory_space<vmem>>, vector<32x48xf32>
    %1 = arith.truncf %0 : vector<32x48xf32> to vector<32x48xbf16>
    %c0_1 = arith.constant 0 : index
    %c0_2 = arith.constant 0 : index
    %2 = vector.load %arg2[%c0_1, %c0_2] : memref<48x32xf32, #tpu.memory_space<vmem>>, vector<48x32xf32>
    %3 = arith.truncf %2 : vector<48x32xf32> to vector<48x32xbf16>
    %cst = arith.constant dense<0.000000e+00> : vector<32x32xf32>
    %4 = tpu.matmul %1, %3, %cst {dimension_numbers = #tpu.dot_dimension_numbers<[1], [0], [0], [1], [0, 0, 1, 1], [], []>} : vector<32x48xbf16>, vector<48x32xbf16>, vector<32x32xf32> -> vector<32x32xf32>
    %c0_3 = arith.constant 0 : index
    %c0_4 = arith.constant 0 : index
    %5 = vector.load %arg3[%c0_3, %c0_4] : memref<1x32xf32, #tpu.memory_space<vmem>>, vector<1x32xf32>
    %6 = vector.broadcast %5 : vector<1x32xf32> to vector<32x32xf32>
    %7 = arith.addf %4, %6 : vector<32x32xf32>
    %cst_5 = arith.constant dense<0.000000e+00> : vector<32xf32>
    %8 = vector.multi_reduction <add>, %7, %cst_5 [1] : vector<32x32xf32> to vector<32xf32>
    %9 = vector.shape_cast %8 : vector<32xf32> to vector<32x1xf32>
    %cst_6 = arith.constant 3.200000e+01 : f32
    %10 = vector.broadcast %cst_6 : f32 to vector<32x1xf32>
    %11 = arith.divf %9, %10 : vector<32x1xf32>
    %12 = vector.broadcast %11 : vector<32x1xf32> to vector<32x32xf32>
    %13 = arith.subf %7, %12 : vector<32x32xf32>
    %14 = arith.mulf %13, %13 : vector<32x32xf32>
    %cst_7 = arith.constant dense<0.000000e+00> : vector<32xf32>
    %15 = vector.multi_reduction <add>, %14, %cst_7 [1] : vector<32x32xf32> to vector<32xf32>
    %16 = vector.shape_cast %15 : vector<32xf32> to vector<32x1xf32>
    %cst_8 = arith.constant 3.200000e+01 : f32
    %17 = vector.broadcast %cst_8 : f32 to vector<32x1xf32>
    %18 = arith.divf %16, %17 : vector<32x1xf32>
    %19 = vector.broadcast %11 : vector<32x1xf32> to vector<32x32xf32>
    %20 = arith.subf %7, %19 : vector<32x32xf32>
    %cst_9 = arith.constant 9.99999974E-6 : f32
    %21 = vector.broadcast %cst_9 : f32 to vector<32x1xf32>
    %22 = arith.addf %18, %21 : vector<32x1xf32>
    %23 = math.rsqrt %22 : vector<32x1xf32>
    %24 = vector.broadcast %23 : vector<32x1xf32> to vector<32x32xf32>
    %25 = arith.mulf %20, %24 : vector<32x32xf32>
    %c0_10 = arith.constant 0 : index
    %c0_11 = arith.constant 0 : index
    %26 = vector.load %arg4[%c0_10, %c0_11] : memref<1x32xf32, #tpu.memory_space<vmem>>, vector<1x32xf32>
    %27 = vector.broadcast %26 : vector<1x32xf32> to vector<32x32xf32>
    %28 = arith.mulf %25, %27 : vector<32x32xf32>
    %c0_12 = arith.constant 0 : index
    %c0_13 = arith.constant 0 : index
    %29 = vector.load %arg5[%c0_12, %c0_13] : memref<1x32xf32, #tpu.memory_space<vmem>>, vector<1x32xf32>
    %30 = vector.broadcast %29 : vector<1x32xf32> to vector<32x32xf32>
    %31 = arith.addf %28, %30 : vector<32x32xf32>
    %c0_14 = arith.constant 0 : index
    %c0_15 = arith.constant 0 : index
    %32 = vector.load %arg6[%c0_14, %c0_15] : memref<32x32xf32, #tpu.memory_space<vmem>>, vector<32x32xf32>
    tpu.vector_store %arg6[%c0_14, %c0_15], %31 {strides = array<i32>} : memref<32x32xf32, #tpu.memory_space<vmem>>, vector<32x32xf32>,
    return
  }
  func.func @transform_0(%arg0: i32) -> (i32, i32) {
    %c0_i32 = arith.constant 0 : i32
    %c0_i32_0 = arith.constant 0 : i32
    return %arg0, %c0_i32 : i32, i32
  }
  func.func @transform_1(%arg0: i32) -> (i32, i32) {
    %c0_i32 = arith.constant 0 : i32
    %c0_i32_0 = arith.constant 0 : i32
    %c0_i32_1 = arith.constant 0 : i32
    return %c0_i32, %c0_i32_0 : i32, i32
  }
  func.func @transform_2(%arg0: i32) -> (i32, i32) {
    %c0_i32 = arith.constant 0 : i32
    %c0_i32_0 = arith.constant 0 : i32
    %c0_i32_1 = arith.constant 0 : i32
    return %c0_i32, %c0_i32_0 : i32, i32
  }
  func.func @transform_3(%arg0: i32) -> (i32, i32) {
    %c0_i32 = arith.constant 0 : i32
    %c0_i32_0 = arith.constant 0 : i32
    %c0_i32_1 = arith.constant 0 : i32
    return %c0_i32, %c0_i32_0 : i32, i32
  }
  func.func @transform_4(%arg0: i32) -> (i32, i32) {
    %c0_i32 = arith.constant 0 : i32
    %c0_i32_0 = arith.constant 0 : i32
    %c0_i32_1 = arith.constant 0 : i32
    return %c0_i32, %c0_i32_0 : i32, i32
  }
  func.func @transform_5(%arg0: i32) -> (i32, i32) {
    %c0_i32 = arith.constant 0 : i32
    %c0_i32_0 = arith.constant 0 : i32
    return %arg0, %c0_i32 : i32, i32
  }
}

module attributes {stable_mosaic.version = 11 : i64} {
  func.func @_ln_qkv_kernel(%arg0: i32, %arg1: memref<32x32xf32, #tpu.memory_space<vmem>>, %arg2: memref<1x32xf32, #tpu.memory_space<vmem>>, %arg3: memref<1x32xf32, #tpu.memory_space<vmem>>, %arg4: memref<32x96xf32, #tpu.memory_space<vmem>>, %arg5: memref<1x96xf32, #tpu.memory_space<vmem>>, %arg6: memref<32x96xf32, #tpu.memory_space<vmem>>) attributes {dimension_semantics = [#tpu.dimension_semantics<parallel>], iteration_bounds = array<i64: 1>, scalar_prefetch = 0 : i64, scratch_operands = 0 : i64, tpu.core_type = #tpu.core_type<tc>, window_params = [{transform_indices = @transform_0, window_bounds = array<i64: 32, 32>}, {pipeline_mode = #tpu.pipeline_mode<synchronous>, transform_indices = @transform_1, window_bounds = array<i64: 1, 32>}, {pipeline_mode = #tpu.pipeline_mode<synchronous>, transform_indices = @transform_2, window_bounds = array<i64: 1, 32>}, {pipeline_mode = #tpu.pipeline_mode<synchronous>, transform_indices = @transform_3, window_bounds = array<i64: 32, 96>}, {pipeline_mode = #tpu.pipeline_mode<synchronous>, transform_indices = @transform_4, window_bounds = array<i64: 1, 96>}, {transform_indices = @transform_5, window_bounds = array<i64: 32, 96>}]} {
    %c0 = arith.constant 0 : index
    %c0_0 = arith.constant 0 : index
    %0 = vector.load %arg1[%c0, %c0_0] : memref<32x32xf32, #tpu.memory_space<vmem>>, vector<32x32xf32>
    %cst = arith.constant dense<0.000000e+00> : vector<32xf32>
    %1 = vector.multi_reduction <add>, %0, %cst [1] : vector<32x32xf32> to vector<32xf32>
    %2 = vector.shape_cast %1 : vector<32xf32> to vector<32x1xf32>
    %cst_1 = arith.constant 3.200000e+01 : f32
    %3 = vector.broadcast %cst_1 : f32 to vector<32x1xf32>
    %4 = arith.divf %2, %3 : vector<32x1xf32>
    %5 = vector.broadcast %4 : vector<32x1xf32> to vector<32x32xf32>
    %6 = arith.subf %0, %5 : vector<32x32xf32>
    %7 = arith.mulf %6, %6 : vector<32x32xf32>
    %cst_2 = arith.constant dense<0.000000e+00> : vector<32xf32>
    %8 = vector.multi_reduction <add>, %7, %cst_2 [1] : vector<32x32xf32> to vector<32xf32>
    %9 = vector.shape_cast %8 : vector<32xf32> to vector<32x1xf32>
    %cst_3 = arith.constant 3.200000e+01 : f32
    %10 = vector.broadcast %cst_3 : f32 to vector<32x1xf32>
    %11 = arith.divf %9, %10 : vector<32x1xf32>
    %12 = vector.broadcast %4 : vector<32x1xf32> to vector<32x32xf32>
    %13 = arith.subf %0, %12 : vector<32x32xf32>
    %cst_4 = arith.constant 9.99999974E-6 : f32
    %14 = vector.broadcast %cst_4 : f32 to vector<32x1xf32>
    %15 = arith.addf %11, %14 : vector<32x1xf32>
    %16 = math.rsqrt %15 : vector<32x1xf32>
    %17 = vector.broadcast %16 : vector<32x1xf32> to vector<32x32xf32>
    %18 = arith.mulf %13, %17 : vector<32x32xf32>
    %c0_5 = arith.constant 0 : index
    %c0_6 = arith.constant 0 : index
    %19 = vector.load %arg2[%c0_5, %c0_6] : memref<1x32xf32, #tpu.memory_space<vmem>>, vector<1x32xf32>
    %20 = vector.broadcast %19 : vector<1x32xf32> to vector<32x32xf32>
    %21 = arith.mulf %18, %20 : vector<32x32xf32>
    %c0_7 = arith.constant 0 : index
    %c0_8 = arith.constant 0 : index
    %22 = vector.load %arg3[%c0_7, %c0_8] : memref<1x32xf32, #tpu.memory_space<vmem>>, vector<1x32xf32>
    %23 = vector.broadcast %22 : vector<1x32xf32> to vector<32x32xf32>
    %24 = arith.addf %21, %23 : vector<32x32xf32>
    %25 = arith.truncf %24 : vector<32x32xf32> to vector<32x32xbf16>
    %c0_9 = arith.constant 0 : index
    %c0_10 = arith.constant 0 : index
    %26 = vector.load %arg4[%c0_9, %c0_10] : memref<32x96xf32, #tpu.memory_space<vmem>>, vector<32x96xf32>
    %27 = arith.truncf %26 : vector<32x96xf32> to vector<32x96xbf16>
    %cst_11 = arith.constant dense<0.000000e+00> : vector<32x96xf32>
    %28 = tpu.matmul %25, %27, %cst_11 {dimension_numbers = #tpu.dot_dimension_numbers<[1], [0], [0], [1], [0, 0, 1, 1], [], []>} : vector<32x32xbf16>, vector<32x96xbf16>, vector<32x96xf32> -> vector<32x96xf32>
    %c0_12 = arith.constant 0 : index
    %c0_13 = arith.constant 0 : index
    %29 = vector.load %arg5[%c0_12, %c0_13] : memref<1x96xf32, #tpu.memory_space<vmem>>, vector<1x96xf32>
    %30 = vector.broadcast %29 : vector<1x96xf32> to vector<32x96xf32>
    %31 = arith.addf %28, %30 : vector<32x96xf32>
    %c0_14 = arith.constant 0 : index
    %c0_15 = arith.constant 0 : index
    %32 = vector.load %arg6[%c0_14, %c0_15] : memref<32x96xf32, #tpu.memory_space<vmem>>, vector<32x96xf32>
    tpu.vector_store %arg6[%c0_14, %c0_15], %31 {strides = array<i32>} : memref<32x96xf32, #tpu.memory_space<vmem>>, vector<32x96xf32>,
    return
  }
  func.func @transform_0(%arg0: i32) -> (i32, i32) {
    %c0_i32 = arith.constant 0 : i32
    %c0_i32_0 = arith.constant 0 : i32
    return %arg0, %c0_i32 : i32, i32
  }
  func.func @transform_1(%arg0: i32) -> (i32, i32) {
    %c0_i32 = arith.constant 0 : i32
    %c0_i32_0 = arith.constant 0 : i32
    %c0_i32_1 = arith.constant 0 : i32
    return %c0_i32, %c0_i32_0 : i32, i32
  }
  func.func @transform_2(%arg0: i32) -> (i32, i32) {
    %c0_i32 = arith.constant 0 : i32
    %c0_i32_0 = arith.constant 0 : i32
    %c0_i32_1 = arith.constant 0 : i32
    return %c0_i32, %c0_i32_0 : i32, i32
  }
  func.func @transform_3(%arg0: i32) -> (i32, i32) {
    %c0_i32 = arith.constant 0 : i32
    %c0_i32_0 = arith.constant 0 : i32
    %c0_i32_1 = arith.constant 0 : i32
    return %c0_i32, %c0_i32_0 : i32, i32
  }
  func.func @transform_4(%arg0: i32) -> (i32, i32) {
    %c0_i32 = arith.constant 0 : i32
    %c0_i32_0 = arith.constant 0 : i32
    %c0_i32_1 = arith.constant 0 : i32
    return %c0_i32, %c0_i32_0 : i32, i32
  }
  func.func @transform_5(%arg0: i32) -> (i32, i32) {
    %c0_i32 = arith.constant 0 : i32
    %c0_i32_0 = arith.constant 0 : i32
    return %arg0, %c0_i32 : i32, i32
  }
}

module attributes {stable_mosaic.version = 11 : i64} {
  func.func @_win_attn_proj_kernel(%arg0: i32, %arg1: memref<2x16x96xf32, #tpu.memory_space<vmem>>, %arg2: memref<2x16x32xf32, #tpu.memory_space<vmem>>, %arg3: memref<4x16x16xf32, #tpu.memory_space<vmem>>, %arg4: memref<32x32xf32, #tpu.memory_space<vmem>>, %arg5: memref<1x32xf32, #tpu.memory_space<vmem>>, %arg6: memref<2x16x32xf32, #tpu.memory_space<vmem>>) attributes {dimension_semantics = [#tpu.dimension_semantics<parallel>], iteration_bounds = array<i64: 1>, scalar_prefetch = 0 : i64, scratch_operands = 0 : i64, tpu.core_type = #tpu.core_type<tc>, window_params = [{transform_indices = @transform_0, window_bounds = array<i64: 2, 16, 96>}, {transform_indices = @transform_1, window_bounds = array<i64: 2, 16, 32>}, {pipeline_mode = #tpu.pipeline_mode<synchronous>, transform_indices = @transform_2, window_bounds = array<i64: 4, 16, 16>}, {pipeline_mode = #tpu.pipeline_mode<synchronous>, transform_indices = @transform_3, window_bounds = array<i64: 32, 32>}, {pipeline_mode = #tpu.pipeline_mode<synchronous>, transform_indices = @transform_4, window_bounds = array<i64: 1, 32>}, {transform_indices = @transform_5, window_bounds = array<i64: 2, 16, 32>}]} {
    %c0 = arith.constant 0 : index
    %c0_0 = arith.constant 0 : index
    %c0_1 = arith.constant 0 : index
    %0 = vector.load %arg1[%c0, %c0_0, %c0_1] : memref<2x16x96xf32, #tpu.memory_space<vmem>>, vector<2x16x96xf32>
    %c0_2 = arith.constant 0 : index
    %c0_3 = arith.constant 0 : index
    %c0_4 = arith.constant 0 : index
    %1 = vector.load %arg3[%c0_2, %c0_3, %c0_4] : memref<4x16x16xf32, #tpu.memory_space<vmem>>, vector<4x16x16xf32>
    %c0_5 = arith.constant 0 : index
    %c0_6 = arith.constant 0 : index
    %2 = vector.load %arg4[%c0_5, %c0_6] : memref<32x32xf32, #tpu.memory_space<vmem>>, vector<32x32xf32>
    %3 = arith.truncf %2 : vector<32x32xf32> to vector<32x32xbf16>
    %cst = arith.constant 0.000000e+00 : f32
    %4 = vector.broadcast %cst : f32 to vector<2x16x32xf32>
    %5 = vector.extract_strided_slice %0 {offsets = [0, 0, 0], sizes = [2, 16, 8], strides = [1, 1, 1]} : vector<2x16x96xf32> to vector<2x16x8xf32>
    %cst_7 = arith.constant 0.353553385 : f32
    %6 = vector.broadcast %cst_7 : f32 to vector<2x16x8xf32>
    %7 = arith.mulf %5, %6 : vector<2x16x8xf32>
    %8 = vector.extract_strided_slice %0 {offsets = [0, 0, 32], sizes = [2, 16, 8], strides = [1, 1, 1]} : vector<2x16x96xf32> to vector<2x16x8xf32>
    %9 = vector.extract_strided_slice %0 {offsets = [0, 0, 64], sizes = [2, 16, 8], strides = [1, 1, 1]} : vector<2x16x96xf32> to vector<2x16x8xf32>
    "tpu.trace_start"() <{level = 10 : i32, message = "bld,bmd->blm"}> : () -> ()
    %cst_8 = arith.constant dense<0.000000e+00> : vector<2x16x16xf32>
    %10 = tpu.matmul %7, %8, %cst_8 {dimension_numbers = #tpu.dot_dimension_numbers<[2], [2], [1], [1], [0, 0, 0, 1, 1, 1], [0], [0]>} : vector<2x16x8xf32>, vector<2x16x8xf32>, vector<2x16x16xf32> -> vector<2x16x16xf32>
    "tpu.trace_stop"() : () -> ()
    %11 = vector.extract_strided_slice %1 {offsets = [0, 0, 0], sizes = [1, 16, 16], strides = [1, 1, 1]} : vector<4x16x16xf32> to vector<1x16x16xf32>
    %12 = vector.shape_cast %11 : vector<1x16x16xf32> to vector<16x16xf32>
    %13 = vector.shape_cast %12 : vector<16x16xf32> to vector<1x16x16xf32>
    %14 = vector.broadcast %13 : vector<1x16x16xf32> to vector<2x16x16xf32>
    %15 = arith.addf %10, %14 : vector<2x16x16xf32>
    %cst_9 = arith.constant dense<0xFF800000> : vector<2x16xf32>
    %16 = vector.multi_reduction <maximumf>, %15, %cst_9 [2] : vector<2x16x16xf32> to vector<2x16xf32>
    %17 = vector.shape_cast %16 : vector<2x16xf32> to vector<2x16x1xf32>
    %18 = vector.broadcast %17 : vector<2x16x1xf32> to vector<2x16x16xf32>
    %19 = arith.subf %15, %18 : vector<2x16x16xf32>
    %20 = math.exp %19 : vector<2x16x16xf32>
    %cst_10 = arith.constant dense<0.000000e+00> : vector<2x16xf32>
    %21 = vector.multi_reduction <add>, %20, %cst_10 [2] : vector<2x16x16xf32> to vector<2x16xf32>
    %22 = vector.shape_cast %21 : vector<2x16xf32> to vector<2x16x1xf32>
    %23 = tpu.reciprocal %22 {approx = true} : vector<2x16x1xf32> -> vector<2x16x1xf32>
    %24 = vector.broadcast %23 : vector<2x16x1xf32> to vector<2x16x16xf32>
    %25 = arith.mulf %20, %24 : vector<2x16x16xf32>
    "tpu.trace_start"() <{level = 10 : i32, message = "blm,bmd->bld"}> : () -> ()
    %cst_11 = arith.constant dense<0.000000e+00> : vector<2x16x8xf32>
    %26 = tpu.matmul %25, %9, %cst_11 {dimension_numbers = #tpu.dot_dimension_numbers<[2], [1], [1], [2], [0, 0, 0, 1, 1, 2], [0], [0]>} : vector<2x16x16xf32>, vector<2x16x8xf32>, vector<2x16x8xf32> -> vector<2x16x8xf32>
    "tpu.trace_stop"() : () -> ()
    %27 = vector.extract_strided_slice %3 {offsets = [0, 0], sizes = [8, 32], strides = [1, 1]} : vector<32x32xbf16> to vector<8x32xbf16>
    %28 = vector.shape_cast %27 : vector<8x32xbf16> to vector<1x8x32xbf16>
    %29 = vector.shape_cast %28 : vector<1x8x32xbf16> to vector<1x8x32xbf16>
    %30 = vector.broadcast %29 : vector<1x8x32xbf16> to vector<2x8x32xbf16>
    %31 = arith.truncf %26 : vector<2x16x8xf32> to vector<2x16x8xbf16>
    "tpu.trace_start"() <{level = 10 : i32, message = "bld,bdc->blc"}> : () -> ()
    %cst_12 = arith.constant dense<0.000000e+00> : vector<2x16x32xf32>
    %32 = tpu.matmul %31, %30, %cst_12 {dimension_numbers = #tpu.dot_dimension_numbers<[2], [1], [1], [2], [0, 0, 0, 1, 1, 2], [0], [0]>} : vector<2x16x8xbf16>, vector<2x8x32xbf16>, vector<2x16x32xf32> -> vector<2x16x32xf32>
    "tpu.trace_stop"() : () -> ()
    %33 = arith.addf %4, %32 : vector<2x16x32xf32>
    %34 = vector.extract_strided_slice %0 {offsets = [0, 0, 8], sizes = [2, 16, 8], strides = [1, 1, 1]} : vector<2x16x96xf32> to vector<2x16x8xf32>
    %cst_13 = arith.constant 0.353553385 : f32
    %35 = vector.broadcast %cst_13 : f32 to vector<2x16x8xf32>
    %36 = arith.mulf %34, %35 : vector<2x16x8xf32>
    %37 = vector.extract_strided_slice %0 {offsets = [0, 0, 40], sizes = [2, 16, 8], strides = [1, 1, 1]} : vector<2x16x96xf32> to vector<2x16x8xf32>
    %38 = vector.extract_strided_slice %0 {offsets = [0, 0, 72], sizes = [2, 16, 8], strides = [1, 1, 1]} : vector<2x16x96xf32> to vector<2x16x8xf32>
    "tpu.trace_start"() <{level = 10 : i32, message = "bld,bmd->blm"}> : () -> ()
    %cst_14 = arith.constant dense<0.000000e+00> : vector<2x16x16xf32>
    %39 = tpu.matmul %36, %37, %cst_14 {dimension_numbers = #tpu.dot_dimension_numbers<[2], [2], [1], [1], [0, 0, 0, 1, 1, 1], [0], [0]>} : vector<2x16x8xf32>, vector<2x16x8xf32>, vector<2x16x16xf32> -> vector<2x16x16xf32>
    "tpu.trace_stop"() : () -> ()
    %40 = vector.extract_strided_slice %1 {offsets = [1, 0, 0], sizes = [1, 16, 16], strides = [1, 1, 1]} : vector<4x16x16xf32> to vector<1x16x16xf32>
    %41 = vector.shape_cast %40 : vector<1x16x16xf32> to vector<16x16xf32>
    %42 = vector.shape_cast %41 : vector<16x16xf32> to vector<1x16x16xf32>
    %43 = vector.broadcast %42 : vector<1x16x16xf32> to vector<2x16x16xf32>
    %44 = arith.addf %39, %43 : vector<2x16x16xf32>
    %cst_15 = arith.constant dense<0xFF800000> : vector<2x16xf32>
    %45 = vector.multi_reduction <maximumf>, %44, %cst_15 [2] : vector<2x16x16xf32> to vector<2x16xf32>
    %46 = vector.shape_cast %45 : vector<2x16xf32> to vector<2x16x1xf32>
    %47 = vector.broadcast %46 : vector<2x16x1xf32> to vector<2x16x16xf32>
    %48 = arith.subf %44, %47 : vector<2x16x16xf32>
    %49 = math.exp %48 : vector<2x16x16xf32>
    %cst_16 = arith.constant dense<0.000000e+00> : vector<2x16xf32>
    %50 = vector.multi_reduction <add>, %49, %cst_16 [2] : vector<2x16x16xf32> to vector<2x16xf32>
    %51 = vector.shape_cast %50 : vector<2x16xf32> to vector<2x16x1xf32>
    %52 = tpu.reciprocal %51 {approx = true} : vector<2x16x1xf32> -> vector<2x16x1xf32>
    %53 = vector.broadcast %52 : vector<2x16x1xf32> to vector<2x16x16xf32>
    %54 = arith.mulf %49, %53 : vector<2x16x16xf32>
    "tpu.trace_start"() <{level = 10 : i32, message = "blm,bmd->bld"}> : () -> ()
    %cst_17 = arith.constant dense<0.000000e+00> : vector<2x16x8xf32>
    %55 = tpu.matmul %54, %38, %cst_17 {dimension_numbers = #tpu.dot_dimension_numbers<[2], [1], [1], [2], [0, 0, 0, 1, 1, 2], [0], [0]>} : vector<2x16x16xf32>, vector<2x16x8xf32>, vector<2x16x8xf32> -> vector<2x16x8xf32>
    "tpu.trace_stop"() : () -> ()
    %56 = vector.extract_strided_slice %3 {offsets = [8, 0], sizes = [8, 32], strides = [1, 1]} : vector<32x32xbf16> to vector<8x32xbf16>
    %57 = vector.shape_cast %56 : vector<8x32xbf16> to vector<1x8x32xbf16>
    %58 = vector.shape_cast %57 : vector<1x8x32xbf16> to vector<1x8x32xbf16>
    %59 = vector.broadcast %58 : vector<1x8x32xbf16> to vector<2x8x32xbf16>
    %60 = arith.truncf %55 : vector<2x16x8xf32> to vector<2x16x8xbf16>
    "tpu.trace_start"() <{level = 10 : i32, message = "bld,bdc->blc"}> : () -> ()
    %cst_18 = arith.constant dense<0.000000e+00> : vector<2x16x32xf32>
    %61 = tpu.matmul %60, %59, %cst_18 {dimension_numbers = #tpu.dot_dimension_numbers<[2], [1], [1], [2], [0, 0, 0, 1, 1, 2], [0], [0]>} : vector<2x16x8xbf16>, vector<2x8x32xbf16>, vector<2x16x32xf32> -> vector<2x16x32xf32>
    "tpu.trace_stop"() : () -> ()
    %62 = arith.addf %33, %61 : vector<2x16x32xf32>
    %63 = vector.extract_strided_slice %0 {offsets = [0, 0, 16], sizes = [2, 16, 8], strides = [1, 1, 1]} : vector<2x16x96xf32> to vector<2x16x8xf32>
    %cst_19 = arith.constant 0.353553385 : f32
    %64 = vector.broadcast %cst_19 : f32 to vector<2x16x8xf32>
    %65 = arith.mulf %63, %64 : vector<2x16x8xf32>
    %66 = vector.extract_strided_slice %0 {offsets = [0, 0, 48], sizes = [2, 16, 8], strides = [1, 1, 1]} : vector<2x16x96xf32> to vector<2x16x8xf32>
    %67 = vector.extract_strided_slice %0 {offsets = [0, 0, 80], sizes = [2, 16, 8], strides = [1, 1, 1]} : vector<2x16x96xf32> to vector<2x16x8xf32>
    "tpu.trace_start"() <{level = 10 : i32, message = "bld,bmd->blm"}> : () -> ()
    %cst_20 = arith.constant dense<0.000000e+00> : vector<2x16x16xf32>
    %68 = tpu.matmul %65, %66, %cst_20 {dimension_numbers = #tpu.dot_dimension_numbers<[2], [2], [1], [1], [0, 0, 0, 1, 1, 1], [0], [0]>} : vector<2x16x8xf32>, vector<2x16x8xf32>, vector<2x16x16xf32> -> vector<2x16x16xf32>
    "tpu.trace_stop"() : () -> ()
    %69 = vector.extract_strided_slice %1 {offsets = [2, 0, 0], sizes = [1, 16, 16], strides = [1, 1, 1]} : vector<4x16x16xf32> to vector<1x16x16xf32>
    %70 = vector.shape_cast %69 : vector<1x16x16xf32> to vector<16x16xf32>
    %71 = vector.shape_cast %70 : vector<16x16xf32> to vector<1x16x16xf32>
    %72 = vector.broadcast %71 : vector<1x16x16xf32> to vector<2x16x16xf32>
    %73 = arith.addf %68, %72 : vector<2x16x16xf32>
    %cst_21 = arith.constant dense<0xFF800000> : vector<2x16xf32>
    %74 = vector.multi_reduction <maximumf>, %73, %cst_21 [2] : vector<2x16x16xf32> to vector<2x16xf32>
    %75 = vector.shape_cast %74 : vector<2x16xf32> to vector<2x16x1xf32>
    %76 = vector.broadcast %75 : vector<2x16x1xf32> to vector<2x16x16xf32>
    %77 = arith.subf %73, %76 : vector<2x16x16xf32>
    %78 = math.exp %77 : vector<2x16x16xf32>
    %cst_22 = arith.constant dense<0.000000e+00> : vector<2x16xf32>
    %79 = vector.multi_reduction <add>, %78, %cst_22 [2] : vector<2x16x16xf32> to vector<2x16xf32>
    %80 = vector.shape_cast %79 : vector<2x16xf32> to vector<2x16x1xf32>
    %81 = tpu.reciprocal %80 {approx = true} : vector<2x16x1xf32> -> vector<2x16x1xf32>
    %82 = vector.broadcast %81 : vector<2x16x1xf32> to vector<2x16x16xf32>
    %83 = arith.mulf %78, %82 : vector<2x16x16xf32>
    "tpu.trace_start"() <{level = 10 : i32, message = "blm,bmd->bld"}> : () -> ()
    %cst_23 = arith.constant dense<0.000000e+00> : vector<2x16x8xf32>
    %84 = tpu.matmul %83, %67, %cst_23 {dimension_numbers = #tpu.dot_dimension_numbers<[2], [1], [1], [2], [0, 0, 0, 1, 1, 2], [0], [0]>} : vector<2x16x16xf32>, vector<2x16x8xf32>, vector<2x16x8xf32> -> vector<2x16x8xf32>
    "tpu.trace_stop"() : () -> ()
    %85 = vector.extract_strided_slice %3 {offsets = [16, 0], sizes = [8, 32], strides = [1, 1]} : vector<32x32xbf16> to vector<8x32xbf16>
    %86 = vector.shape_cast %85 : vector<8x32xbf16> to vector<1x8x32xbf16>
    %87 = vector.shape_cast %86 : vector<1x8x32xbf16> to vector<1x8x32xbf16>
    %88 = vector.broadcast %87 : vector<1x8x32xbf16> to vector<2x8x32xbf16>
    %89 = arith.truncf %84 : vector<2x16x8xf32> to vector<2x16x8xbf16>
    "tpu.trace_start"() <{level = 10 : i32, message = "bld,bdc->blc"}> : () -> ()
    %cst_24 = arith.constant dense<0.000000e+00> : vector<2x16x32xf32>
    %90 = tpu.matmul %89, %88, %cst_24 {dimension_numbers = #tpu.dot_dimension_numbers<[2], [1], [1], [2], [0, 0, 0, 1, 1, 2], [0], [0]>} : vector<2x16x8xbf16>, vector<2x8x32xbf16>, vector<2x16x32xf32> -> vector<2x16x32xf32>
    "tpu.trace_stop"() : () -> ()
    %91 = arith.addf %62, %90 : vector<2x16x32xf32>
    %92 = vector.extract_strided_slice %0 {offsets = [0, 0, 24], sizes = [2, 16, 8], strides = [1, 1, 1]} : vector<2x16x96xf32> to vector<2x16x8xf32>
    %cst_25 = arith.constant 0.353553385 : f32
    %93 = vector.broadcast %cst_25 : f32 to vector<2x16x8xf32>
    %94 = arith.mulf %92, %93 : vector<2x16x8xf32>
    %95 = vector.extract_strided_slice %0 {offsets = [0, 0, 56], sizes = [2, 16, 8], strides = [1, 1, 1]} : vector<2x16x96xf32> to vector<2x16x8xf32>
    %96 = vector.extract_strided_slice %0 {offsets = [0, 0, 88], sizes = [2, 16, 8], strides = [1, 1, 1]} : vector<2x16x96xf32> to vector<2x16x8xf32>
    "tpu.trace_start"() <{level = 10 : i32, message = "bld,bmd->blm"}> : () -> ()
    %cst_26 = arith.constant dense<0.000000e+00> : vector<2x16x16xf32>
    %97 = tpu.matmul %94, %95, %cst_26 {dimension_numbers = #tpu.dot_dimension_numbers<[2], [2], [1], [1], [0, 0, 0, 1, 1, 1], [0], [0]>} : vector<2x16x8xf32>, vector<2x16x8xf32>, vector<2x16x16xf32> -> vector<2x16x16xf32>
    "tpu.trace_stop"() : () -> ()
    %98 = vector.extract_strided_slice %1 {offsets = [3, 0, 0], sizes = [1, 16, 16], strides = [1, 1, 1]} : vector<4x16x16xf32> to vector<1x16x16xf32>
    %99 = vector.shape_cast %98 : vector<1x16x16xf32> to vector<16x16xf32>
    %100 = vector.shape_cast %99 : vector<16x16xf32> to vector<1x16x16xf32>
    %101 = vector.broadcast %100 : vector<1x16x16xf32> to vector<2x16x16xf32>
    %102 = arith.addf %97, %101 : vector<2x16x16xf32>
    %cst_27 = arith.constant dense<0xFF800000> : vector<2x16xf32>
    %103 = vector.multi_reduction <maximumf>, %102, %cst_27 [2] : vector<2x16x16xf32> to vector<2x16xf32>
    %104 = vector.shape_cast %103 : vector<2x16xf32> to vector<2x16x1xf32>
    %105 = vector.broadcast %104 : vector<2x16x1xf32> to vector<2x16x16xf32>
    %106 = arith.subf %102, %105 : vector<2x16x16xf32>
    %107 = math.exp %106 : vector<2x16x16xf32>
    %cst_28 = arith.constant dense<0.000000e+00> : vector<2x16xf32>
    %108 = vector.multi_reduction <add>, %107, %cst_28 [2] : vector<2x16x16xf32> to vector<2x16xf32>
    %109 = vector.shape_cast %108 : vector<2x16xf32> to vector<2x16x1xf32>
    %110 = tpu.reciprocal %109 {approx = true} : vector<2x16x1xf32> -> vector<2x16x1xf32>
    %111 = vector.broadcast %110 : vector<2x16x1xf32> to vector<2x16x16xf32>
    %112 = arith.mulf %107, %111 : vector<2x16x16xf32>
    "tpu.trace_start"() <{level = 10 : i32, message = "blm,bmd->bld"}> : () -> ()
    %cst_29 = arith.constant dense<0.000000e+00> : vector<2x16x8xf32>
    %113 = tpu.matmul %112, %96, %cst_29 {dimension_numbers = #tpu.dot_dimension_numbers<[2], [1], [1], [2], [0, 0, 0, 1, 1, 2], [0], [0]>} : vector<2x16x16xf32>, vector<2x16x8xf32>, vector<2x16x8xf32> -> vector<2x16x8xf32>
    "tpu.trace_stop"() : () -> ()
    %114 = vector.extract_strided_slice %3 {offsets = [24, 0], sizes = [8, 32], strides = [1, 1]} : vector<32x32xbf16> to vector<8x32xbf16>
    %115 = vector.shape_cast %114 : vector<8x32xbf16> to vector<1x8x32xbf16>
    %116 = vector.shape_cast %115 : vector<1x8x32xbf16> to vector<1x8x32xbf16>
    %117 = vector.broadcast %116 : vector<1x8x32xbf16> to vector<2x8x32xbf16>
    %118 = arith.truncf %113 : vector<2x16x8xf32> to vector<2x16x8xbf16>
    "tpu.trace_start"() <{level = 10 : i32, message = "bld,bdc->blc"}> : () -> ()
    %cst_30 = arith.constant dense<0.000000e+00> : vector<2x16x32xf32>
    %119 = tpu.matmul %118, %117, %cst_30 {dimension_numbers = #tpu.dot_dimension_numbers<[2], [1], [1], [2], [0, 0, 0, 1, 1, 2], [0], [0]>} : vector<2x16x8xbf16>, vector<2x8x32xbf16>, vector<2x16x32xf32> -> vector<2x16x32xf32>
    "tpu.trace_stop"() : () -> ()
    %120 = arith.addf %91, %119 : vector<2x16x32xf32>
    %c0_31 = arith.constant 0 : index
    %c0_32 = arith.constant 0 : index
    %c0_33 = arith.constant 0 : index
    %121 = vector.load %arg2[%c0_31, %c0_32, %c0_33] : memref<2x16x32xf32, #tpu.memory_space<vmem>>, vector<2x16x32xf32>
    %122 = arith.addf %121, %120 : vector<2x16x32xf32>
    %c0_34 = arith.constant 0 : index
    %c0_35 = arith.constant 0 : index
    %123 = vector.load %arg5[%c0_34, %c0_35] : memref<1x32xf32, #tpu.memory_space<vmem>>, vector<1x32xf32>
    %124 = vector.shape_cast %123 : vector<1x32xf32> to vector<1x1x32xf32>
    %125 = vector.broadcast %124 : vector<1x1x32xf32> to vector<2x16x32xf32>
    %126 = arith.addf %122, %125 : vector<2x16x32xf32>
    %c0_36 = arith.constant 0 : index
    %c0_37 = arith.constant 0 : index
    %c0_38 = arith.constant 0 : index
    %127 = vector.load %arg6[%c0_36, %c0_37, %c0_38] : memref<2x16x32xf32, #tpu.memory_space<vmem>>, vector<2x16x32xf32>
    tpu.vector_store %arg6[%c0_36, %c0_37, %c0_38], %126 {strides = array<i32>} : memref<2x16x32xf32, #tpu.memory_space<vmem>>, vector<2x16x32xf32>,
    return
  }
  func.func @transform_0(%arg0: i32) -> (i32, i32, i32) {
    %c0_i32 = arith.constant 0 : i32
    %c0_i32_0 = arith.constant 0 : i32
    %c0_i32_1 = arith.constant 0 : i32
    return %arg0, %c0_i32, %c0_i32_0 : i32, i32, i32
  }
  func.func @transform_1(%arg0: i32) -> (i32, i32, i32) {
    %c0_i32 = arith.constant 0 : i32
    %c0_i32_0 = arith.constant 0 : i32
    %c0_i32_1 = arith.constant 0 : i32
    return %arg0, %c0_i32, %c0_i32_0 : i32, i32, i32
  }
  func.func @transform_2(%arg0: i32) -> (i32, i32, i32) {
    %c0_i32 = arith.constant 0 : i32
    %c0_i32_0 = arith.constant 0 : i32
    %c0_i32_1 = arith.constant 0 : i32
    %c0_i32_2 = arith.constant 0 : i32
    return %c0_i32, %c0_i32_0, %c0_i32_1 : i32, i32, i32
  }
  func.func @transform_3(%arg0: i32) -> (i32, i32) {
    %c0_i32 = arith.constant 0 : i32
    %c0_i32_0 = arith.constant 0 : i32
    %c0_i32_1 = arith.constant 0 : i32
    return %c0_i32, %c0_i32_0 : i32, i32
  }
  func.func @transform_4(%arg0: i32) -> (i32, i32) {
    %c0_i32 = arith.constant 0 : i32
    %c0_i32_0 = arith.constant 0 : i32
    %c0_i32_1 = arith.constant 0 : i32
    return %c0_i32, %c0_i32_0 : i32, i32
  }
  func.func @transform_5(%arg0: i32) -> (i32, i32, i32) {
    %c0_i32 = arith.constant 0 : i32
    %c0_i32_0 = arith.constant 0 : i32
    %c0_i32_1 = arith.constant 0 : i32
    return %arg0, %c0_i32, %c0_i32_0 : i32, i32, i32
  }
}

module attributes {stable_mosaic.version = 11 : i64} {
  func.func @_ln_mlp_res_kernel(%arg0: i32, %arg1: memref<32x32xf32, #tpu.memory_space<vmem>>, %arg2: memref<1x32xf32, #tpu.memory_space<vmem>>, %arg3: memref<1x32xf32, #tpu.memory_space<vmem>>, %arg4: memref<32x128xf32, #tpu.memory_space<vmem>>, %arg5: memref<1x128xf32, #tpu.memory_space<vmem>>, %arg6: memref<128x32xf32, #tpu.memory_space<vmem>>, %arg7: memref<1x32xf32, #tpu.memory_space<vmem>>, %arg8: memref<32x32xf32, #tpu.memory_space<vmem>>) attributes {dimension_semantics = [#tpu.dimension_semantics<parallel>], iteration_bounds = array<i64: 1>, scalar_prefetch = 0 : i64, scratch_operands = 0 : i64, tpu.core_type = #tpu.core_type<tc>, window_params = [{transform_indices = @transform_0, window_bounds = array<i64: 32, 32>}, {pipeline_mode = #tpu.pipeline_mode<synchronous>, transform_indices = @transform_1, window_bounds = array<i64: 1, 32>}, {pipeline_mode = #tpu.pipeline_mode<synchronous>, transform_indices = @transform_2, window_bounds = array<i64: 1, 32>}, {pipeline_mode = #tpu.pipeline_mode<synchronous>, transform_indices = @transform_3, window_bounds = array<i64: 32, 128>}, {pipeline_mode = #tpu.pipeline_mode<synchronous>, transform_indices = @transform_4, window_bounds = array<i64: 1, 128>}, {pipeline_mode = #tpu.pipeline_mode<synchronous>, transform_indices = @transform_5, window_bounds = array<i64: 128, 32>}, {pipeline_mode = #tpu.pipeline_mode<synchronous>, transform_indices = @transform_6, window_bounds = array<i64: 1, 32>}, {transform_indices = @transform_7, window_bounds = array<i64: 32, 32>}]} {
    %c0 = arith.constant 0 : index
    %c0_0 = arith.constant 0 : index
    %0 = vector.load %arg1[%c0, %c0_0] : memref<32x32xf32, #tpu.memory_space<vmem>>, vector<32x32xf32>
    %cst = arith.constant dense<0.000000e+00> : vector<32xf32>
    %1 = vector.multi_reduction <add>, %0, %cst [1] : vector<32x32xf32> to vector<32xf32>
    %2 = vector.shape_cast %1 : vector<32xf32> to vector<32x1xf32>
    %cst_1 = arith.constant 3.200000e+01 : f32
    %3 = vector.broadcast %cst_1 : f32 to vector<32x1xf32>
    %4 = arith.divf %2, %3 : vector<32x1xf32>
    %5 = vector.broadcast %4 : vector<32x1xf32> to vector<32x32xf32>
    %6 = arith.subf %0, %5 : vector<32x32xf32>
    %7 = arith.mulf %6, %6 : vector<32x32xf32>
    %cst_2 = arith.constant dense<0.000000e+00> : vector<32xf32>
    %8 = vector.multi_reduction <add>, %7, %cst_2 [1] : vector<32x32xf32> to vector<32xf32>
    %9 = vector.shape_cast %8 : vector<32xf32> to vector<32x1xf32>
    %cst_3 = arith.constant 3.200000e+01 : f32
    %10 = vector.broadcast %cst_3 : f32 to vector<32x1xf32>
    %11 = arith.divf %9, %10 : vector<32x1xf32>
    %12 = vector.broadcast %4 : vector<32x1xf32> to vector<32x32xf32>
    %13 = arith.subf %0, %12 : vector<32x32xf32>
    %cst_4 = arith.constant 9.99999974E-6 : f32
    %14 = vector.broadcast %cst_4 : f32 to vector<32x1xf32>
    %15 = arith.addf %11, %14 : vector<32x1xf32>
    %16 = math.rsqrt %15 : vector<32x1xf32>
    %17 = vector.broadcast %16 : vector<32x1xf32> to vector<32x32xf32>
    %18 = arith.mulf %13, %17 : vector<32x32xf32>
    %c0_5 = arith.constant 0 : index
    %c0_6 = arith.constant 0 : index
    %19 = vector.load %arg2[%c0_5, %c0_6] : memref<1x32xf32, #tpu.memory_space<vmem>>, vector<1x32xf32>
    %20 = vector.broadcast %19 : vector<1x32xf32> to vector<32x32xf32>
    %21 = arith.mulf %18, %20 : vector<32x32xf32>
    %c0_7 = arith.constant 0 : index
    %c0_8 = arith.constant 0 : index
    %22 = vector.load %arg3[%c0_7, %c0_8] : memref<1x32xf32, #tpu.memory_space<vmem>>, vector<1x32xf32>
    %23 = vector.broadcast %22 : vector<1x32xf32> to vector<32x32xf32>
    %24 = arith.addf %21, %23 : vector<32x32xf32>
    %25 = arith.truncf %24 : vector<32x32xf32> to vector<32x32xbf16>
    %c0_9 = arith.constant 0 : index
    %c0_10 = arith.constant 0 : index
    %26 = vector.load %arg4[%c0_9, %c0_10] : memref<32x128xf32, #tpu.memory_space<vmem>>, vector<32x128xf32>
    %27 = arith.truncf %26 : vector<32x128xf32> to vector<32x128xbf16>
    %cst_11 = arith.constant dense<0.000000e+00> : vector<32x128xf32>
    %28 = tpu.matmul %25, %27, %cst_11 {dimension_numbers = #tpu.dot_dimension_numbers<[1], [0], [0], [1], [0, 0, 1, 1], [], []>} : vector<32x32xbf16>, vector<32x128xbf16>, vector<32x128xf32> -> vector<32x128xf32>
    %c0_12 = arith.constant 0 : index
    %c0_13 = arith.constant 0 : index
    %29 = vector.load %arg5[%c0_12, %c0_13] : memref<1x128xf32, #tpu.memory_space<vmem>>, vector<1x128xf32>
    %30 = vector.broadcast %29 : vector<1x128xf32> to vector<32x128xf32>
    %31 = arith.addf %28, %30 : vector<32x128xf32>
    %32 = arith.mulf %31, %31 : vector<32x128xf32>
    %33 = arith.mulf %31, %32 : vector<32x128xf32>
    %cst_14 = arith.constant 4.471500e-02 : f32
    %34 = vector.broadcast %cst_14 : f32 to vector<32x128xf32>
    %35 = arith.mulf %34, %33 : vector<32x128xf32>
    %36 = arith.addf %31, %35 : vector<32x128xf32>
    %cst_15 = arith.constant 0.797884583 : f32
    %37 = vector.broadcast %cst_15 : f32 to vector<32x128xf32>
    %38 = arith.mulf %37, %36 : vector<32x128xf32>
    %39 = math.tanh %38 : vector<32x128xf32>
    %cst_16 = arith.constant 1.000000e+00 : f32
    %40 = vector.broadcast %cst_16 : f32 to vector<32x128xf32>
    %41 = arith.addf %40, %39 : vector<32x128xf32>
    %cst_17 = arith.constant 5.000000e-01 : f32
    %42 = vector.broadcast %cst_17 : f32 to vector<32x128xf32>
    %43 = arith.mulf %42, %41 : vector<32x128xf32>
    %44 = arith.mulf %31, %43 : vector<32x128xf32>
    %45 = arith.truncf %44 : vector<32x128xf32> to vector<32x128xbf16>
    %c0_18 = arith.constant 0 : index
    %c0_19 = arith.constant 0 : index
    %46 = vector.load %arg6[%c0_18, %c0_19] : memref<128x32xf32, #tpu.memory_space<vmem>>, vector<128x32xf32>
    %47 = arith.truncf %46 : vector<128x32xf32> to vector<128x32xbf16>
    %cst_20 = arith.constant dense<0.000000e+00> : vector<32x32xf32>
    %48 = tpu.matmul %45, %47, %cst_20 {dimension_numbers = #tpu.dot_dimension_numbers<[1], [0], [0], [1], [0, 0, 1, 1], [], []>} : vector<32x128xbf16>, vector<128x32xbf16>, vector<32x32xf32> -> vector<32x32xf32>
    %c0_21 = arith.constant 0 : index
    %c0_22 = arith.constant 0 : index
    %49 = vector.load %arg7[%c0_21, %c0_22] : memref<1x32xf32, #tpu.memory_space<vmem>>, vector<1x32xf32>
    %50 = vector.broadcast %49 : vector<1x32xf32> to vector<32x32xf32>
    %51 = arith.addf %48, %50 : vector<32x32xf32>
    %52 = arith.addf %0, %51 : vector<32x32xf32>
    %c0_23 = arith.constant 0 : index
    %c0_24 = arith.constant 0 : index
    %53 = vector.load %arg8[%c0_23, %c0_24] : memref<32x32xf32, #tpu.memory_space<vmem>>, vector<32x32xf32>
    tpu.vector_store %arg8[%c0_23, %c0_24], %52 {strides = array<i32>} : memref<32x32xf32, #tpu.memory_space<vmem>>, vector<32x32xf32>,
    return
  }
  func.func @transform_0(%arg0: i32) -> (i32, i32) {
    %c0_i32 = arith.constant 0 : i32
    %c0_i32_0 = arith.constant 0 : i32
    return %arg0, %c0_i32 : i32, i32
  }
  func.func @transform_1(%arg0: i32) -> (i32, i32) {
    %c0_i32 = arith.constant 0 : i32
    %c0_i32_0 = arith.constant 0 : i32
    %c0_i32_1 = arith.constant 0 : i32
    return %c0_i32, %c0_i32_0 : i32, i32
  }
  func.func @transform_2(%arg0: i32) -> (i32, i32) {
    %c0_i32 = arith.constant 0 : i32
    %c0_i32_0 = arith.constant 0 : i32
    %c0_i32_1 = arith.constant 0 : i32
    return %c0_i32, %c0_i32_0 : i32, i32
  }
  func.func @transform_3(%arg0: i32) -> (i32, i32) {
    %c0_i32 = arith.constant 0 : i32
    %c0_i32_0 = arith.constant 0 : i32
    %c0_i32_1 = arith.constant 0 : i32
    return %c0_i32, %c0_i32_0 : i32, i32
  }
  func.func @transform_4(%arg0: i32) -> (i32, i32) {
    %c0_i32 = arith.constant 0 : i32
    %c0_i32_0 = arith.constant 0 : i32
    %c0_i32_1 = arith.constant 0 : i32
    return %c0_i32, %c0_i32_0 : i32, i32
  }
  func.func @transform_5(%arg0: i32) -> (i32, i32) {
    %c0_i32 = arith.constant 0 : i32
    %c0_i32_0 = arith.constant 0 : i32
    %c0_i32_1 = arith.constant 0 : i32
    return %c0_i32, %c0_i32_0 : i32, i32
  }
  func.func @transform_6(%arg0: i32) -> (i32, i32) {
    %c0_i32 = arith.constant 0 : i32
    %c0_i32_0 = arith.constant 0 : i32
    %c0_i32_1 = arith.constant 0 : i32
    return %c0_i32, %c0_i32_0 : i32, i32
  }
  func.func @transform_7(%arg0: i32) -> (i32, i32) {
    %c0_i32 = arith.constant 0 : i32
    %c0_i32_0 = arith.constant 0 : i32
    return %arg0, %c0_i32 : i32, i32
  }
}

module attributes {stable_mosaic.version = 11 : i64} {
  func.func @_ln_pool_kernel(%arg0: memref<2x16x32xf32, #tpu.memory_space<vmem>>, %arg1: memref<1x1x32xf32, #tpu.memory_space<vmem>>, %arg2: memref<1x1x32xf32, #tpu.memory_space<vmem>>, %arg3: memref<2x32xf32, #tpu.memory_space<vmem>>) attributes {dimension_semantics = [], scalar_prefetch = 0 : i64, scratch_operands = 0 : i64, tpu.core_type = #tpu.core_type<tc>} {
    %c0 = arith.constant 0 : index
    %c0_0 = arith.constant 0 : index
    %c0_1 = arith.constant 0 : index
    %0 = vector.load %arg0[%c0, %c0_0, %c0_1] : memref<2x16x32xf32, #tpu.memory_space<vmem>>, vector<2x16x32xf32>
    %cst = arith.constant dense<0.000000e+00> : vector<2x16xf32>
    %1 = vector.multi_reduction <add>, %0, %cst [2] : vector<2x16x32xf32> to vector<2x16xf32>
    %2 = vector.shape_cast %1 : vector<2x16xf32> to vector<2x16x1xf32>
    %cst_2 = arith.constant 3.200000e+01 : f32
    %3 = vector.broadcast %cst_2 : f32 to vector<2x16x1xf32>
    %4 = arith.divf %2, %3 : vector<2x16x1xf32>
    %5 = vector.broadcast %4 : vector<2x16x1xf32> to vector<2x16x32xf32>
    %6 = arith.subf %0, %5 : vector<2x16x32xf32>
    %7 = arith.mulf %6, %6 : vector<2x16x32xf32>
    %cst_3 = arith.constant dense<0.000000e+00> : vector<2x16xf32>
    %8 = vector.multi_reduction <add>, %7, %cst_3 [2] : vector<2x16x32xf32> to vector<2x16xf32>
    %9 = vector.shape_cast %8 : vector<2x16xf32> to vector<2x16x1xf32>
    %cst_4 = arith.constant 3.200000e+01 : f32
    %10 = vector.broadcast %cst_4 : f32 to vector<2x16x1xf32>
    %11 = arith.divf %9, %10 : vector<2x16x1xf32>
    %12 = vector.broadcast %4 : vector<2x16x1xf32> to vector<2x16x32xf32>
    %13 = arith.subf %0, %12 : vector<2x16x32xf32>
    %cst_5 = arith.constant 9.99999974E-6 : f32
    %14 = vector.broadcast %cst_5 : f32 to vector<2x16x1xf32>
    %15 = arith.addf %11, %14 : vector<2x16x1xf32>
    %16 = math.rsqrt %15 : vector<2x16x1xf32>
    %17 = vector.broadcast %16 : vector<2x16x1xf32> to vector<2x16x32xf32>
    %18 = arith.mulf %13, %17 : vector<2x16x32xf32>
    %c0_6 = arith.constant 0 : index
    %c0_7 = arith.constant 0 : index
    %c0_8 = arith.constant 0 : index
    %19 = vector.load %arg1[%c0_6, %c0_7, %c0_8] : memref<1x1x32xf32, #tpu.memory_space<vmem>>, vector<1x1x32xf32>
    %20 = vector.broadcast %19 : vector<1x1x32xf32> to vector<2x16x32xf32>
    %21 = arith.mulf %18, %20 : vector<2x16x32xf32>
    %c0_9 = arith.constant 0 : index
    %c0_10 = arith.constant 0 : index
    %c0_11 = arith.constant 0 : index
    %22 = vector.load %arg2[%c0_9, %c0_10, %c0_11] : memref<1x1x32xf32, #tpu.memory_space<vmem>>, vector<1x1x32xf32>
    %23 = vector.broadcast %22 : vector<1x1x32xf32> to vector<2x16x32xf32>
    %24 = arith.addf %21, %23 : vector<2x16x32xf32>
    %cst_12 = arith.constant dense<0.000000e+00> : vector<2x32xf32>
    %25 = vector.multi_reduction <add>, %24, %cst_12 [1] : vector<2x16x32xf32> to vector<2x32xf32>
    %cst_13 = arith.constant 1.600000e+01 : f32
    %26 = vector.broadcast %cst_13 : f32 to vector<2x32xf32>
    %27 = arith.divf %25, %26 : vector<2x32xf32>
    %c0_14 = arith.constant 0 : index
    %c0_15 = arith.constant 0 : index
    %28 = vector.load %arg3[%c0_14, %c0_15] : memref<2x32xf32, #tpu.memory_space<vmem>>, vector<2x32xf32>
    tpu.vector_store %arg3[%c0_14, %c0_15], %27 {strides = array<i32>} : memref<2x32xf32, #tpu.memory_space<vmem>>, vector<2x32xf32>,
    return
  }
}

module attributes {stable_mosaic.version = 11 : i64} {
  func.func @_head_bn_cls_kernel(%arg0: memref<2x32xf32, #tpu.memory_space<vmem>>, %arg1: memref<32x64xf32, #tpu.memory_space<vmem>>, %arg2: memref<1x64xf32, #tpu.memory_space<vmem>>, %arg3: memref<1x64xf32, #tpu.memory_space<vmem>>, %arg4: memref<1x64xf32, #tpu.memory_space<vmem>>, %arg5: memref<64x128xf32, #tpu.memory_space<vmem>>, %arg6: memref<2x64xf32, #tpu.memory_space<vmem>>, %arg7: memref<2x64xf32, #tpu.memory_space<vmem>>, %arg8: memref<2x128xf32, #tpu.memory_space<vmem>>) attributes {dimension_semantics = [], scalar_prefetch = 0 : i64, scratch_operands = 0 : i64, tpu.core_type = #tpu.core_type<tc>} {
    %c0 = arith.constant 0 : index
    %c0_0 = arith.constant 0 : index
    %0 = vector.load %arg0[%c0, %c0_0] : memref<2x32xf32, #tpu.memory_space<vmem>>, vector<2x32xf32>
    %c0_1 = arith.constant 0 : index
    %c0_2 = arith.constant 0 : index
    %1 = vector.load %arg1[%c0_1, %c0_2] : memref<32x64xf32, #tpu.memory_space<vmem>>, vector<32x64xf32>
    %cst = arith.constant dense<0.000000e+00> : vector<2x64xf32>
    %2 = tpu.matmul %0, %1, %cst {dimension_numbers = #tpu.dot_dimension_numbers<[1], [0], [0], [1], [0, 0, 1, 1], [], []>} : vector<2x32xf32>, vector<32x64xf32>, vector<2x64xf32> -> vector<2x64xf32>
    %c0_3 = arith.constant 0 : index
    %c0_4 = arith.constant 0 : index
    %3 = vector.load %arg2[%c0_3, %c0_4] : memref<1x64xf32, #tpu.memory_space<vmem>>, vector<1x64xf32>
    %4 = vector.broadcast %3 : vector<1x64xf32> to vector<2x64xf32>
    %5 = arith.addf %2, %4 : vector<2x64xf32>
    %cst_5 = arith.constant dense<0.000000e+00> : vector<64xf32>
    %6 = vector.multi_reduction <add>, %5, %cst_5 [0] : vector<2x64xf32> to vector<64xf32>
    %7 = vector.shape_cast %6 : vector<64xf32> to vector<1x64xf32>
    %cst_6 = arith.constant 2.000000e+00 : f32
    %8 = vector.broadcast %cst_6 : f32 to vector<1x64xf32>
    %9 = arith.divf %7, %8 : vector<1x64xf32>
    %10 = vector.broadcast %9 : vector<1x64xf32> to vector<2x64xf32>
    %11 = arith.subf %5, %10 : vector<2x64xf32>
    %12 = arith.mulf %11, %11 : vector<2x64xf32>
    %cst_7 = arith.constant dense<0.000000e+00> : vector<64xf32>
    %13 = vector.multi_reduction <add>, %12, %cst_7 [0] : vector<2x64xf32> to vector<64xf32>
    %14 = vector.shape_cast %13 : vector<64xf32> to vector<1x64xf32>
    %cst_8 = arith.constant 2.000000e+00 : f32
    %15 = vector.broadcast %cst_8 : f32 to vector<1x64xf32>
    %16 = arith.divf %14, %15 : vector<1x64xf32>
    %17 = vector.broadcast %9 : vector<1x64xf32> to vector<2x64xf32>
    %18 = arith.subf %5, %17 : vector<2x64xf32>
    %cst_9 = arith.constant 9.99999974E-6 : f32
    %19 = vector.broadcast %cst_9 : f32 to vector<1x64xf32>
    %20 = arith.addf %16, %19 : vector<1x64xf32>
    %21 = math.rsqrt %20 : vector<1x64xf32>
    %22 = vector.broadcast %21 : vector<1x64xf32> to vector<2x64xf32>
    %23 = arith.mulf %18, %22 : vector<2x64xf32>
    %c0_10 = arith.constant 0 : index
    %c0_11 = arith.constant 0 : index
    %24 = vector.load %arg3[%c0_10, %c0_11] : memref<1x64xf32, #tpu.memory_space<vmem>>, vector<1x64xf32>
    %25 = vector.broadcast %24 : vector<1x64xf32> to vector<2x64xf32>
    %26 = arith.mulf %23, %25 : vector<2x64xf32>
    %c0_12 = arith.constant 0 : index
    %c0_13 = arith.constant 0 : index
    %27 = vector.load %arg4[%c0_12, %c0_13] : memref<1x64xf32, #tpu.memory_space<vmem>>, vector<1x64xf32>
    %28 = vector.broadcast %27 : vector<1x64xf32> to vector<2x64xf32>
    %29 = arith.addf %26, %28 : vector<2x64xf32>
    %c0_14 = arith.constant 0 : index
    %c0_15 = arith.constant 0 : index
    %30 = vector.load %arg6[%c0_14, %c0_15] : memref<2x64xf32, #tpu.memory_space<vmem>>, vector<2x64xf32>
    tpu.vector_store %arg6[%c0_14, %c0_15], %5 {strides = array<i32>} : memref<2x64xf32, #tpu.memory_space<vmem>>, vector<2x64xf32>,
    %c0_16 = arith.constant 0 : index
    %c0_17 = arith.constant 0 : index
    %31 = vector.load %arg7[%c0_16, %c0_17] : memref<2x64xf32, #tpu.memory_space<vmem>>, vector<2x64xf32>
    tpu.vector_store %arg7[%c0_16, %c0_17], %29 {strides = array<i32>} : memref<2x64xf32, #tpu.memory_space<vmem>>, vector<2x64xf32>,
    %c0_18 = arith.constant 0 : index
    %c0_19 = arith.constant 0 : index
    %32 = vector.load %arg5[%c0_18, %c0_19] : memref<64x128xf32, #tpu.memory_space<vmem>>, vector<64x128xf32>
    %cst_20 = arith.constant dense<0.000000e+00> : vector<2x128xf32>
    %33 = tpu.matmul %29, %32, %cst_20 {dimension_numbers = #tpu.dot_dimension_numbers<[1], [0], [0], [1], [0, 0, 1, 1], [], []>} : vector<2x64xf32>, vector<64x128xf32>, vector<2x128xf32> -> vector<2x128xf32>
    %c0_21 = arith.constant 0 : index
    %c0_22 = arith.constant 0 : index
    %34 = vector.load %arg8[%c0_21, %c0_22] : memref<2x128xf32, #tpu.memory_space<vmem>>, vector<2x128xf32>
    tpu.vector_store %arg8[%c0_21, %c0_22], %33 {strides = array<i32>} : memref<2x128xf32, #tpu.memory_space<vmem>>, vector<2x128xf32>,
    return
  }
}

</mosaic_0001>

<llo_original>
// kernel: swin_reid_forward.6
$region0: #{swin_reid_forward.6}
  #allocation0 [shape = 'u32[]', space=smem, size = 0x4, offset = 0x4, fixed_abs, tag = 'smem constant byte address 0x4 - core index']
  #allocation1 [shape = 'u32[144,128]{1,0:T(1,128)}', space=vmem, size = 0x12000, scoped, tag = 'internal scratch']
  %s0 = inlined_call_operand.vmem [shape: f32[32,48], index: 0, kind: input, shape index: {}]
  %s1 = inlined_call_operand.vmem [shape: f32[48,32], index: 1, kind: input, shape index: {}]
  %s2 = inlined_call_operand.vmem [shape: f32[1,32], index: 2, kind: input, shape index: {}]
  %s3 = inlined_call_operand.vmem [shape: f32[1,32], index: 3, kind: input, shape index: {}]
  %s4 = inlined_call_operand.vmem [shape: f32[1,32], index: 4, kind: input, shape index: {}]
  %s5 = inlined_call_operand.vmem [shape: f32[32,32], index: 5, kind: output, shape index: {}]
  %s6 = sld [smem:[#allocation0]]
  $region30: #{swin_reid_forward.6} parent=0
    _
  %s8 = ssub.s32 1, %s6
  %s9 = scalar_select 0, %s8, %s6
  // Predicated region
  $region2: #{swin_reid_forward.6} parent=0 // pred_check
    _
  $region3: #{swin_reid_forward.6} parent=0 // pred_check_branch
    %11 = sbr.rel (0) target = $region5
  $region4: #{swin_reid_forward.6} parent=0 // pred_region
    _
  $region5: #{swin_reid_forward.6} parent=0 // pred_fallthru
    _
  // Predicated region
  $region6: #{swin_reid_forward.6} parent=0 // pred_check
    _
  $region7: #{swin_reid_forward.6} parent=0 // pred_check_branch
    %13 = sbr.rel (0) target = $region9
  $region8: #{swin_reid_forward.6} parent=0 // pred_region
    _
  $region9: #{swin_reid_forward.6} parent=0 // pred_fallthru
    _
  // Predicated region
  $region10: #{swin_reid_forward.6} parent=0 // pred_check
    _
  $region11: #{swin_reid_forward.6} parent=0 // pred_check_branch
    %15 = sbr.rel (0) target = $region13
  $region12: #{swin_reid_forward.6} parent=0 // pred_region
    _
  $region13: #{swin_reid_forward.6} parent=0 // pred_fallthru
    _
  // Predicated region
  $region14: #{swin_reid_forward.6} parent=0 // pred_check
    _
  $region15: #{swin_reid_forward.6} parent=0 // pred_check_branch
    %17 = sbr.rel (0) target = $region17
  $region16: #{swin_reid_forward.6} parent=0 // pred_region
    _
  $region17: #{swin_reid_forward.6} parent=0 // pred_fallthru
    _
  // Predicated region
  $region18: #{swin_reid_forward.6} parent=0 // pred_check
    _
  $region19: #{swin_reid_forward.6} parent=0 // pred_check_branch
    %19 = sbr.rel (0) target = $region21
  $region20: #{swin_reid_forward.6} parent=0 // pred_region
    _
  $region21: #{swin_reid_forward.6} parent=0 // pred_fallthru
    _
  %v21 = vld [vmem:[%s0] sm:$0xff]
  %v22 = vld [vmem:[%s0 + $0x8] sm:$0xff]
  %v23 = vld [vmem:[%s0 + $0x10] sm:$0xff]
  %v24 = vld [vmem:[%s0 + $0x18] sm:$0xff]
  %v25 = vpack.c.bf16 %v22, %v21
  %v26 = vpack.c.bf16 %v24, %v23
  %v27 = vld [vmem:[%s1] sm:$0xff]
  %v28 = vld [vmem:[%s1 + $0x8] sm:$0xff]
  %v29 = vld [vmem:[%s1 + $0x10] sm:$0xff]
  %v30 = vld [vmem:[%s1 + $0x18] sm:$0xff]
  %v31 = vld [vmem:[%s1 + $0x20] sm:$0xff]
  %v32 = vld [vmem:[%s1 + $0x28] sm:$0xff]
  %v33 = vpack.c.bf16 %v28, %v27
  %v34 = vpack.c.bf16 %v30, %v29
  %v35 = vpack.c.bf16 %v32, %v31
  %v36 = vld [vmem:[%s2] sm:$0x1]
  %v38 = vlaneseq
  %v39 = vshrl.u32 %v38, 7
  %v40 = vsub.s32 0, %v39
  %v41 = vrot.slane %v36, %v40
  %vm43 = vcmask 392192
  %v45 = vsel %vm43, %v25, 0
  %v48 = vsel %vm43, %v26, 0
  %50 = vmatprep.subr.bf16.mxu0 0
  %51 = vmatpush1.bf16.msra.mxu0 %v33
  %52 = vmatprep.subr.bf16.mxu0 0
  %53 = vmatpush1.bf16.msra.mxu0 %v34
  %54 = vmatprep.subr.bf16.mxu0 0
  %55 = vmatpush1.bf16.msra.mxu0 %v35
  %56 = vmatprep.subr.bf16.mxu0 0
  %57 = vmatpush1.bf16.msra.mxu0 0
  %58 = vmatprep.subr.bf16.mxu0 0
  %59 = vmatpush1.bf16.msra.mxu0 0
  %60 = vmatprep.subr.bf16.mxu0 0
  %61 = vmatpush1.bf16.msra.mxu0 0
  %62 = vmatprep.subr.bf16.mxu0 0
  %63 = vmatpush1.bf16.msra.mxu0 0
  %64 = vmatprep.subr.bf16.mxu0 0
  %65 = vmatpush1.bf16.msra.mxu0 0
  %66 = vmatprep.subr.bf16.mxu0 0
  %67 = vmatpush1.bf16.msra.mxu0 0
  %68 = vmatprep.subr.bf16.mxu0 0
  %69 = vmatpush1.bf16.msra.mxu0 0
  %70 = vmatprep.subr.bf16.mxu0 0
  %71 = vmatpush1.bf16.msra.mxu0 0
  %72 = vmatprep.subr.bf16.mxu0 0
  %73 = vmatpush1.bf16.msra.mxu0 0
  %74 = vmatprep.subr.bf16.mxu0 0
  %75 = vmatpush1.bf16.msra.mxu0 0
  %76 = vmatprep.subr.bf16.mxu0 0
  %77 = vmatpush1.bf16.msra.mxu0 0
  %78 = vmatprep.subr.bf16.mxu0 0
  %79 = vmatpush1.bf16.msra.mxu0 0
  %80 = vmatprep.subr.bf16.mxu0 0
  %81 = vmatpush1.bf16.msra.mxu0 0
  %82 = vmatprep.mubr.bf16.mxu0 0
  %83 = vmatmul.mubr.bf16.gmra.mrb[0].mxu0 %v45
  %v84 = vpop.f32.mrb[0].mxu0
  %v85 = vadd.f32 %v41, %v84
  %v86 = vpop.f32.mrb[0].mxu0
  %v87 = vpop.f32.mrb[0].mxu0
  %v88 = vadd.f32 %v41, %v87
  %v89 = vpop.f32.mrb[0].mxu0
  %90 = vmatprep.mubr.bf16.mxu0 0
  %91 = vmatmul.mubr.bf16.gmra.mrb[0].mxu0 %v48
  %v92 = vpop.f32.mrb[0].mxu0
  %v93 = vadd.f32 %v41, %v92
  %v94 = vpop.f32.mrb[0].mxu0
  %v95 = vpop.f32.mrb[0].mxu0
  %v96 = vadd.f32 %v41, %v95
  %v97 = vpop.f32.mrb[0].mxu0
  %98 = vdwg.mxu0
  %vm99 = vcmask 261120
  %v100 = vsel %vm99, %v85, 0.0
  %101 = vadd.xlane.f32.xlu0 %v100
  %v102 = vpop.xlane.xlu0 %101
  %v103 = vsel %vm99, %v88, 0.0
  %104 = vadd.xlane.f32.xlu0 %v103
  %v105 = vpop.xlane.xlu0 %104
  %v106 = vsel %vm99, %v93, 0.0
  %107 = vadd.xlane.f32.xlu0 %v106
  %v108 = vpop.xlane.xlu0 %107
  %v109 = vsel %vm99, %v96, 0.0
  %110 = vadd.xlane.f32.xlu0 %v109
  %v111 = vpop.xlane.xlu0 %110
  %v112 = vrcp.pop 32.0
  %v113 = vmul.f32 %v102, %v112
  %v114 = vmul.f32 %v105, %v112
  %v115 = vmul.f32 %v108, %v112
  %v116 = vmul.f32 %v111, %v112
  %v117 = vsub.f32 %v85, %v113
  %v118 = vsub.f32 %v88, %v114
  %v119 = vsub.f32 %v93, %v115
  %v120 = vsub.f32 %v96, %v116
  %v121 = vmul.f32 %v117, %v117
  %v122 = vmul.f32 %v118, %v118
  %v123 = vmul.f32 %v119, %v119
  %v124 = vmul.f32 %v120, %v120
  %v125 = vsel %vm99, %v121, 0.0
  %126 = vadd.xlane.f32.xlu0 %v125
  %v127 = vpop.xlane.xlu0 %126
  %v128 = vsel %vm99, %v122, 0.0
  %129 = vadd.xlane.f32.xlu0 %v128
  %v130 = vpop.xlane.xlu0 %129
  %v131 = vsel %vm99, %v123, 0.0
  %132 = vadd.xlane.f32.xlu0 %v131
  %v133 = vpop.xlane.xlu0 %132
  %v134 = vsel %vm99, %v124, 0.0
  %135 = vadd.xlane.f32.xlu0 %v134
  %v136 = vpop.xlane.xlu0 %135
  %v137 = vmul.f32 %v127, %v112
  %v138 = vmul.f32 %v130, %v112
  %v139 = vmul.f32 %v133, %v112
  %v140 = vmul.f32 %v136, %v112
  %v141 = vadd.f32 %v137, 1e-05
  %v142 = vadd.f32 %v138, 1e-05
  %v143 = vadd.f32 %v139, 1e-05
  %v144 = vadd.f32 %v140, 1e-05
  %v145 = vrsqrt.pop %v141
  %v146 = vrsqrt.pop %v142
  %v147 = vrsqrt.pop %v143
  %v148 = vrsqrt.pop %v144
  %v149 = vmul.f32 %v117, %v145
  %v150 = vmul.f32 %v118, %v146
  %v151 = vmul.f32 %v119, %v147
  %v152 = vmul.f32 %v120, %v148
  %v153 = vld [vmem:[%s3] sm:$0x1]
  %v155 = vlaneseq
  %v156 = vshrl.u32 %v155, 7
  %v157 = vsub.s32 0, %v156
  %v158 = vrot.slane %v153, %v157
  %v160 = vmul.f32 %v149, %v158
  %v161 = vmul.f32 %v150, %v158
  %v162 = vmul.f32 %v151, %v158
  %v163 = vmul.f32 %v152, %v158
  %v164 = vld [vmem:[%s4] sm:$0x1]
  %v166 = vlaneseq
  %v167 = vshrl.u32 %v166, 7
  %v168 = vsub.s32 0, %v167
  %v169 = vrot.slane %v164, %v168
  %v171 = vadd.f32 %v160, %v169
  %v172 = vadd.f32 %v161, %v169
  %v173 = vadd.f32 %v162, %v169
  %v174 = vadd.f32 %v163, %v169
  %175 = vst.msk [vmem:[%s5] sm:$0xff] %vm99, %v171
  %176 = vst.msk [vmem:[%s5 + $0x8] sm:$0xff] %vm99, %v172
  %177 = vst.msk [vmem:[%s5 + $0x10] sm:$0xff] %vm99, %v173
  %178 = vst.msk [vmem:[%s5 + $0x18] sm:$0xff] %vm99, %v174
  // Predicated region
  $region22: #{swin_reid_forward.6} parent=0 // pred_check
    _
  $region23: #{swin_reid_forward.6} parent=0 // pred_check_branch
    %180 = sbr.rel (0) target = $region25
  $region24: #{swin_reid_forward.6} parent=0 // pred_region
    _
  $region25: #{swin_reid_forward.6} parent=0 // pred_fallthru
    _
  // Predicated region
  $region26: #{swin_reid_forward.6} parent=0 // pred_check
    _
  $region27: #{swin_reid_forward.6} parent=0 // pred_check_branch
    %182 = sbr.rel (0) target = $region29
  $region28: #{swin_reid_forward.6} parent=0 // pred_region
    _
  $region29: #{swin_reid_forward.6} parent=0 // pred_fallthru
    _

// kernel: swin_reid_forward.7
$region0: #{swin_reid_forward.7}
  #allocation0 [shape = 'u32[]', space=smem, size = 0x4, offset = 0x4, fixed_abs, tag = 'smem constant byte address 0x4 - core index']
  #allocation1 [shape = 'u32[144,128]{1,0:T(1,128)}', space=vmem, size = 0x12000, scoped, tag = 'internal scratch']
  %s0 = inlined_call_operand.vmem [shape: f32[32,32], index: 0, kind: input, shape index: {}]
  %s1 = inlined_call_operand.vmem [shape: f32[1,32], index: 1, kind: input, shape index: {}]
  %s2 = inlined_call_operand.vmem [shape: f32[1,32], index: 2, kind: input, shape index: {}]
  %s3 = inlined_call_operand.vmem [shape: f32[32,96], index: 3, kind: input, shape index: {}]
  %s4 = inlined_call_operand.vmem [shape: f32[1,96], index: 4, kind: input, shape index: {}]
  %s5 = inlined_call_operand.vmem [shape: f32[32,96], index: 5, kind: output, shape index: {}]
  %s6 = sld [smem:[#allocation0]]
  $region30: #{swin_reid_forward.7} parent=0
    _
  %s8 = ssub.s32 1, %s6
  %s9 = scalar_select 0, %s8, %s6
  // Predicated region
  $region2: #{swin_reid_forward.7} parent=0 // pred_check
    _
  $region3: #{swin_reid_forward.7} parent=0 // pred_check_branch
    %11 = sbr.rel (0) target = $region5
  $region4: #{swin_reid_forward.7} parent=0 // pred_region
    _
  $region5: #{swin_reid_forward.7} parent=0 // pred_fallthru
    _
  // Predicated region
  $region6: #{swin_reid_forward.7} parent=0 // pred_check
    _
  $region7: #{swin_reid_forward.7} parent=0 // pred_check_branch
    %13 = sbr.rel (0) target = $region9
  $region8: #{swin_reid_forward.7} parent=0 // pred_region
    _
  $region9: #{swin_reid_forward.7} parent=0 // pred_fallthru
    _
  // Predicated region
  $region10: #{swin_reid_forward.7} parent=0 // pred_check
    _
  $region11: #{swin_reid_forward.7} parent=0 // pred_check_branch
    %15 = sbr.rel (0) target = $region13
  $region12: #{swin_reid_forward.7} parent=0 // pred_region
    _
  $region13: #{swin_reid_forward.7} parent=0 // pred_fallthru
    _
  // Predicated region
  $region14: #{swin_reid_forward.7} parent=0 // pred_check
    _
  $region15: #{swin_reid_forward.7} parent=0 // pred_check_branch
    %17 = sbr.rel (0) target = $region17
  $region16: #{swin_reid_forward.7} parent=0 // pred_region
    _
  $region17: #{swin_reid_forward.7} parent=0 // pred_fallthru
    _
  // Predicated region
  $region18: #{swin_reid_forward.7} parent=0 // pred_check
    _
  $region19: #{swin_reid_forward.7} parent=0 // pred_check_branch
    %19 = sbr.rel (0) target = $region21
  $region20: #{swin_reid_forward.7} parent=0 // pred_region
    _
  $region21: #{swin_reid_forward.7} parent=0 // pred_fallthru
    _
  %v21 = vld [vmem:[%s0] sm:$0xff]
  %v22 = vld [vmem:[%s0 + $0x8] sm:$0xff]
  %v23 = vld [vmem:[%s0 + $0x10] sm:$0xff]
  %v24 = vld [vmem:[%s0 + $0x18] sm:$0xff]
  %vm25 = vcmask 261120
  %v26 = vsel %vm25, %v21, 0.0
  %27 = vadd.xlane.f32.xlu0 %v26
  %v28 = vpop.xlane.xlu0 %27
  %v29 = vsel %vm25, %v22, 0.0
  %30 = vadd.xlane.f32.xlu0 %v29
  %v31 = vpop.xlane.xlu0 %30
  %v32 = vsel %vm25, %v23, 0.0
  %33 = vadd.xlane.f32.xlu0 %v32
  %v34 = vpop.xlane.xlu0 %33
  %v35 = vsel %vm25, %v24, 0.0
  %36 = vadd.xlane.f32.xlu0 %v35
  %v37 = vpop.xlane.xlu0 %36
  %v38 = vrcp.pop 32.0
  %v39 = vmul.f32 %v28, %v38
  %v40 = vmul.f32 %v31, %v38
  %v41 = vmul.f32 %v34, %v38
  %v42 = vmul.f32 %v37, %v38
  %v43 = vsub.f32 %v21, %v39
  %v44 = vsub.f32 %v22, %v40
  %v45 = vsub.f32 %v23, %v41
  %v46 = vsub.f32 %v24, %v42
  %v47 = vmul.f32 %v43, %v43
  %v48 = vmul.f32 %v44, %v44
  %v49 = vmul.f32 %v45, %v45
  %v50 = vmul.f32 %v46, %v46
  %v51 = vsel %vm25, %v47, 0.0
  %52 = vadd.xlane.f32.xlu0 %v51
  %v53 = vpop.xlane.xlu0 %52
  %v54 = vsel %vm25, %v48, 0.0
  %55 = vadd.xlane.f32.xlu0 %v54
  %v56 = vpop.xlane.xlu0 %55
  %v57 = vsel %vm25, %v49, 0.0
  %58 = vadd.xlane.f32.xlu0 %v57
  %v59 = vpop.xlane.xlu0 %58
  %v60 = vsel %vm25, %v50, 0.0
  %61 = vadd.xlane.f32.xlu0 %v60
  %v62 = vpop.xlane.xlu0 %61
  %v63 = vmul.f32 %v53, %v38
  %v64 = vmul.f32 %v56, %v38
  %v65 = vmul.f32 %v59, %v38
  %v66 = vmul.f32 %v62, %v38
  %v67 = vadd.f32 %v63, 1e-05
  %v68 = vadd.f32 %v64, 1e-05
  %v69 = vadd.f32 %v65, 1e-05
  %v70 = vadd.f32 %v66, 1e-05
  %v71 = vrsqrt.pop %v67
  %v72 = vrsqrt.pop %v68
  %v73 = vrsqrt.pop %v69
  %v74 = vrsqrt.pop %v70
  %v75 = vmul.f32 %v43, %v71
  %v76 = vmul.f32 %v44, %v72
  %v77 = vmul.f32 %v45, %v73
  %v78 = vmul.f32 %v46, %v74
  %v79 = vld [vmem:[%s1] sm:$0x1]
  %v81 = vlaneseq
  %v82 = vshrl.u32 %v81, 7
  %v83 = vsub.s32 0, %v82
  %v84 = vrot.slane %v79, %v83
  %v86 = vmul.f32 %v75, %v84
  %v87 = vmul.f32 %v76, %v84
  %v88 = vmul.f32 %v77, %v84
  %v89 = vmul.f32 %v78, %v84
  %v90 = vld [vmem:[%s2] sm:$0x1]
  %v92 = vlaneseq
  %v93 = vshrl.u32 %v92, 7
  %v94 = vsub.s32 0, %v93
  %v95 = vrot.slane %v90, %v94
  %v97 = vadd.f32 %v86, %v95
  %v98 = vadd.f32 %v87, %v95
  %v99 = vadd.f32 %v88, %v95
  %v100 = vadd.f32 %v89, %v95
  %v101 = vpack.c.bf16 %v98, %v97
  %v102 = vpack.c.bf16 %v100, %v99
  %v103 = vld [vmem:[%s3] sm:$0xff]
  %v104 = vld [vmem:[%s3 + $0x8] sm:$0xff]
  %v105 = vld [vmem:[%s3 + $0x10] sm:$0xff]
  %v106 = vld [vmem:[%s3 + $0x18] sm:$0xff]
  %v107 = vpack.c.bf16 %v104, %v103
  %v108 = vpack.c.bf16 %v106, %v105
  %v109 = vld [vmem:[%s4] sm:$0x1]
  %v111 = vlaneseq
  %v112 = vshrl.u32 %v111, 7
  %v113 = vsub.s32 0, %v112
  %v114 = vrot.slane %v109, %v113
  %v117 = vsel %vm25, %v101, 0
  %v120 = vsel %vm25, %v102, 0
  %122 = vmatprep.subr.bf16.mxu0 0
  %123 = vmatpush1.bf16.msra.mxu0 %v107
  %124 = vmatprep.subr.bf16.mxu0 0
  %125 = vmatpush1.bf16.msra.mxu0 %v108
  %126 = vmatprep.subr.bf16.mxu0 0
  %127 = vmatpush1.bf16.msra.mxu0 0
  %128 = vmatprep.subr.bf16.mxu0 0
  %129 = vmatpush1.bf16.msra.mxu0 0
  %130 = vmatprep.subr.bf16.mxu0 0
  %131 = vmatpush1.bf16.msra.mxu0 0
  %132 = vmatprep.subr.bf16.mxu0 0
  %133 = vmatpush1.bf16.msra.mxu0 0
  %134 = vmatprep.subr.bf16.mxu0 0
  %135 = vmatpush1.bf16.msra.mxu0 0
  %136 = vmatprep.subr.bf16.mxu0 0
  %137 = vmatpush1.bf16.msra.mxu0 0
  %138 = vmatprep.subr.bf16.mxu0 0
  %139 = vmatpush1.bf16.msra.mxu0 0
  %140 = vmatprep.subr.bf16.mxu0 0
  %141 = vmatpush1.bf16.msra.mxu0 0
  %142 = vmatprep.subr.bf16.mxu0 0
  %143 = vmatpush1.bf16.msra.mxu0 0
  %144 = vmatprep.subr.bf16.mxu0 0
  %145 = vmatpush1.bf16.msra.mxu0 0
  %146 = vmatprep.subr.bf16.mxu0 0
  %147 = vmatpush1.bf16.msra.mxu0 0
  %148 = vmatprep.subr.bf16.mxu0 0
  %149 = vmatpush1.bf16.msra.mxu0 0
  %150 = vmatprep.subr.bf16.mxu0 0
  %151 = vmatpush1.bf16.msra.mxu0 0
  %152 = vmatprep.subr.bf16.mxu0 0
  %153 = vmatpush1.bf16.msra.mxu0 0
  %154 = vmatprep.mubr.bf16.mxu0 0
  %155 = vmatmul.mubr.bf16.gmra.mrb[0].mxu0 %v117
  %v156 = vpop.f32.mrb[0].mxu0
  %v157 = vadd.f32 %v114, %v156
  %v158 = vpop.f32.mrb[0].mxu0
  %v159 = vpop.f32.mrb[0].mxu0
  %v160 = vadd.f32 %v114, %v159
  %v161 = vpop.f32.mrb[0].mxu0
  %162 = vmatprep.mubr.bf16.mxu0 0
  %163 = vmatmul.mubr.bf16.gmra.mrb[0].mxu0 %v120
  %v164 = vpop.f32.mrb[0].mxu0
  %v165 = vadd.f32 %v114, %v164
  %v166 = vpop.f32.mrb[0].mxu0
  %v167 = vpop.f32.mrb[0].mxu0
  %v168 = vadd.f32 %v114, %v167
  %v169 = vpop.f32.mrb[0].mxu0
  %170 = vdwg.mxu0
  %vm171 = vcmask 785408
  %172 = vst.msk [vmem:[%s5] sm:$0xff] %vm171, %v157
  %173 = vst.msk [vmem:[%s5 + $0x8] sm:$0xff] %vm171, %v160
  %174 = vst.msk [vmem:[%s5 + $0x10] sm:$0xff] %vm171, %v165
  %175 = vst.msk [vmem:[%s5 + $0x18] sm:$0xff] %vm171, %v168
  // Predicated region
  $region22: #{swin_reid_forward.7} parent=0 // pred_check
    _
  $region23: #{swin_reid_forward.7} parent=0 // pred_check_branch
    %177 = sbr.rel (0) target = $region25
  $region24: #{swin_reid_forward.7} parent=0 // pred_region
    _
  $region25: #{swin_reid_forward.7} parent=0 // pred_fallthru
    _
  // Predicated region
  $region26: #{swin_reid_forward.7} parent=0 // pred_check
    _
  $region27: #{swin_reid_forward.7} parent=0 // pred_check_branch
    %179 = sbr.rel (0) target = $region29
  $region28: #{swin_reid_forward.7} parent=0 // pred_region
    _
  $region29: #{swin_reid_forward.7} parent=0 // pred_fallthru
    _

// kernel: swin_reid_forward.9
$region0: #{swin_reid_forward.9}
  #allocation0 [shape = 'u32[]', space=smem, size = 0x4, offset = 0x4, fixed_abs, tag = 'smem constant byte address 0x4 - core index']
  #allocation1 [shape = 'u32[144,128]{1,0:T(1,128)}', space=vmem, size = 0x12000, scoped, tag = 'internal scratch']
  %s0 = inlined_call_operand.vmem [shape: f32[32,32], index: 0, kind: input, shape index: {}]
  %s1 = inlined_call_operand.vmem [shape: f32[1,32], index: 1, kind: input, shape index: {}]
  %s2 = inlined_call_operand.vmem [shape: f32[1,32], index: 2, kind: input, shape index: {}]
  %s3 = inlined_call_operand.vmem [shape: f32[32,128], index: 3, kind: input, shape index: {}]
  %s4 = inlined_call_operand.vmem [shape: f32[1,128], index: 4, kind: input, shape index: {}]
  %s5 = inlined_call_operand.vmem [shape: f32[128,32], index: 5, kind: input, shape index: {}]
  %s6 = inlined_call_operand.vmem [shape: f32[1,32], index: 6, kind: input, shape index: {}]
  %s7 = inlined_call_operand.vmem [shape: f32[32,32], index: 7, kind: output, shape index: {}]
  %s8 = sld [smem:[#allocation0]]
  $region38: #{swin_reid_forward.9} parent=0
    _
  %s10 = ssub.s32 1, %s8
  %s11 = scalar_select 0, %s10, %s8
  // Predicated region
  $region2: #{swin_reid_forward.9} parent=0 // pred_check
    _
  $region3: #{swin_reid_forward.9} parent=0 // pred_check_branch
    %13 = sbr.rel (0) target = $region5
  $region4: #{swin_reid_forward.9} parent=0 // pred_region
    _
  $region5: #{swin_reid_forward.9} parent=0 // pred_fallthru
    _
  // Predicated region
  $region6: #{swin_reid_forward.9} parent=0 // pred_check
    _
  $region7: #{swin_reid_forward.9} parent=0 // pred_check_branch
    %15 = sbr.rel (0) target = $region9
  $region8: #{swin_reid_forward.9} parent=0 // pred_region
    _
  $region9: #{swin_reid_forward.9} parent=0 // pred_fallthru
    _
  // Predicated region
  $region10: #{swin_reid_forward.9} parent=0 // pred_check
    _
  $region11: #{swin_reid_forward.9} parent=0 // pred_check_branch
    %17 = sbr.rel (0) target = $region13
  $region12: #{swin_reid_forward.9} parent=0 // pred_region
    _
  $region13: #{swin_reid_forward.9} parent=0 // pred_fallthru
    _
  // Predicated region
  $region14: #{swin_reid_forward.9} parent=0 // pred_check
    _
  $region15: #{swin_reid_forward.9} parent=0 // pred_check_branch
    %19 = sbr.rel (0) target = $region17
  $region16: #{swin_reid_forward.9} parent=0 // pred_region
    _
  $region17: #{swin_reid_forward.9} parent=0 // pred_fallthru
    _
  // Predicated region
  $region18: #{swin_reid_forward.9} parent=0 // pred_check
    _
  $region19: #{swin_reid_forward.9} parent=0 // pred_check_branch
    %21 = sbr.rel (0) target = $region21
  $region20: #{swin_reid_forward.9} parent=0 // pred_region
    _
  $region21: #{swin_reid_forward.9} parent=0 // pred_fallthru
    _
  // Predicated region
  $region22: #{swin_reid_forward.9} parent=0 // pred_check
    _
  $region23: #{swin_reid_forward.9} parent=0 // pred_check_branch
    %23 = sbr.rel (0) target = $region25
  $region24: #{swin_reid_forward.9} parent=0 // pred_region
    _
  $region25: #{swin_reid_forward.9} parent=0 // pred_fallthru
    _
  // Predicated region
  $region26: #{swin_reid_forward.9} parent=0 // pred_check
    _
  $region27: #{swin_reid_forward.9} parent=0 // pred_check_branch
    %25 = sbr.rel (0) target = $region29
  $region28: #{swin_reid_forward.9} parent=0 // pred_region
    _
  $region29: #{swin_reid_forward.9} parent=0 // pred_fallthru
    _
  %v27 = vld [vmem:[%s0] sm:$0xff]
  %v28 = vld [vmem:[%s0 + $0x8] sm:$0xff]
  %v29 = vld [vmem:[%s0 + $0x10] sm:$0xff]
  %v30 = vld [vmem:[%s0 + $0x18] sm:$0xff]
  %vm31 = vcmask 261120
  %v32 = vsel %vm31, %v27, 0.0
  %33 = vadd.xlane.f32.xlu0 %v32
  %v34 = vpop.xlane.xlu0 %33
  %v35 = vsel %vm31, %v28, 0.0
  %36 = vadd.xlane.f32.xlu0 %v35
  %v37 = vpop.xlane.xlu0 %36
  %v38 = vsel %vm31, %v29, 0.0
  %39 = vadd.xlane.f32.xlu0 %v38
  %v40 = vpop.xlane.xlu0 %39
  %v41 = vsel %vm31, %v30, 0.0
  %42 = vadd.xlane.f32.xlu0 %v41
  %v43 = vpop.xlane.xlu0 %42
  %v44 = vrcp.pop 32.0
  %v45 = vmul.f32 %v34, %v44
  %v46 = vmul.f32 %v37, %v44
  %v47 = vmul.f32 %v40, %v44
  %v48 = vmul.f32 %v43, %v44
  %v49 = vsub.f32 %v27, %v45
  %v50 = vsub.f32 %v28, %v46
  %v51 = vsub.f32 %v29, %v47
  %v52 = vsub.f32 %v30, %v48
  %v53 = vmul.f32 %v49, %v49
  %v54 = vmul.f32 %v50, %v50
  %v55 = vmul.f32 %v51, %v51
  %v56 = vmul.f32 %v52, %v52
  %v57 = vsel %vm31, %v53, 0.0
  %58 = vadd.xlane.f32.xlu0 %v57
  %v59 = vpop.xlane.xlu0 %58
  %v60 = vsel %vm31, %v54, 0.0
  %61 = vadd.xlane.f32.xlu0 %v60
  %v62 = vpop.xlane.xlu0 %61
  %v63 = vsel %vm31, %v55, 0.0
  %64 = vadd.xlane.f32.xlu0 %v63
  %v65 = vpop.xlane.xlu0 %64
  %v66 = vsel %vm31, %v56, 0.0
  %67 = vadd.xlane.f32.xlu0 %v66
  %v68 = vpop.xlane.xlu0 %67
  %v69 = vmul.f32 %v59, %v44
  %v70 = vmul.f32 %v62, %v44
  %v71 = vmul.f32 %v65, %v44
  %v72 = vmul.f32 %v68, %v44
  %v73 = vadd.f32 %v69, 1e-05
  %v74 = vadd.f32 %v70, 1e-05
  %v75 = vadd.f32 %v71, 1e-05
  %v76 = vadd.f32 %v72, 1e-05
  %v77 = vrsqrt.pop %v73
  %v78 = vrsqrt.pop %v74
  %v79 = vrsqrt.pop %v75
  %v80 = vrsqrt.pop %v76
  %v81 = vmul.f32 %v49, %v77
  %v82 = vmul.f32 %v50, %v78
  %v83 = vmul.f32 %v51, %v79
  %v84 = vmul.f32 %v52, %v80
  %v85 = vld [vmem:[%s1] sm:$0x1]
  %v87 = vlaneseq
  %v88 = vshrl.u32 %v87, 7
  %v89 = vsub.s32 0, %v88
  %v90 = vrot.slane %v85, %v89
  %v92 = vmul.f32 %v81, %v90
  %v93 = vmul.f32 %v82, %v90
  %v94 = vmul.f32 %v83, %v90
  %v95 = vmul.f32 %v84, %v90
  %v96 = vld [vmem:[%s2] sm:$0x1]
  %v98 = vlaneseq
  %v99 = vshrl.u32 %v98, 7
  %v100 = vsub.s32 0, %v99
  %v101 = vrot.slane %v96, %v100
  %v103 = vadd.f32 %v92, %v101
  %v104 = vadd.f32 %v93, %v101
  %v105 = vadd.f32 %v94, %v101
  %v106 = vadd.f32 %v95, %v101
  %v107 = vpack.c.bf16 %v104, %v103
  %v108 = vpack.c.bf16 %v106, %v105
  %v109 = vld [vmem:[%s3] sm:$0xff]
  %v110 = vld [vmem:[%s3 + $0x8] sm:$0xff]
  %v111 = vld [vmem:[%s3 + $0x10] sm:$0xff]
  %v112 = vld [vmem:[%s3 + $0x18] sm:$0xff]
  %v113 = vpack.c.bf16 %v110, %v109
  %v114 = vpack.c.bf16 %v112, %v111
  %v115 = vld [vmem:[%s4] sm:$0x1]
  %v117 = vlaneseq
  %v118 = vshrl.u32 %v117, 7
  %v119 = vsub.s32 0, %v118
  %v120 = vrot.slane %v115, %v119
  %v123 = vsel %vm31, %v107, 0
  %v126 = vsel %vm31, %v108, 0
  %128 = vmatprep.subr.bf16.mxu0 0
  %129 = vmatpush1.bf16.msra.mxu0 %v113
  %130 = vmatprep.subr.bf16.mxu0 0
  %131 = vmatpush1.bf16.msra.mxu0 %v114
  %132 = vmatprep.subr.bf16.mxu0 0
  %133 = vmatpush1.bf16.msra.mxu0 0
  %134 = vmatprep.subr.bf16.mxu0 0
  %135 = vmatpush1.bf16.msra.mxu0 0
  %136 = vmatprep.subr.bf16.mxu0 0
  %137 = vmatpush1.bf16.msra.mxu0 0
  %138 = vmatprep.subr.bf16.mxu0 0
  %139 = vmatpush1.bf16.msra.mxu0 0
  %140 = vmatprep.subr.bf16.mxu0 0
  %141 = vmatpush1.bf16.msra.mxu0 0
  %142 = vmatprep.subr.bf16.mxu0 0
  %143 = vmatpush1.bf16.msra.mxu0 0
  %144 = vmatprep.subr.bf16.mxu0 0
  %145 = vmatpush1.bf16.msra.mxu0 0
  %146 = vmatprep.subr.bf16.mxu0 0
  %147 = vmatpush1.bf16.msra.mxu0 0
  %148 = vmatprep.subr.bf16.mxu0 0
  %149 = vmatpush1.bf16.msra.mxu0 0
  %150 = vmatprep.subr.bf16.mxu0 0
  %151 = vmatpush1.bf16.msra.mxu0 0
  %152 = vmatprep.subr.bf16.mxu0 0
  %153 = vmatpush1.bf16.msra.mxu0 0
  %154 = vmatprep.subr.bf16.mxu0 0
  %155 = vmatpush1.bf16.msra.mxu0 0
  %156 = vmatprep.subr.bf16.mxu0 0
  %157 = vmatpush1.bf16.msra.mxu0 0
  %158 = vmatprep.subr.bf16.mxu0 0
  %159 = vmatpush1.bf16.msra.mxu0 0
  %160 = vmatprep.mubr.bf16.mxu0 0
  %161 = vmatmul.mubr.bf16.gmra.mrb[0].mxu0 %v123
  %v162 = vpop.f32.mrb[0].mxu0
  %v163 = vadd.f32 %v120, %v162
  %v164 = vpop.f32.mrb[0].mxu0
  %v165 = vpop.f32.mrb[0].mxu0
  %v166 = vadd.f32 %v120, %v165
  %v167 = vpop.f32.mrb[0].mxu0
  %168 = vmatprep.mubr.bf16.mxu0 0
  %169 = vmatmul.mubr.bf16.gmra.mrb[0].mxu0 %v126
  %v170 = vpop.f32.mrb[0].mxu0
  %v171 = vadd.f32 %v120, %v170
  %v172 = vpop.f32.mrb[0].mxu0
  %v173 = vpop.f32.mrb[0].mxu0
  %v174 = vadd.f32 %v120, %v173
  %v175 = vpop.f32.mrb[0].mxu0
  %176 = vdwg.mxu0
  %v177 = vmul.f32 %v163, %v163
  %v178 = vmul.f32 %v166, %v166
  %v179 = vmul.f32 %v171, %v171
  %v180 = vmul.f32 %v174, %v174
  %v181 = vmul.f32 %v163, %v177
  %v182 = vmul.f32 %v166, %v178
  %v183 = vmul.f32 %v171, %v179
  %v184 = vmul.f32 %v174, %v180
  %v185 = vmul.f32 %v181, 0.044715
  %v186 = vmul.f32 %v182, 0.044715
  %v187 = vmul.f32 %v183, 0.044715
  %v188 = vmul.f32 %v184, 0.044715
  %v189 = vadd.f32 %v163, %v185
  %v190 = vadd.f32 %v166, %v186
  %v191 = vadd.f32 %v171, %v187
  %v192 = vadd.f32 %v174, %v188
  %v193 = vmul.f32 %v189, 0.7978846
  %v194 = vmul.f32 %v190, 0.7978846
  %v195 = vmul.f32 %v191, 0.7978846
  %v196 = vmul.f32 %v192, 0.7978846
  %v197 = vtanh.pop %v193
  %v198 = vtanh.pop %v194
  %v199 = vtanh.pop %v195
  %v200 = vtanh.pop %v196
  %v201 = vadd.f32 %v197, 1.0
  %v202 = vadd.f32 %v198, 1.0
  %v203 = vadd.f32 %v199, 1.0
  %v204 = vadd.f32 %v200, 1.0
  %v205 = vmul.f32 %v201, 0.5
  %v206 = vmul.f32 %v202, 0.5
  %v207 = vmul.f32 %v203, 0.5
  %v208 = vmul.f32 %v204, 0.5
  %v209 = vmul.f32 %v163, %v205
  %v210 = vmul.f32 %v166, %v206
  %v211 = vmul.f32 %v171, %v207
  %v212 = vmul.f32 %v174, %v208
  %v213 = vpack.c.bf16 %v210, %v209
  %v214 = vpack.c.bf16 %v212, %v211
  %v215 = vld [vmem:[%s5] sm:$0xff]
  %v216 = vld [vmem:[%s5 + $0x8] sm:$0xff]
  %v217 = vld [vmem:[%s5 + $0x10] sm:$0xff]
  %v218 = vld [vmem:[%s5 + $0x18] sm:$0xff]
  %v219 = vld [vmem:[%s5 + $0x20] sm:$0xff]
  %v220 = vld [vmem:[%s5 + $0x28] sm:$0xff]
  %v221 = vld [vmem:[%s5 + $0x30] sm:$0xff]
  %v222 = vld [vmem:[%s5 + $0x38] sm:$0xff]
  %v223 = vld [vmem:[%s5 + $0x40] sm:$0xff]
  %v224 = vld [vmem:[%s5 + $0x48] sm:$0xff]
  %v225 = vld [vmem:[%s5 + $0x50] sm:$0xff]
  %v226 = vld [vmem:[%s5 + $0x58] sm:$0xff]
  %v227 = vld [vmem:[%s5 + $0x60] sm:$0xff]
  %v228 = vld [vmem:[%s5 + $0x68] sm:$0xff]
  %v229 = vld [vmem:[%s5 + $0x70] sm:$0xff]
  %v230 = vld [vmem:[%s5 + $0x78] sm:$0xff]
  %v231 = vpack.c.bf16 %v216, %v215
  %v232 = vpack.c.bf16 %v218, %v217
  %v233 = vpack.c.bf16 %v220, %v219
  %v234 = vpack.c.bf16 %v222, %v221
  %v235 = vpack.c.bf16 %v224, %v223
  %v236 = vpack.c.bf16 %v226, %v225
  %v237 = vpack.c.bf16 %v228, %v227
  %v238 = vpack.c.bf16 %v230, %v229
  %v239 = vld [vmem:[%s6] sm:$0x1]
  %v241 = vlaneseq
  %v242 = vshrl.u32 %v241, 7
  %v243 = vsub.s32 0, %v242
  %v244 = vrot.slane %v239, %v243
  %246 = vmatprep.subr.bf16.mxu0 0
  %247 = vmatpush1.bf16.msra.mxu0 %v231
  %248 = vmatprep.subr.bf16.mxu0 0
  %249 = vmatpush1.bf16.msra.mxu0 %v232
  %250 = vmatprep.subr.bf16.mxu0 0
  %251 = vmatpush1.bf16.msra.mxu0 %v233
  %252 = vmatprep.subr.bf16.mxu0 0
  %253 = vmatpush1.bf16.msra.mxu0 %v234
  %254 = vmatprep.subr.bf16.mxu0 0
  %255 = vmatpush1.bf16.msra.mxu0 %v235
  %256 = vmatprep.subr.bf16.mxu0 0
  %257 = vmatpush1.bf16.msra.mxu0 %v236
  %258 = vmatprep.subr.bf16.mxu0 0
  %259 = vmatpush1.bf16.msra.mxu0 %v237
  %260 = vmatprep.subr.bf16.mxu0 0
  %261 = vmatpush1.bf16.msra.mxu0 %v238
  %262 = vmatprep.subr.bf16.mxu0 0
  %263 = vmatpush1.bf16.msra.mxu0 0
  %264 = vmatprep.subr.bf16.mxu0 0
  %265 = vmatpush1.bf16.msra.mxu0 0
  %266 = vmatprep.subr.bf16.mxu0 0
  %267 = vmatpush1.bf16.msra.mxu0 0
  %268 = vmatprep.subr.bf16.mxu0 0
  %269 = vmatpush1.bf16.msra.mxu0 0
  %270 = vmatprep.subr.bf16.mxu0 0
  %271 = vmatpush1.bf16.msra.mxu0 0
  %272 = vmatprep.subr.bf16.mxu0 0
  %273 = vmatpush1.bf16.msra.mxu0 0
  %274 = vmatprep.subr.bf16.mxu0 0
  %275 = vmatpush1.bf16.msra.mxu0 0
  %276 = vmatprep.subr.bf16.mxu0 0
  %277 = vmatpush1.bf16.msra.mxu0 0
  %278 = vmatprep.mubr.bf16.mxu0 0
  %279 = vmatmul.mubr.bf16.gmra.mrb[0].mxu0 %v213
  %v280 = vpop.f32.mrb[0].mxu0
  %v281 = vadd.f32 %v244, %v280
  %v282 = vpop.f32.mrb[0].mxu0
  %v283 = vpop.f32.mrb[0].mxu0
  %v284 = vadd.f32 %v244, %v283
  %v285 = vpop.f32.mrb[0].mxu0
  %286 = vmatprep.mubr.bf16.mxu0 0
  %287 = vmatmul.mubr.bf16.gmra.mrb[0].mxu0 %v214
  %v288 = vpop.f32.mrb[0].mxu0
  %v289 = vadd.f32 %v244, %v288
  %v290 = vpop.f32.mrb[0].mxu0
  %v291 = vpop.f32.mrb[0].mxu0
  %v292 = vadd.f32 %v244, %v291
  %v293 = vpop.f32.mrb[0].mxu0
  %294 = vdwg.mxu0
  %v295 = vadd.f32 %v27, %v281
  %v296 = vadd.f32 %v28, %v284
  %v297 = vadd.f32 %v29, %v289
  %v298 = vadd.f32 %v30, %v292
  %299 = vst.msk [vmem:[%s7] sm:$0xff] %vm31, %v295
  %300 = vst.msk [vmem:[%s7 + $0x8] sm:$0xff] %vm31, %v296
  %301 = vst.msk [vmem:[%s7 + $0x10] sm:$0xff] %vm31, %v297
  %302 = vst.msk [vmem:[%s7 + $0x18] sm:$0xff] %vm31, %v298
  // Predicated region
  $region30: #{swin_reid_forward.9} parent=0 // pred_check
    _
  $region31: #{swin_reid_forward.9} parent=0 // pred_check_branch
    %304 = sbr.rel (0) target = $region33
  $region32: #{swin_reid_forward.9} parent=0 // pred_region
    _
  $region33: #{swin_reid_forward.9} parent=0 // pred_fallthru
    _
  // Predicated region
  $region34: #{swin_reid_forward.9} parent=0 // pred_check
    _
  $region35: #{swin_reid_forward.9} parent=0 // pred_check_branch
    %306 = sbr.rel (0) target = $region37
  $region36: #{swin_reid_forward.9} parent=0 // pred_region
    _
  $region37: #{swin_reid_forward.9} parent=0 // pred_fallthru
    _

// kernel: swin_reid_forward.8
$region0: #{swin_reid_forward.8}
  #allocation0 [shape = 'u32[]', space=smem, size = 0x4, offset = 0x4, fixed_abs, tag = 'smem constant byte address 0x4 - core index']
  #allocation1 [shape = 'u32[144,128]{1,0:T(1,128)}', space=vmem, size = 0x12000, scoped, tag = 'internal scratch']
  %s0 = inlined_call_operand.vmem [shape: f32[2,16,96], index: 0, kind: input, shape index: {}]
  %s1 = inlined_call_operand.vmem [shape: f32[2,16,32], index: 1, kind: input, shape index: {}]
  %s2 = inlined_call_operand.vmem [shape: f32[4,16,16], index: 2, kind: input, shape index: {}]
  %s3 = inlined_call_operand.vmem [shape: f32[32,32], index: 3, kind: input, shape index: {}]
  %s4 = inlined_call_operand.vmem [shape: f32[1,32], index: 4, kind: input, shape index: {}]
  %s5 = inlined_call_operand.vmem [shape: f32[2,16,32], index: 5, kind: output, shape index: {}]
  %s6 = sld [smem:[#allocation0]]
  $region30: #{swin_reid_forward.8} parent=0
    _
  %s8 = ssub.s32 1, %s6
  %s9 = scalar_select 0, %s8, %s6
  // Predicated region
  $region2: #{swin_reid_forward.8} parent=0 // pred_check
    _
  $region3: #{swin_reid_forward.8} parent=0 // pred_check_branch
    %11 = sbr.rel (0) target = $region5
  $region4: #{swin_reid_forward.8} parent=0 // pred_region
    _
  $region5: #{swin_reid_forward.8} parent=0 // pred_fallthru
    _
  // Predicated region
  $region6: #{swin_reid_forward.8} parent=0 // pred_check
    _
  $region7: #{swin_reid_forward.8} parent=0 // pred_check_branch
    %13 = sbr.rel (0) target = $region9
  $region8: #{swin_reid_forward.8} parent=0 // pred_region
    _
  $region9: #{swin_reid_forward.8} parent=0 // pred_fallthru
    _
  // Predicated region
  $region10: #{swin_reid_forward.8} parent=0 // pred_check
    _
  $region11: #{swin_reid_forward.8} parent=0 // pred_check_branch
    %15 = sbr.rel (0) target = $region13
  $region12: #{swin_reid_forward.8} parent=0 // pred_region
    _
  $region13: #{swin_reid_forward.8} parent=0 // pred_fallthru
    _
  // Predicated region
  $region14: #{swin_reid_forward.8} parent=0 // pred_check
    _
  $region15: #{swin_reid_forward.8} parent=0 // pred_check_branch
    %17 = sbr.rel (0) target = $region17
  $region16: #{swin_reid_forward.8} parent=0 // pred_region
    _
  $region17: #{swin_reid_forward.8} parent=0 // pred_fallthru
    _
  // Predicated region
  $region18: #{swin_reid_forward.8} parent=0 // pred_check
    _
  $region19: #{swin_reid_forward.8} parent=0 // pred_check_branch
    %19 = sbr.rel (0) target = $region21
  $region20: #{swin_reid_forward.8} parent=0 // pred_region
    _
  $region21: #{swin_reid_forward.8} parent=0 // pred_fallthru
    _
  %v21 = vld [vmem:[%s0] sm:$0xff]
  %v22 = vld [vmem:[%s0 + $0x8] sm:$0xff]
  %v23 = vld [vmem:[%s0 + $0x10] sm:$0xff]
  %v24 = vld [vmem:[%s0 + $0x18] sm:$0xff]
  %v25 = vld [vmem:[%s2] sm:$0xff]
  %v26 = vld [vmem:[%s2 + $0x8] sm:$0xff]
  %v27 = vld [vmem:[%s2 + $0x10] sm:$0xff]
  %v28 = vld [vmem:[%s2 + $0x18] sm:$0xff]
  %v29 = vld [vmem:[%s2 + $0x20] sm:$0xff]
  %v30 = vld [vmem:[%s2 + $0x28] sm:$0xff]
  %v31 = vld [vmem:[%s2 + $0x30] sm:$0xff]
  %v32 = vld [vmem:[%s2 + $0x38] sm:$0xff]
  %v33 = vld [vmem:[%s3] sm:$0xff]
  %v34 = vld [vmem:[%s3 + $0x8] sm:$0xff]
  %v35 = vld [vmem:[%s3 + $0x10] sm:$0xff]
  %v36 = vld [vmem:[%s3 + $0x18] sm:$0xff]
  %v37 = vpack.c.bf16 %v34, %v33
  %v38 = vpack.c.bf16 %v36, %v35
  %v39 = vmul.f32 %v21, 0.35355338
  %v40 = vmul.f32 %v22, 0.35355338
  %v41 = vmul.f32 %v23, 0.35355338
  %v42 = vmul.f32 %v24, 0.35355338
  %45 = vrot.lane.b32.xlu0 %v21, 96
  %v46 = vpop.permute.xlu0 %45
  %47 = vrot.lane.b32.xlu0 %v22, 96
  %v48 = vpop.permute.xlu0 %47
  %vm49 = vcmask 64512
  %v51 = vsel %vm49, %v39, 0
  %v54 = vsel %vm49, %v40, 0
  %v56 = vsel %vm49, %v46, 0
  %v58 = vsel %vm49, %v48, 0
  %60 = vmatprep.subr.mxu0 0.0
  %61 = vmatpush1.xpose.msra.mxu0 %v56
  %62 = vmatprep.subr.mxu0 0.0
  %63 = vmatpush1.xpose.msra.mxu0 %v58
  %64 = vmatprep.subr.mxu0 0.0
  %65 = vmatpush1.xpose.msra.mxu0 0.0
  %66 = vmatprep.subr.mxu0 0.0
  %67 = vmatpush1.xpose.msra.mxu0 0.0
  %68 = vmatprep.subr.mxu0 0.0
  %69 = vmatpush1.xpose.msra.mxu0 0.0
  %70 = vmatprep.subr.mxu0 0.0
  %71 = vmatpush1.xpose.msra.mxu0 0.0
  %72 = vmatprep.subr.mxu0 0.0
  %73 = vmatpush1.xpose.msra.mxu0 0.0
  %74 = vmatprep.subr.mxu0 0.0
  %75 = vmatpush1.xpose.msra.mxu0 0.0
  %76 = vmatprep.subr.mxu0 0.0
  %77 = vmatpush1.xpose.msra.mxu0 0.0
  %78 = vmatprep.subr.mxu0 0.0
  %79 = vmatpush1.xpose.msra.mxu0 0.0
  %80 = vmatprep.subr.mxu0 0.0
  %81 = vmatpush1.xpose.msra.mxu0 0.0
  %82 = vmatprep.subr.mxu0 0.0
  %83 = vmatpush1.xpose.msra.mxu0 0.0
  %84 = vmatprep.subr.mxu0 0.0
  %85 = vmatpush1.xpose.msra.mxu0 0.0
  %86 = vmatprep.subr.mxu0 0.0
  %87 = vmatpush1.xpose.msra.mxu0 0.0
  %88 = vmatprep.subr.mxu0 0.0
  %89 = vmatpush1.xpose.msra.mxu0 0.0
  %90 = vmatprep.subr.mxu0 0.0
  %91 = vmatpush1.xpose.msra.mxu0 0.0
  %92 = vmatprep.subr.mxu0 0.0
  %93 = vmatpush1.xpose.msra.mxu0 0.0
  %94 = vmatprep.subr.mxu0 0.0
  %95 = vmatpush1.xpose.msra.mxu0 0.0
  %96 = vmatprep.subr.mxu0 0.0
  %97 = vmatpush1.xpose.msra.mxu0 0.0
  %98 = vmatprep.subr.mxu0 0.0
  %99 = vmatpush1.xpose.msra.mxu0 0.0
  %100 = vmatprep.subr.mxu0 0.0
  %101 = vmatpush1.xpose.msra.mxu0 0.0
  %102 = vmatprep.subr.mxu0 0.0
  %103 = vmatpush1.xpose.msra.mxu0 0.0
  %104 = vmatprep.subr.mxu0 0.0
  %105 = vmatpush1.xpose.msra.mxu0 0.0
  %106 = vmatprep.subr.mxu0 0.0
  %107 = vmatpush1.xpose.msra.mxu0 0.0
  %108 = vmatprep.subr.mxu0 0.0
  %109 = vmatpush1.xpose.msra.mxu0 0.0
  %110 = vmatprep.subr.mxu0 0.0
  %111 = vmatpush1.xpose.msra.mxu0 0.0
  %112 = vmatprep.subr.mxu0 0.0
  %113 = vmatpush1.xpose.msra.mxu0 0.0
  %114 = vmatprep.subr.mxu0 0.0
  %115 = vmatpush1.xpose.msra.mxu0 0.0
  %116 = vmatprep.subr.mxu0 0.0
  %117 = vmatpush1.xpose.msra.mxu0 0.0
  %118 = vmatprep.subr.mxu0 0.0
  %119 = vmatpush1.xpose.msra.mxu0 0.0
  %120 = vmatprep.subr.mxu0 0.0
  %121 = vmatpush1.xpose.msra.mxu0 0.0
  %122 = vmatprep.subr.mxu0 0.0
  %123 = vmatpush1.xpose.msra.mxu0 0.0
  %124 = vmatprep.mubr.f32.mxu0 0.0
  %125 = vmatmul.mubr.f32.gmra.mrb[0].mxu0 %v51
  %v126 = vpop.f32.mrb[0].mxu0
  %v127 = vadd.f32 %v25, %v126
  %v128 = vpop.f32.mrb[0].mxu0
  %129 = vmatprep.mubr.f32.mxu0 0.0
  %130 = vmatmul.mubr.f32.gmra.mrb[0].mxu0 %v54
  %v131 = vpop.f32.mrb[0].mxu0
  %v132 = vadd.f32 %v26, %v131
  %v133 = vpop.f32.mrb[0].mxu0
  %134 = vdwg.mxu0
  %137 = vrot.lane.b32.xlu0 %v23, 96
  %v138 = vpop.permute.xlu0 %137
  %139 = vrot.lane.b32.xlu0 %v24, 96
  %v140 = vpop.permute.xlu0 %139
  %v142 = vsel %vm49, %v41, 0
  %v145 = vsel %vm49, %v42, 0
  %v147 = vsel %vm49, %v138, 0
  %v149 = vsel %vm49, %v140, 0
  %151 = vmatprep.subr.mxu0 0.0
  %152 = vmatpush1.xpose.msra.mxu0 %v147
  %153 = vmatprep.subr.mxu0 0.0
  %154 = vmatpush1.xpose.msra.mxu0 %v149
  %155 = vmatprep.subr.mxu0 0.0
  %156 = vmatpush1.xpose.msra.mxu0 0.0
  %157 = vmatprep.subr.mxu0 0.0
  %158 = vmatpush1.xpose.msra.mxu0 0.0
  %159 = vmatprep.subr.mxu0 0.0
  %160 = vmatpush1.xpose.msra.mxu0 0.0
  %161 = vmatprep.subr.mxu0 0.0
  %162 = vmatpush1.xpose.msra.mxu0 0.0
  %163 = vmatprep.subr.mxu0 0.0
  %164 = vmatpush1.xpose.msra.mxu0 0.0
  %165 = vmatprep.subr.mxu0 0.0
  %166 = vmatpush1.xpose.msra.mxu0 0.0
  %167 = vmatprep.subr.mxu0 0.0
  %168 = vmatpush1.xpose.msra.mxu0 0.0
  %169 = vmatprep.subr.mxu0 0.0
  %170 = vmatpush1.xpose.msra.mxu0 0.0
  %171 = vmatprep.subr.mxu0 0.0
  %172 = vmatpush1.xpose.msra.mxu0 0.0
  %173 = vmatprep.subr.mxu0 0.0
  %174 = vmatpush1.xpose.msra.mxu0 0.0
  %175 = vmatprep.subr.mxu0 0.0
  %176 = vmatpush1.xpose.msra.mxu0 0.0
  %177 = vmatprep.subr.mxu0 0.0
  %178 = vmatpush1.xpose.msra.mxu0 0.0
  %179 = vmatprep.subr.mxu0 0.0
  %180 = vmatpush1.xpose.msra.mxu0 0.0
  %181 = vmatprep.subr.mxu0 0.0
  %182 = vmatpush1.xpose.msra.mxu0 0.0
  %183 = vmatprep.subr.mxu0 0.0
  %184 = vmatpush1.xpose.msra.mxu0 0.0
  %185 = vmatprep.subr.mxu0 0.0
  %186 = vmatpush1.xpose.msra.mxu0 0.0
  %187 = vmatprep.subr.mxu0 0.0
  %188 = vmatpush1.xpose.msra.mxu0 0.0
  %189 = vmatprep.subr.mxu0 0.0
  %190 = vmatpush1.xpose.msra.mxu0 0.0
  %191 = vmatprep.subr.mxu0 0.0
  %192 = vmatpush1.xpose.msra.mxu0 0.0
  %193 = vmatprep.subr.mxu0 0.0
  %194 = vmatpush1.xpose.msra.mxu0 0.0
  %195 = vmatprep.subr.mxu0 0.0
  %196 = vmatpush1.xpose.msra.mxu0 0.0
  %197 = vmatprep.subr.mxu0 0.0
  %198 = vmatpush1.xpose.msra.mxu0 0.0
  %199 = vmatprep.subr.mxu0 0.0
  %200 = vmatpush1.xpose.msra.mxu0 0.0
  %201 = vmatprep.subr.mxu0 0.0
  %202 = vmatpush1.xpose.msra.mxu0 0.0
  %203 = vmatprep.subr.mxu0 0.0
  %204 = vmatpush1.xpose.msra.mxu0 0.0
  %205 = vmatprep.subr.mxu0 0.0
  %206 = vmatpush1.xpose.msra.mxu0 0.0
  %207 = vmatprep.subr.mxu0 0.0
  %208 = vmatpush1.xpose.msra.mxu0 0.0
  %209 = vmatprep.subr.mxu0 0.0
  %210 = vmatpush1.xpose.msra.mxu0 0.0
  %211 = vmatprep.subr.mxu0 0.0
  %212 = vmatpush1.xpose.msra.mxu0 0.0
  %213 = vmatprep.subr.mxu0 0.0
  %214 = vmatpush1.xpose.msra.mxu0 0.0
  %215 = vmatprep.mubr.f32.mxu0 0.0
  %216 = vmatmul.mubr.f32.gmra.mrb[0].mxu0 %v142
  %v217 = vpop.f32.mrb[0].mxu0
  %v218 = vadd.f32 %v25, %v217
  %v219 = vpop.f32.mrb[0].mxu0
  %220 = vmatprep.mubr.f32.mxu0 0.0
  %221 = vmatmul.mubr.f32.gmra.mrb[0].mxu0 %v145
  %v222 = vpop.f32.mrb[0].mxu0
  %v223 = vadd.f32 %v26, %v222
  %v224 = vpop.f32.mrb[0].mxu0
  %225 = vdwg.mxu0
  %vm226 = vcmask 130048
  %v227 = vsel %vm226, %v127, -inf
  %228 = vmax.xlane.f32.xlu0 %v227
  %v229 = vpop.xlane.xlu0 %228
  %v230 = vsel %vm226, %v132, -inf
  %231 = vmax.xlane.f32.xlu0 %v230
  %v232 = vpop.xlane.xlu0 %231
  %v233 = vsel %vm226, %v218, -inf
  %234 = vmax.xlane.f32.xlu0 %v233
  %v235 = vpop.xlane.xlu0 %234
  %v236 = vsel %vm226, %v223, -inf
  %237 = vmax.xlane.f32.xlu0 %v236
  %v238 = vpop.xlane.xlu0 %237
  %v239 = vsub.f32 %v127, %v229
  %v240 = vsub.f32 %v132, %v232
  %v241 = vsub.f32 %v218, %v235
  %v242 = vsub.f32 %v223, %v238
  %v243 = vmul.f32 %v239, 1.442695
  %v244 = vpow.pop %v243
  %v245 = vmul.f32 %v240, 1.442695
  %v246 = vpow.pop %v245
  %v247 = vmul.f32 %v241, 1.442695
  %v248 = vpow.pop %v247
  %v249 = vmul.f32 %v242, 1.442695
  %v250 = vpow.pop %v249
  %v251 = vsel %vm226, %v244, 0.0
  %252 = vadd.xlane.f32.xlu0 %v251
  %v253 = vpop.xlane.xlu0 %252
  %v254 = vsel %vm226, %v246, 0.0
  %255 = vadd.xlane.f32.xlu0 %v254
  %v256 = vpop.xlane.xlu0 %255
  %v257 = vsel %vm226, %v248, 0.0
  %258 = vadd.xlane.f32.xlu0 %v257
  %v259 = vpop.xlane.xlu0 %258
  %v260 = vsel %vm226, %v250, 0.0
  %261 = vadd.xlane.f32.xlu0 %v260
  %v262 = vpop.xlane.xlu0 %261
  %v263 = vrcp.pop %v253
  %v264 = vrcp.pop %v256
  %v265 = vrcp.pop %v259
  %v266 = vrcp.pop %v262
  %v267 = vmul.f32 %v244, %v263
  %v268 = vmul.f32 %v246, %v264
  %v269 = vmul.f32 %v248, %v265
  %v270 = vmul.f32 %v250, %v266
  %271 = vrot.lane.b32.xlu0 %v21, 64
  %v272 = vpop.permute.xlu0 %271
  %273 = vrot.lane.b32.xlu0 %v22, 64
  %v274 = vpop.permute.xlu0 %273
  %v278 = vsel %vm226, %v267, 0
  %v281 = vsel %vm226, %v268, 0
  %283 = vmatprep.subr.mxu0 0.0
  %284 = vmatpush1.msra.mxu0 %v272
  %285 = vmatprep.subr.mxu0 0.0
  %286 = vmatpush1.msra.mxu0 %v274
  %287 = vmatprep.subr.mxu0 0.0
  %288 = vmatpush1.msra.mxu0 0.0
  %289 = vmatprep.subr.mxu0 0.0
  %290 = vmatpush1.msra.mxu0 0.0
  %291 = vmatprep.subr.mxu0 0.0
  %292 = vmatpush1.msra.mxu0 0.0
  %293 = vmatprep.subr.mxu0 0.0
  %294 = vmatpush1.msra.mxu0 0.0
  %295 = vmatprep.subr.mxu0 0.0
  %296 = vmatpush1.msra.mxu0 0.0
  %297 = vmatprep.subr.mxu0 0.0
  %298 = vmatpush1.msra.mxu0 0.0
  %299 = vmatprep.subr.mxu0 0.0
  %300 = vmatpush1.msra.mxu0 0.0
  %301 = vmatprep.subr.mxu0 0.0
  %302 = vmatpush1.msra.mxu0 0.0
  %303 = vmatprep.subr.mxu0 0.0
  %304 = vmatpush1.msra.mxu0 0.0
  %305 = vmatprep.subr.mxu0 0.0
  %306 = vmatpush1.msra.mxu0 0.0
  %307 = vmatprep.subr.mxu0 0.0
  %308 = vmatpush1.msra.mxu0 0.0
  %309 = vmatprep.subr.mxu0 0.0
  %310 = vmatpush1.msra.mxu0 0.0
  %311 = vmatprep.subr.mxu0 0.0
  %312 = vmatpush1.msra.mxu0 0.0
  %313 = vmatprep.subr.mxu0 0.0
  %314 = vmatpush1.msra.mxu0 0.0
  %315 = vmatprep.subr.mxu0 0.0
  %316 = vmatpush1.msra.mxu0 0.0
  %317 = vmatprep.subr.mxu0 0.0
  %318 = vmatpush1.msra.mxu0 0.0
  %319 = vmatprep.subr.mxu0 0.0
  %320 = vmatpush1.msra.mxu0 0.0
  %321 = vmatprep.subr.mxu0 0.0
  %322 = vmatpush1.msra.mxu0 0.0
  %323 = vmatprep.subr.mxu0 0.0
  %324 = vmatpush1.msra.mxu0 0.0
  %325 = vmatprep.subr.mxu0 0.0
  %326 = vmatpush1.msra.mxu0 0.0
  %327 = vmatprep.subr.mxu0 0.0
  %328 = vmatpush1.msra.mxu0 0.0
  %329 = vmatprep.subr.mxu0 0.0
  %330 = vmatpush1.msra.mxu0 0.0
  %331 = vmatprep.subr.mxu0 0.0
  %332 = vmatpush1.msra.mxu0 0.0
  %333 = vmatprep.subr.mxu0 0.0
  %334 = vmatpush1.msra.mxu0 0.0
  %335 = vmatprep.subr.mxu0 0.0
  %336 = vmatpush1.msra.mxu0 0.0
  %337 = vmatprep.subr.mxu0 0.0
  %338 = vmatpush1.msra.mxu0 0.0
  %339 = vmatprep.subr.mxu0 0.0
  %340 = vmatpush1.msra.mxu0 0.0
  %341 = vmatprep.subr.mxu0 0.0
  %342 = vmatpush1.msra.mxu0 0.0
  %343 = vmatprep.subr.mxu0 0.0
  %344 = vmatpush1.msra.mxu0 0.0
  %345 = vmatprep.subr.mxu0 0.0
  %346 = vmatpush1.msra.mxu0 0.0
  %347 = vmatprep.mubr.f32.mxu0 0.0
  %348 = vmatmul.mubr.f32.gmra.mrb[0].mxu0 %v278
  %v349 = vpop.f32.mrb[0].mxu0
  %v350 = vadd.f32 0.0, %v349
  %v351 = vpop.f32.mrb[0].mxu0
  %352 = vmatprep.mubr.f32.mxu0 0.0
  %353 = vmatmul.mubr.f32.gmra.mrb[0].mxu0 %v281
  %v354 = vpop.f32.mrb[0].mxu0
  %v355 = vadd.f32 0.0, %v354
  %v356 = vpop.f32.mrb[0].mxu0
  %357 = vdwg.mxu0
  %358 = vrot.lane.b32.xlu0 %v23, 64
  %v359 = vpop.permute.xlu0 %358
  %360 = vrot.lane.b32.xlu0 %v24, 64
  %v361 = vpop.permute.xlu0 %360
  %v365 = vsel %vm226, %v269, 0
  %v368 = vsel %vm226, %v270, 0
  %370 = vmatprep.subr.mxu0 0.0
  %371 = vmatpush1.msra.mxu0 %v359
  %372 = vmatprep.subr.mxu0 0.0
  %373 = vmatpush1.msra.mxu0 %v361
  %374 = vmatprep.subr.mxu0 0.0
  %375 = vmatpush1.msra.mxu0 0.0
  %376 = vmatprep.subr.mxu0 0.0
  %377 = vmatpush1.msra.mxu0 0.0
  %378 = vmatprep.subr.mxu0 0.0
  %379 = vmatpush1.msra.mxu0 0.0
  %380 = vmatprep.subr.mxu0 0.0
  %381 = vmatpush1.msra.mxu0 0.0
  %382 = vmatprep.subr.mxu0 0.0
  %383 = vmatpush1.msra.mxu0 0.0
  %384 = vmatprep.subr.mxu0 0.0
  %385 = vmatpush1.msra.mxu0 0.0
  %386 = vmatprep.subr.mxu0 0.0
  %387 = vmatpush1.msra.mxu0 0.0
  %388 = vmatprep.subr.mxu0 0.0
  %389 = vmatpush1.msra.mxu0 0.0
  %390 = vmatprep.subr.mxu0 0.0
  %391 = vmatpush1.msra.mxu0 0.0
  %392 = vmatprep.subr.mxu0 0.0
  %393 = vmatpush1.msra.mxu0 0.0
  %394 = vmatprep.subr.mxu0 0.0
  %395 = vmatpush1.msra.mxu0 0.0
  %396 = vmatprep.subr.mxu0 0.0
  %397 = vmatpush1.msra.mxu0 0.0
  %398 = vmatprep.subr.mxu0 0.0
  %399 = vmatpush1.msra.mxu0 0.0
  %400 = vmatprep.subr.mxu0 0.0
  %401 = vmatpush1.msra.mxu0 0.0
  %402 = vmatprep.subr.mxu0 0.0
  %403 = vmatpush1.msra.mxu0 0.0
  %404 = vmatprep.subr.mxu0 0.0
  %405 = vmatpush1.msra.mxu0 0.0
  %406 = vmatprep.subr.mxu0 0.0
  %407 = vmatpush1.msra.mxu0 0.0
  %408 = vmatprep.subr.mxu0 0.0
  %409 = vmatpush1.msra.mxu0 0.0
  %410 = vmatprep.subr.mxu0 0.0
  %411 = vmatpush1.msra.mxu0 0.0
  %412 = vmatprep.subr.mxu0 0.0
  %413 = vmatpush1.msra.mxu0 0.0
  %414 = vmatprep.subr.mxu0 0.0
  %415 = vmatpush1.msra.mxu0 0.0
  %416 = vmatprep.subr.mxu0 0.0
  %417 = vmatpush1.msra.mxu0 0.0
  %418 = vmatprep.subr.mxu0 0.0
  %419 = vmatpush1.msra.mxu0 0.0
  %420 = vmatprep.subr.mxu0 0.0
  %421 = vmatpush1.msra.mxu0 0.0
  %422 = vmatprep.subr.mxu0 0.0
  %423 = vmatpush1.msra.mxu0 0.0
  %424 = vmatprep.subr.mxu0 0.0
  %425 = vmatpush1.msra.mxu0 0.0
  %426 = vmatprep.subr.mxu0 0.0
  %427 = vmatpush1.msra.mxu0 0.0
  %428 = vmatprep.subr.mxu0 0.0
  %429 = vmatpush1.msra.mxu0 0.0
  %430 = vmatprep.subr.mxu0 0.0
  %431 = vmatpush1.msra.mxu0 0.0
  %432 = vmatprep.subr.mxu0 0.0
  %433 = vmatpush1.msra.mxu0 0.0
  %434 = vmatprep.mubr.f32.mxu0 0.0
  %435 = vmatmul.mubr.f32.gmra.mrb[0].mxu0 %v365
  %v436 = vpop.f32.mrb[0].mxu0
  %v437 = vadd.f32 0.0, %v436
  %v438 = vpop.f32.mrb[0].mxu0
  %439 = vmatprep.mubr.f32.mxu0 0.0
  %440 = vmatmul.mubr.f32.gmra.mrb[0].mxu0 %v368
  %v441 = vpop.f32.mrb[0].mxu0
  %v442 = vadd.f32 0.0, %v441
  %v443 = vpop.f32.mrb[0].mxu0
  %444 = vdwg.mxu0
  %v445 = vpack.c.bf16 %v355, %v350
  %v446 = vpack.c.bf16 %v442, %v437
  %447 = vrot.lane.b32.xlu0 %v39, 120
  %v448 = vpop.permute.xlu0 %447
  %449 = vrot.lane.b32.xlu0 %v40, 120
  %v450 = vpop.permute.xlu0 %449
  %451 = vrot.lane.b32.xlu0 %v21, 88
  %v452 = vpop.permute.xlu0 %451
  %453 = vrot.lane.b32.xlu0 %v22, 88
  %v454 = vpop.permute.xlu0 %453
  %v455 = vsel %vm49, %v448, 0
  %v457 = vsel %vm49, %v450, 0
  %v459 = vsel %vm49, %v452, 0
  %v461 = vsel %vm49, %v454, 0
  %463 = vmatprep.subr.mxu0 0.0
  %464 = vmatpush1.xpose.msra.mxu0 %v459
  %465 = vmatprep.subr.mxu0 0.0
  %466 = vmatpush1.xpose.msra.mxu0 %v461
  %467 = vmatprep.subr.mxu0 0.0
  %468 = vmatpush1.xpose.msra.mxu0 0.0
  %469 = vmatprep.subr.mxu0 0.0
  %470 = vmatpush1.xpose.msra.mxu0 0.0
  %471 = vmatprep.subr.mxu0 0.0
  %472 = vmatpush1.xpose.msra.mxu0 0.0
  %473 = vmatprep.subr.mxu0 0.0
  %474 = vmatpush1.xpose.msra.mxu0 0.0
  %475 = vmatprep.subr.mxu0 0.0
  %476 = vmatpush1.xpose.msra.mxu0 0.0
  %477 = vmatprep.subr.mxu0 0.0
  %478 = vmatpush1.xpose.msra.mxu0 0.0
  %479 = vmatprep.subr.mxu0 0.0
  %480 = vmatpush1.xpose.msra.mxu0 0.0
  %481 = vmatprep.subr.mxu0 0.0
  %482 = vmatpush1.xpose.msra.mxu0 0.0
  %483 = vmatprep.subr.mxu0 0.0
  %484 = vmatpush1.xpose.msra.mxu0 0.0
  %485 = vmatprep.subr.mxu0 0.0
  %486 = vmatpush1.xpose.msra.mxu0 0.0
  %487 = vmatprep.subr.mxu0 0.0
  %488 = vmatpush1.xpose.msra.mxu0 0.0
  %489 = vmatprep.subr.mxu0 0.0
  %490 = vmatpush1.xpose.msra.mxu0 0.0
  %491 = vmatprep.subr.mxu0 0.0
  %492 = vmatpush1.xpose.msra.mxu0 0.0
  %493 = vmatprep.subr.mxu0 0.0
  %494 = vmatpush1.xpose.msra.mxu0 0.0
  %495 = vmatprep.subr.mxu0 0.0
  %496 = vmatpush1.xpose.msra.mxu0 0.0
  %497 = vmatprep.subr.mxu0 0.0
  %498 = vmatpush1.xpose.msra.mxu0 0.0
  %499 = vmatprep.subr.mxu0 0.0
  %500 = vmatpush1.xpose.msra.mxu0 0.0
  %501 = vmatprep.subr.mxu0 0.0
  %502 = vmatpush1.xpose.msra.mxu0 0.0
  %503 = vmatprep.subr.mxu0 0.0
  %504 = vmatpush1.xpose.msra.mxu0 0.0
  %505 = vmatprep.subr.mxu0 0.0
  %506 = vmatpush1.xpose.msra.mxu0 0.0
  %507 = vmatprep.subr.mxu0 0.0
  %508 = vmatpush1.xpose.msra.mxu0 0.0
  %509 = vmatprep.subr.mxu0 0.0
  %510 = vmatpush1.xpose.msra.mxu0 0.0
  %511 = vmatprep.subr.mxu0 0.0
  %512 = vmatpush1.xpose.msra.mxu0 0.0
  %513 = vmatprep.subr.mxu0 0.0
  %514 = vmatpush1.xpose.msra.mxu0 0.0
  %515 = vmatprep.subr.mxu0 0.0
  %516 = vmatpush1.xpose.msra.mxu0 0.0
  %517 = vmatprep.subr.mxu0 0.0
  %518 = vmatpush1.xpose.msra.mxu0 0.0
  %519 = vmatprep.subr.mxu0 0.0
  %520 = vmatpush1.xpose.msra.mxu0 0.0
  %521 = vmatprep.subr.mxu0 0.0
  %522 = vmatpush1.xpose.msra.mxu0 0.0
  %523 = vmatprep.subr.mxu0 0.0
  %524 = vmatpush1.xpose.msra.mxu0 0.0
  %525 = vmatprep.subr.mxu0 0.0
  %526 = vmatpush1.xpose.msra.mxu0 0.0
  %527 = vmatprep.mubr.f32.mxu0 0.0
  %528 = vmatmul.mubr.f32.gmra.mrb[0].mxu0 %v455
  %v529 = vpop.f32.mrb[0].mxu0
  %v530 = vadd.f32 %v27, %v529
  %v531 = vpop.f32.mrb[0].mxu0
  %532 = vmatprep.mubr.f32.mxu0 0.0
  %533 = vmatmul.mubr.f32.gmra.mrb[0].mxu0 %v457
  %v534 = vpop.f32.mrb[0].mxu0
  %v535 = vadd.f32 %v28, %v534
  %v536 = vpop.f32.mrb[0].mxu0
  %537 = vdwg.mxu0
  %538 = vrot.lane.b32.xlu0 %v41, 120
  %v539 = vpop.permute.xlu0 %538
  %540 = vrot.lane.b32.xlu0 %v42, 120
  %v541 = vpop.permute.xlu0 %540
  %542 = vrot.lane.b32.xlu0 %v23, 88
  %v543 = vpop.permute.xlu0 %542
  %544 = vrot.lane.b32.xlu0 %v24, 88
  %v545 = vpop.permute.xlu0 %544
  %v546 = vsel %vm49, %v539, 0
  %v548 = vsel %vm49, %v541, 0
  %v550 = vsel %vm49, %v543, 0
  %v552 = vsel %vm49, %v545, 0
  %554 = vmatprep.subr.mxu0 0.0
  %555 = vmatpush1.xpose.msra.mxu0 %v550
  %556 = vmatprep.subr.mxu0 0.0
  %557 = vmatpush1.xpose.msra.mxu0 %v552
  %558 = vmatprep.subr.mxu0 0.0
  %559 = vmatpush1.xpose.msra.mxu0 0.0
  %560 = vmatprep.subr.mxu0 0.0
  %561 = vmatpush1.xpose.msra.mxu0 0.0
  %562 = vmatprep.subr.mxu0 0.0
  %563 = vmatpush1.xpose.msra.mxu0 0.0
  %564 = vmatprep.subr.mxu0 0.0
  %565 = vmatpush1.xpose.msra.mxu0 0.0
  %566 = vmatprep.subr.mxu0 0.0
  %567 = vmatpush1.xpose.msra.mxu0 0.0
  %568 = vmatprep.subr.mxu0 0.0
  %569 = vmatpush1.xpose.msra.mxu0 0.0
  %570 = vmatprep.subr.mxu0 0.0
  %571 = vmatpush1.xpose.msra.mxu0 0.0
  %572 = vmatprep.subr.mxu0 0.0
  %573 = vmatpush1.xpose.msra.mxu0 0.0
  %574 = vmatprep.subr.mxu0 0.0
  %575 = vmatpush1.xpose.msra.mxu0 0.0
  %576 = vmatprep.subr.mxu0 0.0
  %577 = vmatpush1.xpose.msra.mxu0 0.0
  %578 = vmatprep.subr.mxu0 0.0
  %579 = vmatpush1.xpose.msra.mxu0 0.0
  %580 = vmatprep.subr.mxu0 0.0
  %581 = vmatpush1.xpose.msra.mxu0 0.0
  %582 = vmatprep.subr.mxu0 0.0
  %583 = vmatpush1.xpose.msra.mxu0 0.0
  %584 = vmatprep.subr.mxu0 0.0
  %585 = vmatpush1.xpose.msra.mxu0 0.0
  %586 = vmatprep.subr.mxu0 0.0
  %587 = vmatpush1.xpose.msra.mxu0 0.0
  %588 = vmatprep.subr.mxu0 0.0
  %589 = vmatpush1.xpose.msra.mxu0 0.0
  %590 = vmatprep.subr.mxu0 0.0
  %591 = vmatpush1.xpose.msra.mxu0 0.0
  %592 = vmatprep.subr.mxu0 0.0
  %593 = vmatpush1.xpose.msra.mxu0 0.0
  %594 = vmatprep.subr.mxu0 0.0
  %595 = vmatpush1.xpose.msra.mxu0 0.0
  %596 = vmatprep.subr.mxu0 0.0
  %597 = vmatpush1.xpose.msra.mxu0 0.0
  %598 = vmatprep.subr.mxu0 0.0
  %599 = vmatpush1.xpose.msra.mxu0 0.0
  %600 = vmatprep.subr.mxu0 0.0
  %601 = vmatpush1.xpose.msra.mxu0 0.0
  %602 = vmatprep.subr.mxu0 0.0
  %603 = vmatpush1.xpose.msra.mxu0 0.0
  %604 = vmatprep.subr.mxu0 0.0
  %605 = vmatpush1.xpose.msra.mxu0 0.0
  %606 = vmatprep.subr.mxu0 0.0
  %607 = vmatpush1.xpose.msra.mxu0 0.0
  %608 = vmatprep.subr.mxu0 0.0
  %609 = vmatpush1.xpose.msra.mxu0 0.0
  %610 = vmatprep.subr.mxu0 0.0
  %611 = vmatpush1.xpose.msra.mxu0 0.0
  %612 = vmatprep.subr.mxu0 0.0
  %613 = vmatpush1.xpose.msra.mxu0 0.0
  %614 = vmatprep.subr.mxu0 0.0
  %615 = vmatpush1.xpose.msra.mxu0 0.0
  %616 = vmatprep.subr.mxu0 0.0
  %617 = vmatpush1.xpose.msra.mxu0 0.0
  %618 = vmatprep.mubr.f32.mxu0 0.0
  %619 = vmatmul.mubr.f32.gmra.mrb[0].mxu0 %v546
  %v620 = vpop.f32.mrb[0].mxu0
  %v621 = vadd.f32 %v27, %v620
  %v622 = vpop.f32.mrb[0].mxu0
  %623 = vmatprep.mubr.f32.mxu0 0.0
  %624 = vmatmul.mubr.f32.gmra.mrb[0].mxu0 %v548
  %v625 = vpop.f32.mrb[0].mxu0
  %v626 = vadd.f32 %v28, %v625
  %v627 = vpop.f32.mrb[0].mxu0
  %628 = vdwg.mxu0
  %v629 = vsel %vm226, %v530, -inf
  %630 = vmax.xlane.f32.xlu0 %v629
  %v631 = vpop.xlane.xlu0 %630
  %v632 = vsel %vm226, %v535, -inf
  %633 = vmax.xlane.f32.xlu0 %v632
  %v634 = vpop.xlane.xlu0 %633
  %v635 = vsel %vm226, %v621, -inf
  %636 = vmax.xlane.f32.xlu0 %v635
  %v637 = vpop.xlane.xlu0 %636
  %v638 = vsel %vm226, %v626, -inf
  %639 = vmax.xlane.f32.xlu0 %v638
  %v640 = vpop.xlane.xlu0 %639
  %v641 = vsub.f32 %v530, %v631
  %v642 = vsub.f32 %v535, %v634
  %v643 = vsub.f32 %v621, %v637
  %v644 = vsub.f32 %v626, %v640
  %v645 = vmul.f32 %v641, 1.442695
  %v646 = vpow.pop %v645
  %v647 = vmul.f32 %v642, 1.442695
  %v648 = vpow.pop %v647
  %v649 = vmul.f32 %v643, 1.442695
  %v650 = vpow.pop %v649
  %v651 = vmul.f32 %v644, 1.442695
  %v652 = vpow.pop %v651
  %v653 = vsel %vm226, %v646, 0.0
  %654 = vadd.xlane.f32.xlu0 %v653
  %v655 = vpop.xlane.xlu0 %654
  %v656 = vsel %vm226, %v648, 0.0
  %657 = vadd.xlane.f32.xlu0 %v656
  %v658 = vpop.xlane.xlu0 %657
  %v659 = vsel %vm226, %v650, 0.0
  %660 = vadd.xlane.f32.xlu0 %v659
  %v661 = vpop.xlane.xlu0 %660
  %v662 = vsel %vm226, %v652, 0.0
  %663 = vadd.xlane.f32.xlu0 %v662
  %v664 = vpop.xlane.xlu0 %663
  %v665 = vrcp.pop %v655
  %v666 = vrcp.pop %v658
  %v667 = vrcp.pop %v661
  %v668 = vrcp.pop %v664
  %v669 = vmul.f32 %v646, %v665
  %v670 = vmul.f32 %v648, %v666
  %v671 = vmul.f32 %v650, %v667
  %v672 = vmul.f32 %v652, %v668
  %673 = vrot.lane.b32.xlu0 %v21, 56
  %v674 = vpop.permute.xlu0 %673
  %675 = vrot.lane.b32.xlu0 %v22, 56
  %v676 = vpop.permute.xlu0 %675
  %v680 = vsel %vm226, %v669, 0
  %v683 = vsel %vm226, %v670, 0
  %685 = vmatprep.subr.mxu0 0.0
  %686 = vmatpush1.msra.mxu0 %v674
  %687 = vmatprep.subr.mxu0 0.0
  %688 = vmatpush1.msra.mxu0 %v676
  %689 = vmatprep.subr.mxu0 0.0
  %690 = vmatpush1.msra.mxu0 0.0
  %691 = vmatprep.subr.mxu0 0.0
  %692 = vmatpush1.msra.mxu0 0.0
  %693 = vmatprep.subr.mxu0 0.0
  %694 = vmatpush1.msra.mxu0 0.0
  %695 = vmatprep.subr.mxu0 0.0
  %696 = vmatpush1.msra.mxu0 0.0
  %697 = vmatprep.subr.mxu0 0.0
  %698 = vmatpush1.msra.mxu0 0.0
  %699 = vmatprep.subr.mxu0 0.0
  %700 = vmatpush1.msra.mxu0 0.0
  %701 = vmatprep.subr.mxu0 0.0
  %702 = vmatpush1.msra.mxu0 0.0
  %703 = vmatprep.subr.mxu0 0.0
  %704 = vmatpush1.msra.mxu0 0.0
  %705 = vmatprep.subr.mxu0 0.0
  %706 = vmatpush1.msra.mxu0 0.0
  %707 = vmatprep.subr.mxu0 0.0
  %708 = vmatpush1.msra.mxu0 0.0
  %709 = vmatprep.subr.mxu0 0.0
  %710 = vmatpush1.msra.mxu0 0.0
  %711 = vmatprep.subr.mxu0 0.0
  %712 = vmatpush1.msra.mxu0 0.0
  %713 = vmatprep.subr.mxu0 0.0
  %714 = vmatpush1.msra.mxu0 0.0
  %715 = vmatprep.subr.mxu0 0.0
  %716 = vmatpush1.msra.mxu0 0.0
  %717 = vmatprep.subr.mxu0 0.0
  %718 = vmatpush1.msra.mxu0 0.0
  %719 = vmatprep.subr.mxu0 0.0
  %720 = vmatpush1.msra.mxu0 0.0
  %721 = vmatprep.subr.mxu0 0.0
  %722 = vmatpush1.msra.mxu0 0.0
  %723 = vmatprep.subr.mxu0 0.0
  %724 = vmatpush1.msra.mxu0 0.0
  %725 = vmatprep.subr.mxu0 0.0
  %726 = vmatpush1.msra.mxu0 0.0
  %727 = vmatprep.subr.mxu0 0.0
  %728 = vmatpush1.msra.mxu0 0.0
  %729 = vmatprep.subr.mxu0 0.0
  %730 = vmatpush1.msra.mxu0 0.0
  %731 = vmatprep.subr.mxu0 0.0
  %732 = vmatpush1.msra.mxu0 0.0
  %733 = vmatprep.subr.mxu0 0.0
  %734 = vmatpush1.msra.mxu0 0.0
  %735 = vmatprep.subr.mxu0 0.0
  %736 = vmatpush1.msra.mxu0 0.0
  %737 = vmatprep.subr.mxu0 0.0
  %738 = vmatpush1.msra.mxu0 0.0
  %739 = vmatprep.subr.mxu0 0.0
  %740 = vmatpush1.msra.mxu0 0.0
  %741 = vmatprep.subr.mxu0 0.0
  %742 = vmatpush1.msra.mxu0 0.0
  %743 = vmatprep.subr.mxu0 0.0
  %744 = vmatpush1.msra.mxu0 0.0
  %745 = vmatprep.subr.mxu0 0.0
  %746 = vmatpush1.msra.mxu0 0.0
  %747 = vmatprep.subr.mxu0 0.0
  %748 = vmatpush1.msra.mxu0 0.0
  %749 = vmatprep.mubr.f32.mxu0 0.0
  %750 = vmatmul.mubr.f32.gmra.mrb[0].mxu0 %v680
  %v751 = vpop.f32.mrb[0].mxu0
  %v752 = vadd.f32 0.0, %v751
  %v753 = vpop.f32.mrb[0].mxu0
  %754 = vmatprep.mubr.f32.mxu0 0.0
  %755 = vmatmul.mubr.f32.gmra.mrb[0].mxu0 %v683
  %v756 = vpop.f32.mrb[0].mxu0
  %v757 = vadd.f32 0.0, %v756
  %v758 = vpop.f32.mrb[0].mxu0
  %759 = vdwg.mxu0
  %760 = vrot.lane.b32.xlu0 %v23, 56
  %v761 = vpop.permute.xlu0 %760
  %762 = vrot.lane.b32.xlu0 %v24, 56
  %v763 = vpop.permute.xlu0 %762
  %v767 = vsel %vm226, %v671, 0
  %v770 = vsel %vm226, %v672, 0
  %772 = vmatprep.subr.mxu0 0.0
  %773 = vmatpush1.msra.mxu0 %v761
  %774 = vmatprep.subr.mxu0 0.0
  %775 = vmatpush1.msra.mxu0 %v763
  %776 = vmatprep.subr.mxu0 0.0
  %777 = vmatpush1.msra.mxu0 0.0
  %778 = vmatprep.subr.mxu0 0.0
  %779 = vmatpush1.msra.mxu0 0.0
  %780 = vmatprep.subr.mxu0 0.0
  %781 = vmatpush1.msra.mxu0 0.0
  %782 = vmatprep.subr.mxu0 0.0
  %783 = vmatpush1.msra.mxu0 0.0
  %784 = vmatprep.subr.mxu0 0.0
  %785 = vmatpush1.msra.mxu0 0.0
  %786 = vmatprep.subr.mxu0 0.0
  %787 = vmatpush1.msra.mxu0 0.0
  %788 = vmatprep.subr.mxu0 0.0
  %789 = vmatpush1.msra.mxu0 0.0
  %790 = vmatprep.subr.mxu0 0.0
  %791 = vmatpush1.msra.mxu0 0.0
  %792 = vmatprep.subr.mxu0 0.0
  %793 = vmatpush1.msra.mxu0 0.0
  %794 = vmatprep.subr.mxu0 0.0
  %795 = vmatpush1.msra.mxu0 0.0
  %796 = vmatprep.subr.mxu0 0.0
  %797 = vmatpush1.msra.mxu0 0.0
  %798 = vmatprep.subr.mxu0 0.0
  %799 = vmatpush1.msra.mxu0 0.0
  %800 = vmatprep.subr.mxu0 0.0
  %801 = vmatpush1.msra.mxu0 0.0
  %802 = vmatprep.subr.mxu0 0.0
  %803 = vmatpush1.msra.mxu0 0.0
  %804 = vmatprep.subr.mxu0 0.0
  %805 = vmatpush1.msra.mxu0 0.0
  %806 = vmatprep.subr.mxu0 0.0
  %807 = vmatpush1.msra.mxu0 0.0
  %808 = vmatprep.subr.mxu0 0.0
  %809 = vmatpush1.msra.mxu0 0.0
  %810 = vmatprep.subr.mxu0 0.0
  %811 = vmatpush1.msra.mxu0 0.0
  %812 = vmatprep.subr.mxu0 0.0
  %813 = vmatpush1.msra.mxu0 0.0
  %814 = vmatprep.subr.mxu0 0.0
  %815 = vmatpush1.msra.mxu0 0.0
  %816 = vmatprep.subr.mxu0 0.0
  %817 = vmatpush1.msra.mxu0 0.0
  %818 = vmatprep.subr.mxu0 0.0
  %819 = vmatpush1.msra.mxu0 0.0
  %820 = vmatprep.subr.mxu0 0.0
  %821 = vmatpush1.msra.mxu0 0.0
  %822 = vmatprep.subr.mxu0 0.0
  %823 = vmatpush1.msra.mxu0 0.0
  %824 = vmatprep.subr.mxu0 0.0
  %825 = vmatpush1.msra.mxu0 0.0
  %826 = vmatprep.subr.mxu0 0.0
  %827 = vmatpush1.msra.mxu0 0.0
  %828 = vmatprep.subr.mxu0 0.0
  %829 = vmatpush1.msra.mxu0 0.0
  %830 = vmatprep.subr.mxu0 0.0
  %831 = vmatpush1.msra.mxu0 0.0
  %832 = vmatprep.subr.mxu0 0.0
  %833 = vmatpush1.msra.mxu0 0.0
  %834 = vmatprep.subr.mxu0 0.0
  %835 = vmatpush1.msra.mxu0 0.0
  %836 = vmatprep.mubr.f32.mxu0 0.0
  %837 = vmatmul.mubr.f32.gmra.mrb[0].mxu0 %v767
  %v838 = vpop.f32.mrb[0].mxu0
  %v839 = vadd.f32 0.0, %v838
  %v840 = vpop.f32.mrb[0].mxu0
  %841 = vmatprep.mubr.f32.mxu0 0.0
  %842 = vmatmul.mubr.f32.gmra.mrb[0].mxu0 %v770
  %v843 = vpop.f32.mrb[0].mxu0
  %v844 = vadd.f32 0.0, %v843
  %v845 = vpop.f32.mrb[0].mxu0
  %846 = vdwg.mxu0
  %v847 = vpack.c.bf16 %v757, %v752
  %v848 = vpack.c.bf16 %v844, %v839
  %v850 = vrot.slane %v37, 4
  %v852 = vsel %vm49, %v847, 0
  %vm854 = vcmask 1043456
  %v856 = vsel %vm854, %v850, 0
  %858 = vmatprep.subr.bf16.mxu0 0
  %859 = vmatpush1.bf16.msra.mxu0 %v856
  %860 = vmatprep.subr.bf16.mxu0 0
  %861 = vmatpush1.bf16.msra.mxu0 0
  %862 = vmatprep.subr.bf16.mxu0 0
  %863 = vmatpush1.bf16.msra.mxu0 0
  %864 = vmatprep.subr.bf16.mxu0 0
  %865 = vmatpush1.bf16.msra.mxu0 0
  %866 = vmatprep.subr.bf16.mxu0 0
  %867 = vmatpush1.bf16.msra.mxu0 0
  %868 = vmatprep.subr.bf16.mxu0 0
  %869 = vmatpush1.bf16.msra.mxu0 0
  %870 = vmatprep.subr.bf16.mxu0 0
  %871 = vmatpush1.bf16.msra.mxu0 0
  %872 = vmatprep.subr.bf16.mxu0 0
  %873 = vmatpush1.bf16.msra.mxu0 0
  %874 = vmatprep.subr.bf16.mxu0 0
  %875 = vmatpush1.bf16.msra.mxu0 0
  %876 = vmatprep.subr.bf16.mxu0 0
  %877 = vmatpush1.bf16.msra.mxu0 0
  %878 = vmatprep.subr.bf16.mxu0 0
  %879 = vmatpush1.bf16.msra.mxu0 0
  %880 = vmatprep.subr.bf16.mxu0 0
  %881 = vmatpush1.bf16.msra.mxu0 0
  %882 = vmatprep.subr.bf16.mxu0 0
  %883 = vmatpush1.bf16.msra.mxu0 0
  %884 = vmatprep.subr.bf16.mxu0 0
  %885 = vmatpush1.bf16.msra.mxu0 0
  %886 = vmatprep.subr.bf16.mxu0 0
  %887 = vmatpush1.bf16.msra.mxu0 0
  %888 = vmatprep.subr.bf16.mxu0 0
  %889 = vmatpush1.bf16.msra.mxu0 0
  %890 = vmatprep.mubr.bf16.mxu0 0
  %891 = vmatmul.mubr.bf16.gmra.mrb[0].mxu0 %v852
  %v892 = vpop.f32.mrb[0].mxu0
  %v893 = vadd.f32 0.0, %v892
  %v894 = vpop.f32.mrb[0].mxu0
  %v895 = vpop.f32.mrb[0].mxu0
  %v896 = vadd.f32 0.0, %v895
  %v897 = vpop.f32.mrb[0].mxu0
  %898 = vdwg.mxu0
  %v900 = vsel %vm49, %v848, 0
  %902 = vmatprep.subr.bf16.mxu0 0
  %903 = vmatpush1.bf16.msra.mxu0 %v856
  %904 = vmatprep.subr.bf16.mxu0 0
  %905 = vmatpush1.bf16.msra.mxu0 0
  %906 = vmatprep.subr.bf16.mxu0 0
  %907 = vmatpush1.bf16.msra.mxu0 0
  %908 = vmatprep.subr.bf16.mxu0 0
  %909 = vmatpush1.bf16.msra.mxu0 0
  %910 = vmatprep.subr.bf16.mxu0 0
  %911 = vmatpush1.bf16.msra.mxu0 0
  %912 = vmatprep.subr.bf16.mxu0 0
  %913 = vmatpush1.bf16.msra.mxu0 0
  %914 = vmatprep.subr.bf16.mxu0 0
  %915 = vmatpush1.bf16.msra.mxu0 0
  %916 = vmatprep.subr.bf16.mxu0 0
  %917 = vmatpush1.bf16.msra.mxu0 0
  %918 = vmatprep.subr.bf16.mxu0 0
  %919 = vmatpush1.bf16.msra.mxu0 0
  %920 = vmatprep.subr.bf16.mxu0 0
  %921 = vmatpush1.bf16.msra.mxu0 0
  %922 = vmatprep.subr.bf16.mxu0 0
  %923 = vmatpush1.bf16.msra.mxu0 0
  %924 = vmatprep.subr.bf16.mxu0 0
  %925 = vmatpush1.bf16.msra.mxu0 0
  %926 = vmatprep.subr.bf16.mxu0 0
  %927 = vmatpush1.bf16.msra.mxu0 0
  %928 = vmatprep.subr.bf16.mxu0 0
  %929 = vmatpush1.bf16.msra.mxu0 0
  %930 = vmatprep.subr.bf16.mxu0 0
  %931 = vmatpush1.bf16.msra.mxu0 0
  %932 = vmatprep.subr.bf16.mxu0 0
  %933 = vmatpush1.bf16.msra.mxu0 0
  %934 = vmatprep.mubr.bf16.mxu0 0
  %935 = vmatmul.mubr.bf16.gmra.mrb[0].mxu0 %v900
  %v936 = vpop.f32.mrb[0].mxu0
  %v937 = vadd.f32 0.0, %v936
  %v938 = vpop.f32.mrb[0].mxu0
  %v939 = vpop.f32.mrb[0].mxu0
  %v940 = vadd.f32 0.0, %v939
  %v941 = vpop.f32.mrb[0].mxu0
  %942 = vdwg.mxu0
  %v944 = vsel %vm49, %v445, 0
  %v947 = vsel %vm854, %v37, 0
  %949 = vmatprep.subr.bf16.mxu0 0
  %950 = vmatpush1.bf16.msra.mxu0 %v947
  %951 = vmatprep.subr.bf16.mxu0 0
  %952 = vmatpush1.bf16.msra.mxu0 0
  %953 = vmatprep.subr.bf16.mxu0 0
  %954 = vmatpush1.bf16.msra.mxu0 0
  %955 = vmatprep.subr.bf16.mxu0 0
  %956 = vmatpush1.bf16.msra.mxu0 0
  %957 = vmatprep.subr.bf16.mxu0 0
  %958 = vmatpush1.bf16.msra.mxu0 0
  %959 = vmatprep.subr.bf16.mxu0 0
  %960 = vmatpush1.bf16.msra.mxu0 0
  %961 = vmatprep.subr.bf16.mxu0 0
  %962 = vmatpush1.bf16.msra.mxu0 0
  %963 = vmatprep.subr.bf16.mxu0 0
  %964 = vmatpush1.bf16.msra.mxu0 0
  %965 = vmatprep.subr.bf16.mxu0 0
  %966 = vmatpush1.bf16.msra.mxu0 0
  %967 = vmatprep.subr.bf16.mxu0 0
  %968 = vmatpush1.bf16.msra.mxu0 0
  %969 = vmatprep.subr.bf16.mxu0 0
  %970 = vmatpush1.bf16.msra.mxu0 0
  %971 = vmatprep.subr.bf16.mxu0 0
  %972 = vmatpush1.bf16.msra.mxu0 0
  %973 = vmatprep.subr.bf16.mxu0 0
  %974 = vmatpush1.bf16.msra.mxu0 0
  %975 = vmatprep.subr.bf16.mxu0 0
  %976 = vmatpush1.bf16.msra.mxu0 0
  %977 = vmatprep.subr.bf16.mxu0 0
  %978 = vmatpush1.bf16.msra.mxu0 0
  %979 = vmatprep.subr.bf16.mxu0 0
  %980 = vmatpush1.bf16.msra.mxu0 0
  %981 = vmatprep.mubr.bf16.mxu0 0
  %982 = vmatmul.mubr.bf16.gmra.mrb[0].mxu0 %v944
  %v983 = vpop.f32.mrb[0].mxu0
  %v984 = vadd.f32 %v893, %v983
  %v985 = vpop.f32.mrb[0].mxu0
  %v986 = vpop.f32.mrb[0].mxu0
  %v987 = vadd.f32 %v896, %v986
  %v988 = vpop.f32.mrb[0].mxu0
  %989 = vdwg.mxu0
  %v991 = vsel %vm49, %v446, 0
  %993 = vmatprep.subr.bf16.mxu0 0
  %994 = vmatpush1.bf16.msra.mxu0 %v947
  %995 = vmatprep.subr.bf16.mxu0 0
  %996 = vmatpush1.bf16.msra.mxu0 0
  %997 = vmatprep.subr.bf16.mxu0 0
  %998 = vmatpush1.bf16.msra.mxu0 0
  %999 = vmatprep.subr.bf16.mxu0 0
  %1000 = vmatpush1.bf16.msra.mxu0 0
  %1001 = vmatprep.subr.bf16.mxu0 0
  %1002 = vmatpush1.bf16.msra.mxu0 0
  %1003 = vmatprep.subr.bf16.mxu0 0
  %1004 = vmatpush1.bf16.msra.mxu0 0
  %1005 = vmatprep.subr.bf16.mxu0 0
  %1006 = vmatpush1.bf16.msra.mxu0 0
  %1007 = vmatprep.subr.bf16.mxu0 0
  %1008 = vmatpush1.bf16.msra.mxu0 0
  %1009 = vmatprep.subr.bf16.mxu0 0
  %1010 = vmatpush1.bf16.msra.mxu0 0
  %1011 = vmatprep.subr.bf16.mxu0 0
  %1012 = vmatpush1.bf16.msra.mxu0 0
  %1013 = vmatprep.subr.bf16.mxu0 0
  %1014 = vmatpush1.bf16.msra.mxu0 0
  %1015 = vmatprep.subr.bf16.mxu0 0
  %1016 = vmatpush1.bf16.msra.mxu0 0
  %1017 = vmatprep.subr.bf16.mxu0 0
  %1018 = vmatpush1.bf16.msra.mxu0 0
  %1019 = vmatprep.subr.bf16.mxu0 0
  %1020 = vmatpush1.bf16.msra.mxu0 0
  %1021 = vmatprep.subr.bf16.mxu0 0
  %1022 = vmatpush1.bf16.msra.mxu0 0
  %1023 = vmatprep.subr.bf16.mxu0 0
  %1024 = vmatpush1.bf16.msra.mxu0 0
  %1025 = vmatprep.mubr.bf16.mxu0 0
  %1026 = vmatmul.mubr.bf16.gmra.mrb[0].mxu0 %v991
  %v1027 = vpop.f32.mrb[0].mxu0
  %v1028 = vadd.f32 %v937, %v1027
  %v1029 = vpop.f32.mrb[0].mxu0
  %v1030 = vpop.f32.mrb[0].mxu0
  %v1031 = vadd.f32 %v940, %v1030
  %v1032 = vpop.f32.mrb[0].mxu0
  %1033 = vdwg.mxu0
  %1034 = vrot.lane.b32.xlu0 %v39, 112
  %v1035 = vpop.permute.xlu0 %1034
  %1036 = vrot.lane.b32.xlu0 %v40, 112
  %v1037 = vpop.permute.xlu0 %1036
  %1038 = vrot.lane.b32.xlu0 %v21, 80
  %v1039 = vpop.permute.xlu0 %1038
  %1040 = vrot.lane.b32.xlu0 %v22, 80
  %v1041 = vpop.permute.xlu0 %1040
  %v1042 = vsel %vm49, %v1035, 0
  %v1044 = vsel %vm49, %v1037, 0
  %v1046 = vsel %vm49, %v1039, 0
  %v1048 = vsel %vm49, %v1041, 0
  %1050 = vmatprep.subr.mxu0 0.0
  %1051 = vmatpush1.xpose.msra.mxu0 %v1046
  %1052 = vmatprep.subr.mxu0 0.0
  %1053 = vmatpush1.xpose.msra.mxu0 %v1048
  %1054 = vmatprep.subr.mxu0 0.0
  %1055 = vmatpush1.xpose.msra.mxu0 0.0
  %1056 = vmatprep.subr.mxu0 0.0
  %1057 = vmatpush1.xpose.msra.mxu0 0.0
  %1058 = vmatprep.subr.mxu0 0.0
  %1059 = vmatpush1.xpose.msra.mxu0 0.0
  %1060 = vmatprep.subr.mxu0 0.0
  %1061 = vmatpush1.xpose.msra.mxu0 0.0
  %1062 = vmatprep.subr.mxu0 0.0
  %1063 = vmatpush1.xpose.msra.mxu0 0.0
  %1064 = vmatprep.subr.mxu0 0.0
  %1065 = vmatpush1.xpose.msra.mxu0 0.0
  %1066 = vmatprep.subr.mxu0 0.0
  %1067 = vmatpush1.xpose.msra.mxu0 0.0
  %1068 = vmatprep.subr.mxu0 0.0
  %1069 = vmatpush1.xpose.msra.mxu0 0.0
  %1070 = vmatprep.subr.mxu0 0.0
  %1071 = vmatpush1.xpose.msra.mxu0 0.0
  %1072 = vmatprep.subr.mxu0 0.0
  %1073 = vmatpush1.xpose.msra.mxu0 0.0
  %1074 = vmatprep.subr.mxu0 0.0
  %1075 = vmatpush1.xpose.msra.mxu0 0.0
  %1076 = vmatprep.subr.mxu0 0.0
  %1077 = vmatpush1.xpose.msra.mxu0 0.0
  %1078 = vmatprep.subr.mxu0 0.0
  %1079 = vmatpush1.xpose.msra.mxu0 0.0
  %1080 = vmatprep.subr.mxu0 0.0
  %1081 = vmatpush1.xpose.msra.mxu0 0.0
  %1082 = vmatprep.subr.mxu0 0.0
  %1083 = vmatpush1.xpose.msra.mxu0 0.0
  %1084 = vmatprep.subr.mxu0 0.0
  %1085 = vmatpush1.xpose.msra.mxu0 0.0
  %1086 = vmatprep.subr.mxu0 0.0
  %1087 = vmatpush1.xpose.msra.mxu0 0.0
  %1088 = vmatprep.subr.mxu0 0.0
  %1089 = vmatpush1.xpose.msra.mxu0 0.0
  %1090 = vmatprep.subr.mxu0 0.0
  %1091 = vmatpush1.xpose.msra.mxu0 0.0
  %1092 = vmatprep.subr.mxu0 0.0
  %1093 = vmatpush1.xpose.msra.mxu0 0.0
  %1094 = vmatprep.subr.mxu0 0.0
  %1095 = vmatpush1.xpose.msra.mxu0 0.0
  %1096 = vmatprep.subr.mxu0 0.0
  %1097 = vmatpush1.xpose.msra.mxu0 0.0
  %1098 = vmatprep.subr.mxu0 0.0
  %1099 = vmatpush1.xpose.msra.mxu0 0.0
  %1100 = vmatprep.subr.mxu0 0.0
  %1101 = vmatpush1.xpose.msra.mxu0 0.0
  %1102 = vmatprep.subr.mxu0 0.0
  %1103 = vmatpush1.xpose.msra.mxu0 0.0
  %1104 = vmatprep.subr.mxu0 0.0
  %1105 = vmatpush1.xpose.msra.mxu0 0.0
  %1106 = vmatprep.subr.mxu0 0.0
  %1107 = vmatpush1.xpose.msra.mxu0 0.0
  %1108 = vmatprep.subr.mxu0 0.0
  %1109 = vmatpush1.xpose.msra.mxu0 0.0
  %1110 = vmatprep.subr.mxu0 0.0
  %1111 = vmatpush1.xpose.msra.mxu0 0.0
  %1112 = vmatprep.subr.mxu0 0.0
  %1113 = vmatpush1.xpose.msra.mxu0 0.0
  %1114 = vmatprep.mubr.f32.mxu0 0.0
  %1115 = vmatmul.mubr.f32.gmra.mrb[0].mxu0 %v1042
  %v1116 = vpop.f32.mrb[0].mxu0
  %v1117 = vadd.f32 %v29, %v1116
  %v1118 = vpop.f32.mrb[0].mxu0
  %1119 = vmatprep.mubr.f32.mxu0 0.0
  %1120 = vmatmul.mubr.f32.gmra.mrb[0].mxu0 %v1044
  %v1121 = vpop.f32.mrb[0].mxu0
  %v1122 = vadd.f32 %v30, %v1121
  %v1123 = vpop.f32.mrb[0].mxu0
  %1124 = vdwg.mxu0
  %1125 = vrot.lane.b32.xlu0 %v41, 112
  %v1126 = vpop.permute.xlu0 %1125
  %1127 = vrot.lane.b32.xlu0 %v42, 112
  %v1128 = vpop.permute.xlu0 %1127
  %1129 = vrot.lane.b32.xlu0 %v23, 80
  %v1130 = vpop.permute.xlu0 %1129
  %1131 = vrot.lane.b32.xlu0 %v24, 80
  %v1132 = vpop.permute.xlu0 %1131
  %v1133 = vsel %vm49, %v1126, 0
  %v1135 = vsel %vm49, %v1128, 0
  %v1137 = vsel %vm49, %v1130, 0
  %v1139 = vsel %vm49, %v1132, 0
  %1141 = vmatprep.subr.mxu0 0.0
  %1142 = vmatpush1.xpose.msra.mxu0 %v1137
  %1143 = vmatprep.subr.mxu0 0.0
  %1144 = vmatpush1.xpose.msra.mxu0 %v1139
  %1145 = vmatprep.subr.mxu0 0.0
  %1146 = vmatpush1.xpose.msra.mxu0 0.0
  %1147 = vmatprep.subr.mxu0 0.0
  %1148 = vmatpush1.xpose.msra.mxu0 0.0
  %1149 = vmatprep.subr.mxu0 0.0
  %1150 = vmatpush1.xpose.msra.mxu0 0.0
  %1151 = vmatprep.subr.mxu0 0.0
  %1152 = vmatpush1.xpose.msra.mxu0 0.0
  %1153 = vmatprep.subr.mxu0 0.0
  %1154 = vmatpush1.xpose.msra.mxu0 0.0
  %1155 = vmatprep.subr.mxu0 0.0
  %1156 = vmatpush1.xpose.msra.mxu0 0.0
  %1157 = vmatprep.subr.mxu0 0.0
  %1158 = vmatpush1.xpose.msra.mxu0 0.0
  %1159 = vmatprep.subr.mxu0 0.0
  %1160 = vmatpush1.xpose.msra.mxu0 0.0
  %1161 = vmatprep.subr.mxu0 0.0
  %1162 = vmatpush1.xpose.msra.mxu0 0.0
  %1163 = vmatprep.subr.mxu0 0.0
  %1164 = vmatpush1.xpose.msra.mxu0 0.0
  %1165 = vmatprep.subr.mxu0 0.0
  %1166 = vmatpush1.xpose.msra.mxu0 0.0
  %1167 = vmatprep.subr.mxu0 0.0
  %1168 = vmatpush1.xpose.msra.mxu0 0.0
  %1169 = vmatprep.subr.mxu0 0.0
  %1170 = vmatpush1.xpose.msra.mxu0 0.0
  %1171 = vmatprep.subr.mxu0 0.0
  %1172 = vmatpush1.xpose.msra.mxu0 0.0
  %1173 = vmatprep.subr.mxu0 0.0
  %1174 = vmatpush1.xpose.msra.mxu0 0.0
  %1175 = vmatprep.subr.mxu0 0.0
  %1176 = vmatpush1.xpose.msra.mxu0 0.0
  %1177 = vmatprep.subr.mxu0 0.0
  %1178 = vmatpush1.xpose.msra.mxu0 0.0
  %1179 = vmatprep.subr.mxu0 0.0
  %1180 = vmatpush1.xpose.msra.mxu0 0.0
  %1181 = vmatprep.subr.mxu0 0.0
  %1182 = vmatpush1.xpose.msra.mxu0 0.0
  %1183 = vmatprep.subr.mxu0 0.0
  %1184 = vmatpush1.xpose.msra.mxu0 0.0
  %1185 = vmatprep.subr.mxu0 0.0
  %1186 = vmatpush1.xpose.msra.mxu0 0.0
  %1187 = vmatprep.subr.mxu0 0.0
  %1188 = vmatpush1.xpose.msra.mxu0 0.0
  %1189 = vmatprep.subr.mxu0 0.0
  %1190 = vmatpush1.xpose.msra.mxu0 0.0
  %1191 = vmatprep.subr.mxu0 0.0
  %1192 = vmatpush1.xpose.msra.mxu0 0.0
  %1193 = vmatprep.subr.mxu0 0.0
  %1194 = vmatpush1.xpose.msra.mxu0 0.0
  %1195 = vmatprep.subr.mxu0 0.0
  %1196 = vmatpush1.xpose.msra.mxu0 0.0
  %1197 = vmatprep.subr.mxu0 0.0
  %1198 = vmatpush1.xpose.msra.mxu0 0.0
  %1199 = vmatprep.subr.mxu0 0.0
  %1200 = vmatpush1.xpose.msra.mxu0 0.0
  %1201 = vmatprep.subr.mxu0 0.0
  %1202 = vmatpush1.xpose.msra.mxu0 0.0
  %1203 = vmatprep.subr.mxu0 0.0
  %1204 = vmatpush1.xpose.msra.mxu0 0.0
  %1205 = vmatprep.mubr.f32.mxu0 0.0
  %1206 = vmatmul.mubr.f32.gmra.mrb[0].mxu0 %v1133
  %v1207 = vpop.f32.mrb[0].mxu0
  %v1208 = vadd.f32 %v29, %v1207
  %v1209 = vpop.f32.mrb[0].mxu0
  %1210 = vmatprep.mubr.f32.mxu0 0.0
  %1211 = vmatmul.mubr.f32.gmra.mrb[0].mxu0 %v1135
  %v1212 = vpop.f32.mrb[0].mxu0
  %v1213 = vadd.f32 %v30, %v1212
  %v1214 = vpop.f32.mrb[0].mxu0
  %1215 = vdwg.mxu0
  %v1216 = vsel %vm226, %v1117, -inf
  %1217 = vmax.xlane.f32.xlu0 %v1216
  %v1218 = vpop.xlane.xlu0 %1217
  %v1219 = vsel %vm226, %v1122, -inf
  %1220 = vmax.xlane.f32.xlu0 %v1219
  %v1221 = vpop.xlane.xlu0 %1220
  %v1222 = vsel %vm226, %v1208, -inf
  %1223 = vmax.xlane.f32.xlu0 %v1222
  %v1224 = vpop.xlane.xlu0 %1223
  %v1225 = vsel %vm226, %v1213, -inf
  %1226 = vmax.xlane.f32.xlu0 %v1225
  %v1227 = vpop.xlane.xlu0 %1226
  %v1228 = vsub.f32 %v1117, %v1218
  %v1229 = vsub.f32 %v1122, %v1221
  %v1230 = vsub.f32 %v1208, %v1224
  %v1231 = vsub.f32 %v1213, %v1227
  %v1232 = vmul.f32 %v1228, 1.442695
  %v1233 = vpow.pop %v1232
  %v1234 = vmul.f32 %v1229, 1.442695
  %v1235 = vpow.pop %v1234
  %v1236 = vmul.f32 %v1230, 1.442695
  %v1237 = vpow.pop %v1236
  %v1238 = vmul.f32 %v1231, 1.442695
  %v1239 = vpow.pop %v1238
  %v1240 = vsel %vm226, %v1233, 0.0
  %1241 = vadd.xlane.f32.xlu0 %v1240
  %v1242 = vpop.xlane.xlu0 %1241
  %v1243 = vsel %vm226, %v1235, 0.0
  %1244 = vadd.xlane.f32.xlu0 %v1243
  %v1245 = vpop.xlane.xlu0 %1244
  %v1246 = vsel %vm226, %v1237, 0.0
  %1247 = vadd.xlane.f32.xlu0 %v1246
  %v1248 = vpop.xlane.xlu0 %1247
  %v1249 = vsel %vm226, %v1239, 0.0
  %1250 = vadd.xlane.f32.xlu0 %v1249
  %v1251 = vpop.xlane.xlu0 %1250
  %v1252 = vrcp.pop %v1242
  %v1253 = vrcp.pop %v1245
  %v1254 = vrcp.pop %v1248
  %v1255 = vrcp.pop %v1251
  %v1256 = vmul.f32 %v1233, %v1252
  %v1257 = vmul.f32 %v1235, %v1253
  %v1258 = vmul.f32 %v1237, %v1254
  %v1259 = vmul.f32 %v1239, %v1255
  %1260 = vrot.lane.b32.xlu0 %v21, 48
  %v1261 = vpop.permute.xlu0 %1260
  %1262 = vrot.lane.b32.xlu0 %v22, 48
  %v1263 = vpop.permute.xlu0 %1262
  %v1267 = vsel %vm226, %v1256, 0
  %v1270 = vsel %vm226, %v1257, 0
  %1272 = vmatprep.subr.mxu0 0.0
  %1273 = vmatpush1.msra.mxu0 %v1261
  %1274 = vmatprep.subr.mxu0 0.0
  %1275 = vmatpush1.msra.mxu0 %v1263
  %1276 = vmatprep.subr.mxu0 0.0
  %1277 = vmatpush1.msra.mxu0 0.0
  %1278 = vmatprep.subr.mxu0 0.0
  %1279 = vmatpush1.msra.mxu0 0.0
  %1280 = vmatprep.subr.mxu0 0.0
  %1281 = vmatpush1.msra.mxu0 0.0
  %1282 = vmatprep.subr.mxu0 0.0
  %1283 = vmatpush1.msra.mxu0 0.0
  %1284 = vmatprep.subr.mxu0 0.0
  %1285 = vmatpush1.msra.mxu0 0.0
  %1286 = vmatprep.subr.mxu0 0.0
  %1287 = vmatpush1.msra.mxu0 0.0
  %1288 = vmatprep.subr.mxu0 0.0
  %1289 = vmatpush1.msra.mxu0 0.0
  %1290 = vmatprep.subr.mxu0 0.0
  %1291 = vmatpush1.msra.mxu0 0.0
  %1292 = vmatprep.subr.mxu0 0.0
  %1293 = vmatpush1.msra.mxu0 0.0
  %1294 = vmatprep.subr.mxu0 0.0
  %1295 = vmatpush1.msra.mxu0 0.0
  %1296 = vmatprep.subr.mxu0 0.0
  %1297 = vmatpush1.msra.mxu0 0.0
  %1298 = vmatprep.subr.mxu0 0.0
  %1299 = vmatpush1.msra.mxu0 0.0
  %1300 = vmatprep.subr.mxu0 0.0
  %1301 = vmatpush1.msra.mxu0 0.0
  %1302 = vmatprep.subr.mxu0 0.0
  %1303 = vmatpush1.msra.mxu0 0.0
  %1304 = vmatprep.subr.mxu0 0.0
  %1305 = vmatpush1.msra.mxu0 0.0
  %1306 = vmatprep.subr.mxu0 0.0
  %1307 = vmatpush1.msra.mxu0 0.0
  %1308 = vmatprep.subr.mxu0 0.0
  %1309 = vmatpush1.msra.mxu0 0.0
  %1310 = vmatprep.subr.mxu0 0.0
  %1311 = vmatpush1.msra.mxu0 0.0
  %1312 = vmatprep.subr.mxu0 0.0
  %1313 = vmatpush1.msra.mxu0 0.0
  %1314 = vmatprep.subr.mxu0 0.0
  %1315 = vmatpush1.msra.mxu0 0.0
  %1316 = vmatprep.subr.mxu0 0.0
  %1317 = vmatpush1.msra.mxu0 0.0
  %1318 = vmatprep.subr.mxu0 0.0
  %1319 = vmatpush1.msra.mxu0 0.0
  %1320 = vmatprep.subr.mxu0 0.0
  %1321 = vmatpush1.msra.mxu0 0.0
  %1322 = vmatprep.subr.mxu0 0.0
  %1323 = vmatpush1.msra.mxu0 0.0
  %1324 = vmatprep.subr.mxu0 0.0
  %1325 = vmatpush1.msra.mxu0 0.0
  %1326 = vmatprep.subr.mxu0 0.0
  %1327 = vmatpush1.msra.mxu0 0.0
  %1328 = vmatprep.subr.mxu0 0.0
  %1329 = vmatpush1.msra.mxu0 0.0
  %1330 = vmatprep.subr.mxu0 0.0
  %1331 = vmatpush1.msra.mxu0 0.0
  %1332 = vmatprep.subr.mxu0 0.0
  %1333 = vmatpush1.msra.mxu0 0.0
  %1334 = vmatprep.subr.mxu0 0.0
  %1335 = vmatpush1.msra.mxu0 0.0
  %1336 = vmatprep.mubr.f32.mxu0 0.0
  %1337 = vmatmul.mubr.f32.gmra.mrb[0].mxu0 %v1267
  %v1338 = vpop.f32.mrb[0].mxu0
  %v1339 = vadd.f32 0.0, %v1338
  %v1340 = vpop.f32.mrb[0].mxu0
  %1341 = vmatprep.mubr.f32.mxu0 0.0
  %1342 = vmatmul.mubr.f32.gmra.mrb[0].mxu0 %v1270
  %v1343 = vpop.f32.mrb[0].mxu0
  %v1344 = vadd.f32 0.0, %v1343
  %v1345 = vpop.f32.mrb[0].mxu0
  %1346 = vdwg.mxu0
  %1347 = vrot.lane.b32.xlu0 %v23, 48
  %v1348 = vpop.permute.xlu0 %1347
  %1349 = vrot.lane.b32.xlu0 %v24, 48
  %v1350 = vpop.permute.xlu0 %1349
  %v1354 = vsel %vm226, %v1258, 0
  %v1357 = vsel %vm226, %v1259, 0
  %1359 = vmatprep.subr.mxu0 0.0
  %1360 = vmatpush1.msra.mxu0 %v1348
  %1361 = vmatprep.subr.mxu0 0.0
  %1362 = vmatpush1.msra.mxu0 %v1350
  %1363 = vmatprep.subr.mxu0 0.0
  %1364 = vmatpush1.msra.mxu0 0.0
  %1365 = vmatprep.subr.mxu0 0.0
  %1366 = vmatpush1.msra.mxu0 0.0
  %1367 = vmatprep.subr.mxu0 0.0
  %1368 = vmatpush1.msra.mxu0 0.0
  %1369 = vmatprep.subr.mxu0 0.0
  %1370 = vmatpush1.msra.mxu0 0.0
  %1371 = vmatprep.subr.mxu0 0.0
  %1372 = vmatpush1.msra.mxu0 0.0
  %1373 = vmatprep.subr.mxu0 0.0
  %1374 = vmatpush1.msra.mxu0 0.0
  %1375 = vmatprep.subr.mxu0 0.0
  %1376 = vmatpush1.msra.mxu0 0.0
  %1377 = vmatprep.subr.mxu0 0.0
  %1378 = vmatpush1.msra.mxu0 0.0
  %1379 = vmatprep.subr.mxu0 0.0
  %1380 = vmatpush1.msra.mxu0 0.0
  %1381 = vmatprep.subr.mxu0 0.0
  %1382 = vmatpush1.msra.mxu0 0.0
  %1383 = vmatprep.subr.mxu0 0.0
  %1384 = vmatpush1.msra.mxu0 0.0
  %1385 = vmatprep.subr.mxu0 0.0
  %1386 = vmatpush1.msra.mxu0 0.0
  %1387 = vmatprep.subr.mxu0 0.0
  %1388 = vmatpush1.msra.mxu0 0.0
  %1389 = vmatprep.subr.mxu0 0.0
  %1390 = vmatpush1.msra.mxu0 0.0
  %1391 = vmatprep.subr.mxu0 0.0
  %1392 = vmatpush1.msra.mxu0 0.0
  %1393 = vmatprep.subr.mxu0 0.0
  %1394 = vmatpush1.msra.mxu0 0.0
  %1395 = vmatprep.subr.mxu0 0.0
  %1396 = vmatpush1.msra.mxu0 0.0
  %1397 = vmatprep.subr.mxu0 0.0
  %1398 = vmatpush1.msra.mxu0 0.0
  %1399 = vmatprep.subr.mxu0 0.0
  %1400 = vmatpush1.msra.mxu0 0.0
  %1401 = vmatprep.subr.mxu0 0.0
  %1402 = vmatpush1.msra.mxu0 0.0
  %1403 = vmatprep.subr.mxu0 0.0
  %1404 = vmatpush1.msra.mxu0 0.0
  %1405 = vmatprep.subr.mxu0 0.0
  %1406 = vmatpush1.msra.mxu0 0.0
  %1407 = vmatprep.subr.mxu0 0.0
  %1408 = vmatpush1.msra.mxu0 0.0
  %1409 = vmatprep.subr.mxu0 0.0
  %1410 = vmatpush1.msra.mxu0 0.0
  %1411 = vmatprep.subr.mxu0 0.0
  %1412 = vmatpush1.msra.mxu0 0.0
  %1413 = vmatprep.subr.mxu0 0.0
  %1414 = vmatpush1.msra.mxu0 0.0
  %1415 = vmatprep.subr.mxu0 0.0
  %1416 = vmatpush1.msra.mxu0 0.0
  %1417 = vmatprep.subr.mxu0 0.0
  %1418 = vmatpush1.msra.mxu0 0.0
  %1419 = vmatprep.subr.mxu0 0.0
  %1420 = vmatpush1.msra.mxu0 0.0
  %1421 = vmatprep.subr.mxu0 0.0
  %1422 = vmatpush1.msra.mxu0 0.0
  %1423 = vmatprep.mubr.f32.mxu0 0.0
  %1424 = vmatmul.mubr.f32.gmra.mrb[0].mxu0 %v1354
  %v1425 = vpop.f32.mrb[0].mxu0
  %v1426 = vadd.f32 0.0, %v1425
  %v1427 = vpop.f32.mrb[0].mxu0
  %1428 = vmatprep.mubr.f32.mxu0 0.0
  %1429 = vmatmul.mubr.f32.gmra.mrb[0].mxu0 %v1357
  %v1430 = vpop.f32.mrb[0].mxu0
  %v1431 = vadd.f32 0.0, %v1430
  %v1432 = vpop.f32.mrb[0].mxu0
  %1433 = vdwg.mxu0
  %v1434 = vpack.c.bf16 %v1344, %v1339
  %v1435 = vpack.c.bf16 %v1431, %v1426
  %v1437 = vsel %vm49, %v1434, 0
  %v1440 = vsel %vm854, %v38, 0
  %1442 = vmatprep.subr.bf16.mxu0 0
  %1443 = vmatpush1.bf16.msra.mxu0 %v1440
  %1444 = vmatprep.subr.bf16.mxu0 0
  %1445 = vmatpush1.bf16.msra.mxu0 0
  %1446 = vmatprep.subr.bf16.mxu0 0
  %1447 = vmatpush1.bf16.msra.mxu0 0
  %1448 = vmatprep.subr.bf16.mxu0 0
  %1449 = vmatpush1.bf16.msra.mxu0 0
  %1450 = vmatprep.subr.bf16.mxu0 0
  %1451 = vmatpush1.bf16.msra.mxu0 0
  %1452 = vmatprep.subr.bf16.mxu0 0
  %1453 = vmatpush1.bf16.msra.mxu0 0
  %1454 = vmatprep.subr.bf16.mxu0 0
  %1455 = vmatpush1.bf16.msra.mxu0 0
  %1456 = vmatprep.subr.bf16.mxu0 0
  %1457 = vmatpush1.bf16.msra.mxu0 0
  %1458 = vmatprep.subr.bf16.mxu0 0
  %1459 = vmatpush1.bf16.msra.mxu0 0
  %1460 = vmatprep.subr.bf16.mxu0 0
  %1461 = vmatpush1.bf16.msra.mxu0 0
  %1462 = vmatprep.subr.bf16.mxu0 0
  %1463 = vmatpush1.bf16.msra.mxu0 0
  %1464 = vmatprep.subr.bf16.mxu0 0
  %1465 = vmatpush1.bf16.msra.mxu0 0
  %1466 = vmatprep.subr.bf16.mxu0 0
  %1467 = vmatpush1.bf16.msra.mxu0 0
  %1468 = vmatprep.subr.bf16.mxu0 0
  %1469 = vmatpush1.bf16.msra.mxu0 0
  %1470 = vmatprep.subr.bf16.mxu0 0
  %1471 = vmatpush1.bf16.msra.mxu0 0
  %1472 = vmatprep.subr.bf16.mxu0 0
  %1473 = vmatpush1.bf16.msra.mxu0 0
  %1474 = vmatprep.mubr.bf16.mxu0 0
  %1475 = vmatmul.mubr.bf16.gmra.mrb[0].mxu0 %v1437
  %v1476 = vpop.f32.mrb[0].mxu0
  %v1477 = vadd.f32 0.0, %v1476
  %v1478 = vpop.f32.mrb[0].mxu0
  %v1479 = vpop.f32.mrb[0].mxu0
  %v1480 = vadd.f32 0.0, %v1479
  %v1481 = vpop.f32.mrb[0].mxu0
  %1482 = vdwg.mxu0
  %v1484 = vsel %vm49, %v1435, 0
  %1486 = vmatprep.subr.bf16.mxu0 0
  %1487 = vmatpush1.bf16.msra.mxu0 %v1440
  %1488 = vmatprep.subr.bf16.mxu0 0
  %1489 = vmatpush1.bf16.msra.mxu0 0
  %1490 = vmatprep.subr.bf16.mxu0 0
  %1491 = vmatpush1.bf16.msra.mxu0 0
  %1492 = vmatprep.subr.bf16.mxu0 0
  %1493 = vmatpush1.bf16.msra.mxu0 0
  %1494 = vmatprep.subr.bf16.mxu0 0
  %1495 = vmatpush1.bf16.msra.mxu0 0
  %1496 = vmatprep.subr.bf16.mxu0 0
  %1497 = vmatpush1.bf16.msra.mxu0 0
  %1498 = vmatprep.subr.bf16.mxu0 0
  %1499 = vmatpush1.bf16.msra.mxu0 0
  %1500 = vmatprep.subr.bf16.mxu0 0
  %1501 = vmatpush1.bf16.msra.mxu0 0
  %1502 = vmatprep.subr.bf16.mxu0 0
  %1503 = vmatpush1.bf16.msra.mxu0 0
  %1504 = vmatprep.subr.bf16.mxu0 0
  %1505 = vmatpush1.bf16.msra.mxu0 0
  %1506 = vmatprep.subr.bf16.mxu0 0
  %1507 = vmatpush1.bf16.msra.mxu0 0
  %1508 = vmatprep.subr.bf16.mxu0 0
  %1509 = vmatpush1.bf16.msra.mxu0 0
  %1510 = vmatprep.subr.bf16.mxu0 0
  %1511 = vmatpush1.bf16.msra.mxu0 0
  %1512 = vmatprep.subr.bf16.mxu0 0
  %1513 = vmatpush1.bf16.msra.mxu0 0
  %1514 = vmatprep.subr.bf16.mxu0 0
  %1515 = vmatpush1.bf16.msra.mxu0 0
  %1516 = vmatprep.subr.bf16.mxu0 0
  %1517 = vmatpush1.bf16.msra.mxu0 0
  %1518 = vmatprep.mubr.bf16.mxu0 0
  %1519 = vmatmul.mubr.bf16.gmra.mrb[0].mxu0 %v1484
  %v1520 = vpop.f32.mrb[0].mxu0
  %v1521 = vadd.f32 0.0, %v1520
  %v1522 = vpop.f32.mrb[0].mxu0
  %v1523 = vpop.f32.mrb[0].mxu0
  %v1524 = vadd.f32 0.0, %v1523
  %v1525 = vpop.f32.mrb[0].mxu0
  %1526 = vdwg.mxu0
  %v1527 = vadd.f32 %v984, %v1477
  %v1528 = vadd.f32 %v987, %v1480
  %v1529 = vadd.f32 %v1028, %v1521
  %v1530 = vadd.f32 %v1031, %v1524
  %1531 = vrot.lane.b32.xlu0 %v39, 104
  %v1532 = vpop.permute.xlu0 %1531
  %1533 = vrot.lane.b32.xlu0 %v40, 104
  %v1534 = vpop.permute.xlu0 %1533
  %1535 = vrot.lane.b32.xlu0 %v21, 72
  %v1536 = vpop.permute.xlu0 %1535
  %1537 = vrot.lane.b32.xlu0 %v22, 72
  %v1538 = vpop.permute.xlu0 %1537
  %v1539 = vsel %vm49, %v1532, 0
  %v1541 = vsel %vm49, %v1534, 0
  %v1543 = vsel %vm49, %v1536, 0
  %v1545 = vsel %vm49, %v1538, 0
  %1547 = vmatprep.subr.mxu0 0.0
  %1548 = vmatpush1.xpose.msra.mxu0 %v1543
  %1549 = vmatprep.subr.mxu0 0.0
  %1550 = vmatpush1.xpose.msra.mxu0 %v1545
  %1551 = vmatprep.subr.mxu0 0.0
  %1552 = vmatpush1.xpose.msra.mxu0 0.0
  %1553 = vmatprep.subr.mxu0 0.0
  %1554 = vmatpush1.xpose.msra.mxu0 0.0
  %1555 = vmatprep.subr.mxu0 0.0
  %1556 = vmatpush1.xpose.msra.mxu0 0.0
  %1557 = vmatprep.subr.mxu0 0.0
  %1558 = vmatpush1.xpose.msra.mxu0 0.0
  %1559 = vmatprep.subr.mxu0 0.0
  %1560 = vmatpush1.xpose.msra.mxu0 0.0
  %1561 = vmatprep.subr.mxu0 0.0
  %1562 = vmatpush1.xpose.msra.mxu0 0.0
  %1563 = vmatprep.subr.mxu0 0.0
  %1564 = vmatpush1.xpose.msra.mxu0 0.0
  %1565 = vmatprep.subr.mxu0 0.0
  %1566 = vmatpush1.xpose.msra.mxu0 0.0
  %1567 = vmatprep.subr.mxu0 0.0
  %1568 = vmatpush1.xpose.msra.mxu0 0.0
  %1569 = vmatprep.subr.mxu0 0.0
  %1570 = vmatpush1.xpose.msra.mxu0 0.0
  %1571 = vmatprep.subr.mxu0 0.0
  %1572 = vmatpush1.xpose.msra.mxu0 0.0
  %1573 = vmatprep.subr.mxu0 0.0
  %1574 = vmatpush1.xpose.msra.mxu0 0.0
  %1575 = vmatprep.subr.mxu0 0.0
  %1576 = vmatpush1.xpose.msra.mxu0 0.0
  %1577 = vmatprep.subr.mxu0 0.0
  %1578 = vmatpush1.xpose.msra.mxu0 0.0
  %1579 = vmatprep.subr.mxu0 0.0
  %1580 = vmatpush1.xpose.msra.mxu0 0.0
  %1581 = vmatprep.subr.mxu0 0.0
  %1582 = vmatpush1.xpose.msra.mxu0 0.0
  %1583 = vmatprep.subr.mxu0 0.0
  %1584 = vmatpush1.xpose.msra.mxu0 0.0
  %1585 = vmatprep.subr.mxu0 0.0
  %1586 = vmatpush1.xpose.msra.mxu0 0.0
  %1587 = vmatprep.subr.mxu0 0.0
  %1588 = vmatpush1.xpose.msra.mxu0 0.0
  %1589 = vmatprep.subr.mxu0 0.0
  %1590 = vmatpush1.xpose.msra.mxu0 0.0
  %1591 = vmatprep.subr.mxu0 0.0
  %1592 = vmatpush1.xpose.msra.mxu0 0.0
  %1593 = vmatprep.subr.mxu0 0.0
  %1594 = vmatpush1.xpose.msra.mxu0 0.0
  %1595 = vmatprep.subr.mxu0 0.0
  %1596 = vmatpush1.xpose.msra.mxu0 0.0
  %1597 = vmatprep.subr.mxu0 0.0
  %1598 = vmatpush1.xpose.msra.mxu0 0.0
  %1599 = vmatprep.subr.mxu0 0.0
  %1600 = vmatpush1.xpose.msra.mxu0 0.0
  %1601 = vmatprep.subr.mxu0 0.0
  %1602 = vmatpush1.xpose.msra.mxu0 0.0
  %1603 = vmatprep.subr.mxu0 0.0
  %1604 = vmatpush1.xpose.msra.mxu0 0.0
  %1605 = vmatprep.subr.mxu0 0.0
  %1606 = vmatpush1.xpose.msra.mxu0 0.0
  %1607 = vmatprep.subr.mxu0 0.0
  %1608 = vmatpush1.xpose.msra.mxu0 0.0
  %1609 = vmatprep.subr.mxu0 0.0
  %1610 = vmatpush1.xpose.msra.mxu0 0.0
  %1611 = vmatprep.mubr.f32.mxu0 0.0
  %1612 = vmatmul.mubr.f32.gmra.mrb[0].mxu0 %v1539
  %v1613 = vpop.f32.mrb[0].mxu0
  %v1614 = vadd.f32 %v31, %v1613
  %v1615 = vpop.f32.mrb[0].mxu0
  %1616 = vmatprep.mubr.f32.mxu0 0.0
  %1617 = vmatmul.mubr.f32.gmra.mrb[0].mxu0 %v1541
  %v1618 = vpop.f32.mrb[0].mxu0
  %v1619 = vadd.f32 %v32, %v1618
  %v1620 = vpop.f32.mrb[0].mxu0
  %1621 = vdwg.mxu0
  %1622 = vrot.lane.b32.xlu0 %v41, 104
  %v1623 = vpop.permute.xlu0 %1622
  %1624 = vrot.lane.b32.xlu0 %v42, 104
  %v1625 = vpop.permute.xlu0 %1624
  %1626 = vrot.lane.b32.xlu0 %v23, 72
  %v1627 = vpop.permute.xlu0 %1626
  %1628 = vrot.lane.b32.xlu0 %v24, 72
  %v1629 = vpop.permute.xlu0 %1628
  %v1630 = vsel %vm49, %v1623, 0
  %v1632 = vsel %vm49, %v1625, 0
  %v1634 = vsel %vm49, %v1627, 0
  %v1636 = vsel %vm49, %v1629, 0
  %1638 = vmatprep.subr.mxu0 0.0
  %1639 = vmatpush1.xpose.msra.mxu0 %v1634
  %1640 = vmatprep.subr.mxu0 0.0
  %1641 = vmatpush1.xpose.msra.mxu0 %v1636
  %1642 = vmatprep.subr.mxu0 0.0
  %1643 = vmatpush1.xpose.msra.mxu0 0.0
  %1644 = vmatprep.subr.mxu0 0.0
  %1645 = vmatpush1.xpose.msra.mxu0 0.0
  %1646 = vmatprep.subr.mxu0 0.0
  %1647 = vmatpush1.xpose.msra.mxu0 0.0
  %1648 = vmatprep.subr.mxu0 0.0
  %1649 = vmatpush1.xpose.msra.mxu0 0.0
  %1650 = vmatprep.subr.mxu0 0.0
  %1651 = vmatpush1.xpose.msra.mxu0 0.0
  %1652 = vmatprep.subr.mxu0 0.0
  %1653 = vmatpush1.xpose.msra.mxu0 0.0
  %1654 = vmatprep.subr.mxu0 0.0
  %1655 = vmatpush1.xpose.msra.mxu0 0.0
  %1656 = vmatprep.subr.mxu0 0.0
  %1657 = vmatpush1.xpose.msra.mxu0 0.0
  %1658 = vmatprep.subr.mxu0 0.0
  %1659 = vmatpush1.xpose.msra.mxu0 0.0
  %1660 = vmatprep.subr.mxu0 0.0
  %1661 = vmatpush1.xpose.msra.mxu0 0.0
  %1662 = vmatprep.subr.mxu0 0.0
  %1663 = vmatpush1.xpose.msra.mxu0 0.0
  %1664 = vmatprep.subr.mxu0 0.0
  %1665 = vmatpush1.xpose.msra.mxu0 0.0
  %1666 = vmatprep.subr.mxu0 0.0
  %1667 = vmatpush1.xpose.msra.mxu0 0.0
  %1668 = vmatprep.subr.mxu0 0.0
  %1669 = vmatpush1.xpose.msra.mxu0 0.0
  %1670 = vmatprep.subr.mxu0 0.0
  %1671 = vmatpush1.xpose.msra.mxu0 0.0
  %1672 = vmatprep.subr.mxu0 0.0
  %1673 = vmatpush1.xpose.msra.mxu0 0.0
  %1674 = vmatprep.subr.mxu0 0.0
  %1675 = vmatpush1.xpose.msra.mxu0 0.0
  %1676 = vmatprep.subr.mxu0 0.0
  %1677 = vmatpush1.xpose.msra.mxu0 0.0
  %1678 = vmatprep.subr.mxu0 0.0
  %1679 = vmatpush1.xpose.msra.mxu0 0.0
  %1680 = vmatprep.subr.mxu0 0.0
  %1681 = vmatpush1.xpose.msra.mxu0 0.0
  %1682 = vmatprep.subr.mxu0 0.0
  %1683 = vmatpush1.xpose.msra.mxu0 0.0
  %1684 = vmatprep.subr.mxu0 0.0
  %1685 = vmatpush1.xpose.msra.mxu0 0.0
  %1686 = vmatprep.subr.mxu0 0.0
  %1687 = vmatpush1.xpose.msra.mxu0 0.0
  %1688 = vmatprep.subr.mxu0 0.0
  %1689 = vmatpush1.xpose.msra.mxu0 0.0
  %1690 = vmatprep.subr.mxu0 0.0
  %1691 = vmatpush1.xpose.msra.mxu0 0.0
  %1692 = vmatprep.subr.mxu0 0.0
  %1693 = vmatpush1.xpose.msra.mxu0 0.0
  %1694 = vmatprep.subr.mxu0 0.0
  %1695 = vmatpush1.xpose.msra.mxu0 0.0
  %1696 = vmatprep.subr.mxu0 0.0
  %1697 = vmatpush1.xpose.msra.mxu0 0.0
  %1698 = vmatprep.subr.mxu0 0.0
  %1699 = vmatpush1.xpose.msra.mxu0 0.0
  %1700 = vmatprep.subr.mxu0 0.0
  %1701 = vmatpush1.xpose.msra.mxu0 0.0
  %1702 = vmatprep.mubr.f32.mxu0 0.0
  %1703 = vmatmul.mubr.f32.gmra.mrb[0].mxu0 %v1630
  %v1704 = vpop.f32.mrb[0].mxu0
  %v1705 = vadd.f32 %v31, %v1704
  %v1706 = vpop.f32.mrb[0].mxu0
  %1707 = vmatprep.mubr.f32.mxu0 0.0
  %1708 = vmatmul.mubr.f32.gmra.mrb[0].mxu0 %v1632
  %v1709 = vpop.f32.mrb[0].mxu0
  %v1710 = vadd.f32 %v32, %v1709
  %v1711 = vpop.f32.mrb[0].mxu0
  %1712 = vdwg.mxu0
  %v1713 = vsel %vm226, %v1614, -inf
  %1714 = vmax.xlane.f32.xlu0 %v1713
  %v1715 = vpop.xlane.xlu0 %1714
  %v1716 = vsel %vm226, %v1619, -inf
  %1717 = vmax.xlane.f32.xlu0 %v1716
  %v1718 = vpop.xlane.xlu0 %1717
  %v1719 = vsel %vm226, %v1705, -inf
  %1720 = vmax.xlane.f32.xlu0 %v1719
  %v1721 = vpop.xlane.xlu0 %1720
  %v1722 = vsel %vm226, %v1710, -inf
  %1723 = vmax.xlane.f32.xlu0 %v1722
  %v1724 = vpop.xlane.xlu0 %1723
  %v1725 = vsub.f32 %v1614, %v1715
  %v1726 = vsub.f32 %v1619, %v1718
  %v1727 = vsub.f32 %v1705, %v1721
  %v1728 = vsub.f32 %v1710, %v1724
  %v1729 = vmul.f32 %v1725, 1.442695
  %v1730 = vpow.pop %v1729
  %v1731 = vmul.f32 %v1726, 1.442695
  %v1732 = vpow.pop %v1731
  %v1733 = vmul.f32 %v1727, 1.442695
  %v1734 = vpow.pop %v1733
  %v1735 = vmul.f32 %v1728, 1.442695
  %v1736 = vpow.pop %v1735
  %v1737 = vsel %vm226, %v1730, 0.0
  %1738 = vadd.xlane.f32.xlu0 %v1737
  %v1739 = vpop.xlane.xlu0 %1738
  %v1740 = vsel %vm226, %v1732, 0.0
  %1741 = vadd.xlane.f32.xlu0 %v1740
  %v1742 = vpop.xlane.xlu0 %1741
  %v1743 = vsel %vm226, %v1734, 0.0
  %1744 = vadd.xlane.f32.xlu0 %v1743
  %v1745 = vpop.xlane.xlu0 %1744
  %v1746 = vsel %vm226, %v1736, 0.0
  %1747 = vadd.xlane.f32.xlu0 %v1746
  %v1748 = vpop.xlane.xlu0 %1747
  %v1749 = vrcp.pop %v1739
  %v1750 = vrcp.pop %v1742
  %v1751 = vrcp.pop %v1745
  %v1752 = vrcp.pop %v1748
  %v1753 = vmul.f32 %v1730, %v1749
  %v1754 = vmul.f32 %v1732, %v1750
  %v1755 = vmul.f32 %v1734, %v1751
  %v1756 = vmul.f32 %v1736, %v1752
  %1757 = vrot.lane.b32.xlu0 %v21, 40
  %v1758 = vpop.permute.xlu0 %1757
  %1759 = vrot.lane.b32.xlu0 %v22, 40
  %v1760 = vpop.permute.xlu0 %1759
  %v1764 = vsel %vm226, %v1753, 0
  %v1767 = vsel %vm226, %v1754, 0
  %1769 = vmatprep.subr.mxu0 0.0
  %1770 = vmatpush1.msra.mxu0 %v1758
  %1771 = vmatprep.subr.mxu0 0.0
  %1772 = vmatpush1.msra.mxu0 %v1760
  %1773 = vmatprep.subr.mxu0 0.0
  %1774 = vmatpush1.msra.mxu0 0.0
  %1775 = vmatprep.subr.mxu0 0.0
  %1776 = vmatpush1.msra.mxu0 0.0
  %1777 = vmatprep.subr.mxu0 0.0
  %1778 = vmatpush1.msra.mxu0 0.0
  %1779 = vmatprep.subr.mxu0 0.0
  %1780 = vmatpush1.msra.mxu0 0.0
  %1781 = vmatprep.subr.mxu0 0.0
  %1782 = vmatpush1.msra.mxu0 0.0
  %1783 = vmatprep.subr.mxu0 0.0
  %1784 = vmatpush1.msra.mxu0 0.0
  %1785 = vmatprep.subr.mxu0 0.0
  %1786 = vmatpush1.msra.mxu0 0.0
  %1787 = vmatprep.subr.mxu0 0.0
  %1788 = vmatpush1.msra.mxu0 0.0
  %1789 = vmatprep.subr.mxu0 0.0
  %1790 = vmatpush1.msra.mxu0 0.0
  %1791 = vmatprep.subr.mxu0 0.0
  %1792 = vmatpush1.msra.mxu0 0.0
  %1793 = vmatprep.subr.mxu0 0.0
  %1794 = vmatpush1.msra.mxu0 0.0
  %1795 = vmatprep.subr.mxu0 0.0
  %1796 = vmatpush1.msra.mxu0 0.0
  %1797 = vmatprep.subr.mxu0 0.0
  %1798 = vmatpush1.msra.mxu0 0.0
  %1799 = vmatprep.subr.mxu0 0.0
  %1800 = vmatpush1.msra.mxu0 0.0
  %1801 = vmatprep.subr.mxu0 0.0
  %1802 = vmatpush1.msra.mxu0 0.0
  %1803 = vmatprep.subr.mxu0 0.0
  %1804 = vmatpush1.msra.mxu0 0.0
  %1805 = vmatprep.subr.mxu0 0.0
  %1806 = vmatpush1.msra.mxu0 0.0
  %1807 = vmatprep.subr.mxu0 0.0
  %1808 = vmatpush1.msra.mxu0 0.0
  %1809 = vmatprep.subr.mxu0 0.0
  %1810 = vmatpush1.msra.mxu0 0.0
  %1811 = vmatprep.subr.mxu0 0.0
  %1812 = vmatpush1.msra.mxu0 0.0
  %1813 = vmatprep.subr.mxu0 0.0
  %1814 = vmatpush1.msra.mxu0 0.0
  %1815 = vmatprep.subr.mxu0 0.0
  %1816 = vmatpush1.msra.mxu0 0.0
  %1817 = vmatprep.subr.mxu0 0.0
  %1818 = vmatpush1.msra.mxu0 0.0
  %1819 = vmatprep.subr.mxu0 0.0
  %1820 = vmatpush1.msra.mxu0 0.0
  %1821 = vmatprep.subr.mxu0 0.0
  %1822 = vmatpush1.msra.mxu0 0.0
  %1823 = vmatprep.subr.mxu0 0.0
  %1824 = vmatpush1.msra.mxu0 0.0
  %1825 = vmatprep.subr.mxu0 0.0
  %1826 = vmatpush1.msra.mxu0 0.0
  %1827 = vmatprep.subr.mxu0 0.0
  %1828 = vmatpush1.msra.mxu0 0.0
  %1829 = vmatprep.subr.mxu0 0.0
  %1830 = vmatpush1.msra.mxu0 0.0
  %1831 = vmatprep.subr.mxu0 0.0
  %1832 = vmatpush1.msra.mxu0 0.0
  %1833 = vmatprep.mubr.f32.mxu0 0.0
  %1834 = vmatmul.mubr.f32.gmra.mrb[0].mxu0 %v1764
  %v1835 = vpop.f32.mrb[0].mxu0
  %v1836 = vadd.f32 0.0, %v1835
  %v1837 = vpop.f32.mrb[0].mxu0
  %1838 = vmatprep.mubr.f32.mxu0 0.0
  %1839 = vmatmul.mubr.f32.gmra.mrb[0].mxu0 %v1767
  %v1840 = vpop.f32.mrb[0].mxu0
  %v1841 = vadd.f32 0.0, %v1840
  %v1842 = vpop.f32.mrb[0].mxu0
  %1843 = vdwg.mxu0
  %1844 = vrot.lane.b32.xlu0 %v23, 40
  %v1845 = vpop.permute.xlu0 %1844
  %1846 = vrot.lane.b32.xlu0 %v24, 40
  %v1847 = vpop.permute.xlu0 %1846
  %v1851 = vsel %vm226, %v1755, 0
  %v1854 = vsel %vm226, %v1756, 0
  %1856 = vmatprep.subr.mxu0 0.0
  %1857 = vmatpush1.msra.mxu0 %v1845
  %1858 = vmatprep.subr.mxu0 0.0
  %1859 = vmatpush1.msra.mxu0 %v1847
  %1860 = vmatprep.subr.mxu0 0.0
  %1861 = vmatpush1.msra.mxu0 0.0
  %1862 = vmatprep.subr.mxu0 0.0
  %1863 = vmatpush1.msra.mxu0 0.0
  %1864 = vmatprep.subr.mxu0 0.0
  %1865 = vmatpush1.msra.mxu0 0.0
  %1866 = vmatprep.subr.mxu0 0.0
  %1867 = vmatpush1.msra.mxu0 0.0
  %1868 = vmatprep.subr.mxu0 0.0
  %1869 = vmatpush1.msra.mxu0 0.0
  %1870 = vmatprep.subr.mxu0 0.0
  %1871 = vmatpush1.msra.mxu0 0.0
  %1872 = vmatprep.subr.mxu0 0.0
  %1873 = vmatpush1.msra.mxu0 0.0
  %1874 = vmatprep.subr.mxu0 0.0
  %1875 = vmatpush1.msra.mxu0 0.0
  %1876 = vmatprep.subr.mxu0 0.0
  %1877 = vmatpush1.msra.mxu0 0.0
  %1878 = vmatprep.subr.mxu0 0.0
  %1879 = vmatpush1.msra.mxu0 0.0
  %1880 = vmatprep.subr.mxu0 0.0
  %1881 = vmatpush1.msra.mxu0 0.0
  %1882 = vmatprep.subr.mxu0 0.0
  %1883 = vmatpush1.msra.mxu0 0.0
  %1884 = vmatprep.subr.mxu0 0.0
  %1885 = vmatpush1.msra.mxu0 0.0
  %1886 = vmatprep.subr.mxu0 0.0
  %1887 = vmatpush1.msra.mxu0 0.0
  %1888 = vmatprep.subr.mxu0 0.0
  %1889 = vmatpush1.msra.mxu0 0.0
  %1890 = vmatprep.subr.mxu0 0.0
  %1891 = vmatpush1.msra.mxu0 0.0
  %1892 = vmatprep.subr.mxu0 0.0
  %1893 = vmatpush1.msra.mxu0 0.0
  %1894 = vmatprep.subr.mxu0 0.0
  %1895 = vmatpush1.msra.mxu0 0.0
  %1896 = vmatprep.subr.mxu0 0.0
  %1897 = vmatpush1.msra.mxu0 0.0
  %1898 = vmatprep.subr.mxu0 0.0
  %1899 = vmatpush1.msra.mxu0 0.0
  %1900 = vmatprep.subr.mxu0 0.0
  %1901 = vmatpush1.msra.mxu0 0.0
  %1902 = vmatprep.subr.mxu0 0.0
  %1903 = vmatpush1.msra.mxu0 0.0
  %1904 = vmatprep.subr.mxu0 0.0
  %1905 = vmatpush1.msra.mxu0 0.0
  %1906 = vmatprep.subr.mxu0 0.0
  %1907 = vmatpush1.msra.mxu0 0.0
  %1908 = vmatprep.subr.mxu0 0.0
  %1909 = vmatpush1.msra.mxu0 0.0
  %1910 = vmatprep.subr.mxu0 0.0
  %1911 = vmatpush1.msra.mxu0 0.0
  %1912 = vmatprep.subr.mxu0 0.0
  %1913 = vmatpush1.msra.mxu0 0.0
  %1914 = vmatprep.subr.mxu0 0.0
  %1915 = vmatpush1.msra.mxu0 0.0
  %1916 = vmatprep.subr.mxu0 0.0
  %1917 = vmatpush1.msra.mxu0 0.0
  %1918 = vmatprep.subr.mxu0 0.0
  %1919 = vmatpush1.msra.mxu0 0.0
  %1920 = vmatprep.mubr.f32.mxu0 0.0
  %1921 = vmatmul.mubr.f32.gmra.mrb[0].mxu0 %v1851
  %v1922 = vpop.f32.mrb[0].mxu0
  %v1923 = vadd.f32 0.0, %v1922
  %v1924 = vpop.f32.mrb[0].mxu0
  %1925 = vmatprep.mubr.f32.mxu0 0.0
  %1926 = vmatmul.mubr.f32.gmra.mrb[0].mxu0 %v1854
  %v1927 = vpop.f32.mrb[0].mxu0
  %v1928 = vadd.f32 0.0, %v1927
  %v1929 = vpop.f32.mrb[0].mxu0
  %1930 = vdwg.mxu0
  %v1931 = vpack.c.bf16 %v1841, %v1836
  %v1932 = vpack.c.bf16 %v1928, %v1923
  %v1934 = vrot.slane %v38, 4
  %v1936 = vsel %vm49, %v1931, 0
  %v1939 = vsel %vm854, %v1934, 0
  %1941 = vmatprep.subr.bf16.mxu0 0
  %1942 = vmatpush1.bf16.msra.mxu0 %v1939
  %1943 = vmatprep.subr.bf16.mxu0 0
  %1944 = vmatpush1.bf16.msra.mxu0 0
  %1945 = vmatprep.subr.bf16.mxu0 0
  %1946 = vmatpush1.bf16.msra.mxu0 0
  %1947 = vmatprep.subr.bf16.mxu0 0
  %1948 = vmatpush1.bf16.msra.mxu0 0
  %1949 = vmatprep.subr.bf16.mxu0 0
  %1950 = vmatpush1.bf16.msra.mxu0 0
  %1951 = vmatprep.subr.bf16.mxu0 0
  %1952 = vmatpush1.bf16.msra.mxu0 0
  %1953 = vmatprep.subr.bf16.mxu0 0
  %1954 = vmatpush1.bf16.msra.mxu0 0
  %1955 = vmatprep.subr.bf16.mxu0 0
  %1956 = vmatpush1.bf16.msra.mxu0 0
  %1957 = vmatprep.subr.bf16.mxu0 0
  %1958 = vmatpush1.bf16.msra.mxu0 0
  %1959 = vmatprep.subr.bf16.mxu0 0
  %1960 = vmatpush1.bf16.msra.mxu0 0
  %1961 = vmatprep.subr.bf16.mxu0 0
  %1962 = vmatpush1.bf16.msra.mxu0 0
  %1963 = vmatprep.subr.bf16.mxu0 0
  %1964 = vmatpush1.bf16.msra.mxu0 0
  %1965 = vmatprep.subr.bf16.mxu0 0
  %1966 = vmatpush1.bf16.msra.mxu0 0
  %1967 = vmatprep.subr.bf16.mxu0 0
  %1968 = vmatpush1.bf16.msra.mxu0 0
  %1969 = vmatprep.subr.bf16.mxu0 0
  %1970 = vmatpush1.bf16.msra.mxu0 0
  %1971 = vmatprep.subr.bf16.mxu0 0
  %1972 = vmatpush1.bf16.msra.mxu0 0
  %1973 = vmatprep.mubr.bf16.mxu0 0
  %1974 = vmatmul.mubr.bf16.gmra.mrb[0].mxu0 %v1936
  %v1975 = vpop.f32.mrb[0].mxu0
  %v1976 = vadd.f32 0.0, %v1975
  %v1977 = vpop.f32.mrb[0].mxu0
  %v1978 = vpop.f32.mrb[0].mxu0
  %v1979 = vadd.f32 0.0, %v1978
  %v1980 = vpop.f32.mrb[0].mxu0
  %1981 = vdwg.mxu0
  %v1983 = vsel %vm49, %v1932, 0
  %1985 = vmatprep.subr.bf16.mxu0 0
  %1986 = vmatpush1.bf16.msra.mxu0 %v1939
  %1987 = vmatprep.subr.bf16.mxu0 0
  %1988 = vmatpush1.bf16.msra.mxu0 0
  %1989 = vmatprep.subr.bf16.mxu0 0
  %1990 = vmatpush1.bf16.msra.mxu0 0
  %1991 = vmatprep.subr.bf16.mxu0 0
  %1992 = vmatpush1.bf16.msra.mxu0 0
  %1993 = vmatprep.subr.bf16.mxu0 0
  %1994 = vmatpush1.bf16.msra.mxu0 0
  %1995 = vmatprep.subr.bf16.mxu0 0
  %1996 = vmatpush1.bf16.msra.mxu0 0
  %1997 = vmatprep.subr.bf16.mxu0 0
  %1998 = vmatpush1.bf16.msra.mxu0 0
  %1999 = vmatprep.subr.bf16.mxu0 0
  %2000 = vmatpush1.bf16.msra.mxu0 0
  %2001 = vmatprep.subr.bf16.mxu0 0
  %2002 = vmatpush1.bf16.msra.mxu0 0
  %2003 = vmatprep.subr.bf16.mxu0 0
  %2004 = vmatpush1.bf16.msra.mxu0 0
  %2005 = vmatprep.subr.bf16.mxu0 0
  %2006 = vmatpush1.bf16.msra.mxu0 0
  %2007 = vmatprep.subr.bf16.mxu0 0
  %2008 = vmatpush1.bf16.msra.mxu0 0
  %2009 = vmatprep.subr.bf16.mxu0 0
  %2010 = vmatpush1.bf16.msra.mxu0 0
  %2011 = vmatprep.subr.bf16.mxu0 0
  %2012 = vmatpush1.bf16.msra.mxu0 0
  %2013 = vmatprep.subr.bf16.mxu0 0
  %2014 = vmatpush1.bf16.msra.mxu0 0
  %2015 = vmatprep.subr.bf16.mxu0 0
  %2016 = vmatpush1.bf16.msra.mxu0 0
  %2017 = vmatprep.mubr.bf16.mxu0 0
  %2018 = vmatmul.mubr.bf16.gmra.mrb[0].mxu0 %v1983
  %v2019 = vpop.f32.mrb[0].mxu0
  %v2020 = vadd.f32 0.0, %v2019
  %v2021 = vpop.f32.mrb[0].mxu0
  %v2022 = vpop.f32.mrb[0].mxu0
  %v2023 = vadd.f32 0.0, %v2022
  %v2024 = vpop.f32.mrb[0].mxu0
  %2025 = vdwg.mxu0
  %v2026 = vadd.f32 %v1527, %v1976
  %v2027 = vadd.f32 %v1528, %v1979
  %v2028 = vadd.f32 %v1529, %v2020
  %v2029 = vadd.f32 %v1530, %v2023
  %v2030 = vld [vmem:[%s1] sm:$0xff]
  %v2031 = vld [vmem:[%s1 + $0x8] sm:$0xff]
  %v2032 = vld [vmem:[%s1 + $0x10] sm:$0xff]
  %v2033 = vld [vmem:[%s1 + $0x18] sm:$0xff]
  %v2034 = vadd.f32 %v2030, %v2026
  %v2035 = vadd.f32 %v2031, %v2027
  %v2036 = vadd.f32 %v2032, %v2028
  %v2037 = vadd.f32 %v2033, %v2029
  %v2038 = vld [vmem:[%s4] sm:$0x1]
  %v2040 = vlaneseq
  %v2041 = vshrl.u32 %v2040, 7
  %v2042 = vsub.s32 0, %v2041
  %v2043 = vrot.slane %v2038, %v2042
  %v2045 = vadd.f32 %v2034, %v2043
  %v2046 = vadd.f32 %v2035, %v2043
  %v2047 = vadd.f32 %v2036, %v2043
  %v2048 = vadd.f32 %v2037, %v2043
  %vm2049 = vcmask 261120
  %2050 = vst.msk [vmem:[%s5] sm:$0xff] %vm2049, %v2045
  %2051 = vst.msk [vmem:[%s5 + $0x8] sm:$0xff] %vm2049, %v2046
  %2052 = vst.msk [vmem:[%s5 + $0x10] sm:$0xff] %vm2049, %v2047
  %2053 = vst.msk [vmem:[%s5 + $0x18] sm:$0xff] %vm2049, %v2048
  // Predicated region
  $region22: #{swin_reid_forward.8} parent=0 // pred_check
    _
  $region23: #{swin_reid_forward.8} parent=0 // pred_check_branch
    %2055 = sbr.rel (0) target = $region25
  $region24: #{swin_reid_forward.8} parent=0 // pred_region
    _
  $region25: #{swin_reid_forward.8} parent=0 // pred_fallthru
    _
  // Predicated region
  $region26: #{swin_reid_forward.8} parent=0 // pred_check
    _
  $region27: #{swin_reid_forward.8} parent=0 // pred_check_branch
    %2057 = sbr.rel (0) target = $region29
  $region28: #{swin_reid_forward.8} parent=0 // pred_region
    _
  $region29: #{swin_reid_forward.8} parent=0 // pred_fallthru
    _

// kernel: swin_reid_forward.10
$region0: #{swin_reid_forward.10}
  #allocation0 [shape = 'u32[]', space=smem, size = 0x4, offset = 0x4, fixed_abs, tag = 'smem constant byte address 0x4 - core index']
  #allocation1 [shape = 'u32[144,128]{1,0:T(1,128)}', space=vmem, size = 0x12000, scoped, tag = 'internal scratch']
  %s0 = inlined_call_operand.vmem [shape: f32[2,16,32], index: 0, kind: input, shape index: {}]
  %s1 = inlined_call_operand.vmem [shape: f32[1,1,32], index: 1, kind: input, shape index: {}]
  %s2 = inlined_call_operand.vmem [shape: f32[1,1,32], index: 2, kind: input, shape index: {}]
  %s3 = inlined_call_operand.vmem [shape: f32[2,32], index: 3, kind: output, shape index: {}]
  %s4 = sld [smem:[#allocation0]]
  $region22: #{swin_reid_forward.10} parent=0
    _
  %s6 = ssub.s32 1, %s4
  %s7 = scalar_select 0, %s6, %s4
  // Predicated region
  $region2: #{swin_reid_forward.10} parent=0 // pred_check
    _
  $region3: #{swin_reid_forward.10} parent=0 // pred_check_branch
    %9 = sbr.rel (0) target = $region5
  $region4: #{swin_reid_forward.10} parent=0 // pred_region
    _
  $region5: #{swin_reid_forward.10} parent=0 // pred_fallthru
    _
  // Predicated region
  $region6: #{swin_reid_forward.10} parent=0 // pred_check
    _
  $region7: #{swin_reid_forward.10} parent=0 // pred_check_branch
    %11 = sbr.rel (0) target = $region9
  $region8: #{swin_reid_forward.10} parent=0 // pred_region
    _
  $region9: #{swin_reid_forward.10} parent=0 // pred_fallthru
    _
  // Predicated region
  $region10: #{swin_reid_forward.10} parent=0 // pred_check
    _
  $region11: #{swin_reid_forward.10} parent=0 // pred_check_branch
    %13 = sbr.rel (0) target = $region13
  $region12: #{swin_reid_forward.10} parent=0 // pred_region
    _
  $region13: #{swin_reid_forward.10} parent=0 // pred_fallthru
    _
  %v14 = vld [vmem:[%s0] sm:$0xff]
  %v15 = vld [vmem:[%s0 + $0x8] sm:$0xff]
  %v16 = vld [vmem:[%s0 + $0x10] sm:$0xff]
  %v17 = vld [vmem:[%s0 + $0x18] sm:$0xff]
  %vm18 = vcmask 261120
  %v19 = vsel %vm18, %v14, 0.0
  %20 = vadd.xlane.f32.xlu0 %v19
  %v21 = vpop.xlane.xlu0 %20
  %v22 = vsel %vm18, %v15, 0.0
  %23 = vadd.xlane.f32.xlu0 %v22
  %v24 = vpop.xlane.xlu0 %23
  %v25 = vsel %vm18, %v16, 0.0
  %26 = vadd.xlane.f32.xlu0 %v25
  %v27 = vpop.xlane.xlu0 %26
  %v28 = vsel %vm18, %v17, 0.0
  %29 = vadd.xlane.f32.xlu0 %v28
  %v30 = vpop.xlane.xlu0 %29
  %v31 = vrcp.pop 32.0
  %v32 = vmul.f32 %v21, %v31
  %v33 = vmul.f32 %v24, %v31
  %v34 = vmul.f32 %v27, %v31
  %v35 = vmul.f32 %v30, %v31
  %v36 = vsub.f32 %v14, %v32
  %v37 = vsub.f32 %v15, %v33
  %v38 = vsub.f32 %v16, %v34
  %v39 = vsub.f32 %v17, %v35
  %v40 = vmul.f32 %v36, %v36
  %v41 = vmul.f32 %v37, %v37
  %v42 = vmul.f32 %v38, %v38
  %v43 = vmul.f32 %v39, %v39
  %v44 = vsel %vm18, %v40, 0.0
  %45 = vadd.xlane.f32.xlu0 %v44
  %v46 = vpop.xlane.xlu0 %45
  %v47 = vsel %vm18, %v41, 0.0
  %48 = vadd.xlane.f32.xlu0 %v47
  %v49 = vpop.xlane.xlu0 %48
  %v50 = vsel %vm18, %v42, 0.0
  %51 = vadd.xlane.f32.xlu0 %v50
  %v52 = vpop.xlane.xlu0 %51
  %v53 = vsel %vm18, %v43, 0.0
  %54 = vadd.xlane.f32.xlu0 %v53
  %v55 = vpop.xlane.xlu0 %54
  %v56 = vmul.f32 %v46, %v31
  %v57 = vmul.f32 %v49, %v31
  %v58 = vmul.f32 %v52, %v31
  %v59 = vmul.f32 %v55, %v31
  %v60 = vadd.f32 %v56, 1e-05
  %v61 = vadd.f32 %v57, 1e-05
  %v62 = vadd.f32 %v58, 1e-05
  %v63 = vadd.f32 %v59, 1e-05
  %v64 = vrsqrt.pop %v60
  %v65 = vrsqrt.pop %v61
  %v66 = vrsqrt.pop %v62
  %v67 = vrsqrt.pop %v63
  %v68 = vmul.f32 %v36, %v64
  %v69 = vmul.f32 %v37, %v65
  %v70 = vmul.f32 %v38, %v66
  %v71 = vmul.f32 %v39, %v67
  %v72 = vld [vmem:[%s1] sm:$0x1]
  %v74 = vlaneseq
  %v75 = vshrl.u32 %v74, 7
  %v76 = vsub.s32 0, %v75
  %v77 = vrot.slane %v72, %v76
  %v79 = vmul.f32 %v68, %v77
  %v80 = vmul.f32 %v69, %v77
  %v81 = vmul.f32 %v70, %v77
  %v82 = vmul.f32 %v71, %v77
  %v83 = vld [vmem:[%s2] sm:$0x1]
  %v85 = vlaneseq
  %v86 = vshrl.u32 %v85, 7
  %v87 = vsub.s32 0, %v86
  %v88 = vrot.slane %v83, %v87
  %v90 = vadd.f32 %v79, %v88
  %v91 = vadd.f32 %v80, %v88
  %v92 = vadd.f32 %v81, %v88
  %v93 = vadd.f32 %v82, %v88
  %v94 = vsel %vm18, %v90, 0.0
  %v95 = vsel %vm18, %v91, 0.0
  %v96 = vadd.f32 %v94, %v95
  %v97 = vrot.slane %v96, 4
  %v98 = vadd.f32 %v96, %v97
  %v99 = vrot.slane %v98, 2
  %v100 = vadd.f32 %v98, %v99
  %v101 = vrot.slane %v100, 1
  %v102 = vadd.f32 %v100, %v101
  %v103 = vsel %vm18, %v92, 0.0
  %v104 = vsel %vm18, %v93, 0.0
  %v105 = vadd.f32 %v103, %v104
  %v106 = vrot.slane %v105, 4
  %v107 = vadd.f32 %v105, %v106
  %v108 = vrot.slane %v107, 2
  %v109 = vadd.f32 %v107, %v108
  %v110 = vrot.slane %v109, 1
  %v111 = vadd.f32 %v109, %v110
  %v112 = vrcp.pop 16.0
  %v113 = vmul.f32 %v102, %v112
  %v114 = vmul.f32 %v111, %v112
  %vm117 = vcmask 1041409
  %v118 = vsel %vm117, %v114, %v113
  %vm120 = vcmask 254976
  %121 = vst.msk [vmem:[%s3] sm:$0x3] %vm120, %v118
  // Predicated region
  $region14: #{swin_reid_forward.10} parent=0 // pred_check
    _
  $region15: #{swin_reid_forward.10} parent=0 // pred_check_branch
    %123 = sbr.rel (0) target = $region17
  $region16: #{swin_reid_forward.10} parent=0 // pred_region
    _
  $region17: #{swin_reid_forward.10} parent=0 // pred_fallthru
    _
  // Predicated region
  $region18: #{swin_reid_forward.10} parent=0 // pred_check
    _
  $region19: #{swin_reid_forward.10} parent=0 // pred_check_branch
    %125 = sbr.rel (0) target = $region21
  $region20: #{swin_reid_forward.10} parent=0 // pred_region
    _
  $region21: #{swin_reid_forward.10} parent=0 // pred_fallthru
    _

// kernel: swin_reid_forward.11
$region0: #{swin_reid_forward.11}
  #allocation0 [shape = 'u32[]', space=smem, size = 0x4, offset = 0x4, fixed_abs, tag = 'smem constant byte address 0x4 - core index']
  #allocation1 [shape = 'u32[144,128]{1,0:T(1,128)}', space=vmem, size = 0x12000, scoped, tag = 'internal scratch']
  %s0 = inlined_call_operand.vmem [shape: f32[2,32], index: 0, kind: input, shape index: {}]
  %s1 = inlined_call_operand.vmem [shape: f32[32,64], index: 1, kind: input, shape index: {}]
  %s2 = inlined_call_operand.vmem [shape: f32[1,64], index: 2, kind: input, shape index: {}]
  %s3 = inlined_call_operand.vmem [shape: f32[1,64], index: 3, kind: input, shape index: {}]
  %s4 = inlined_call_operand.vmem [shape: f32[1,64], index: 4, kind: input, shape index: {}]
  %s5 = inlined_call_operand.vmem [shape: f32[64,128], index: 5, kind: input, shape index: {}]
  %s6 = inlined_call_operand.hbm [shape: f32[2,64], index: 6, kind: output, shape index: {0}]
  %s7 = inlined_call_operand.hbm [shape: f32[2,64], index: 7, kind: output, shape index: {1}]
  %s8 = inlined_call_operand.hbm [shape: f32[2,128], index: 8, kind: output, shape index: {2}]
  %9 = xla_tuple %s6, %s7, %s8
  %s10 = sld [smem:[#allocation0]]
  $region50: #{swin_reid_forward.11} parent=0
    _
  %s12 = ssub.s32 1, %s10
  %s13 = scalar_select 0, %s12, %s10
  $region1: #{swin_reid_forward.11} parent=0
    #allocation2 [shape = 'u8[1024]{0}', space=vmem, size = 0x400, scoped, tag = 'output window, operand 0, single buffered']
    #allocation3 [shape = 's32[1]{0}', space=sflag, size = 0x4, scoped, tag = 'scoped memory for swin_reid_forward.11']
    #allocation4 [shape = 'u8[1024]{0}', space=vmem, size = 0x400, scoped, tag = 'output window, operand 1, single buffered']
    #allocation5 [shape = 's32[1]{0}', space=sflag, size = 0x4, scoped, tag = 'scoped memory for swin_reid_forward.11']
    #allocation6 [shape = 'u8[1024]{0}', space=vmem, size = 0x400, scoped, tag = 'output window, operand 2, single buffered']
    %14 = vsyncpa [#allocation3], 0
    %15 = vsyncpa [#allocation5], 0
    // Predicated region
    $region2: #{swin_reid_forward.11} parent=1 // pred_check
      _
    $region3: #{swin_reid_forward.11} parent=1 // pred_check_branch
      %17 = sbr.rel (0) target = $region5
    $region4: #{swin_reid_forward.11} parent=1 // pred_region
      _
    $region5: #{swin_reid_forward.11} parent=1 // pred_fallthru
      _
    // Predicated region
    $region6: #{swin_reid_forward.11} parent=1 // pred_check
      _
    $region7: #{swin_reid_forward.11} parent=1 // pred_check_branch
      %19 = sbr.rel (0) target = $region9
    $region8: #{swin_reid_forward.11} parent=1 // pred_region
      _
    $region9: #{swin_reid_forward.11} parent=1 // pred_fallthru
      _
    // Predicated region
    $region10: #{swin_reid_forward.11} parent=1 // pred_check
      _
    $region11: #{swin_reid_forward.11} parent=1 // pred_check_branch
      %21 = sbr.rel (0) target = $region13
    $region12: #{swin_reid_forward.11} parent=1 // pred_region
      _
    $region13: #{swin_reid_forward.11} parent=1 // pred_fallthru
      _
    // Predicated region
    $region14: #{swin_reid_forward.11} parent=1 // pred_check
      _
    $region15: #{swin_reid_forward.11} parent=1 // pred_check_branch
      %23 = sbr.rel (0) target = $region17
    $region16: #{swin_reid_forward.11} parent=1 // pred_region
      _
    $region17: #{swin_reid_forward.11} parent=1 // pred_fallthru
      _
    // Predicated region
    $region18: #{swin_reid_forward.11} parent=1 // pred_check
      _
    $region19: #{swin_reid_forward.11} parent=1 // pred_check_branch
      %25 = sbr.rel (0) target = $region21
    $region20: #{swin_reid_forward.11} parent=1 // pred_region
      _
    $region21: #{swin_reid_forward.11} parent=1 // pred_fallthru
      _
    // Predicated region
    $region22: #{swin_reid_forward.11} parent=1 // pred_check
      _
    $region23: #{swin_reid_forward.11} parent=1 // pred_check_branch
      %27 = sbr.rel (0) target = $region25
    $region24: #{swin_reid_forward.11} parent=1 // pred_region
      _
    $region25: #{swin_reid_forward.11} parent=1 // pred_fallthru
      _
    %v28 = vld [vmem:[%s0] sm:$0x3]
    %v29 = vld [vmem:[%s1] sm:$0xff]
    %v30 = vld [vmem:[%s1 + $0x8] sm:$0xff]
    %v31 = vld [vmem:[%s1 + $0x10] sm:$0xff]
    %v32 = vld [vmem:[%s1 + $0x18] sm:$0xff]
    %v33 = vld [vmem:[%s2] sm:$0x1]
    %v35 = vlaneseq
    %v36 = vshrl.u32 %v35, 7
    %v37 = vsub.s32 0, %v36
    %v38 = vrot.slane %v33, %v37
    %vm40 = vcmask 261120
    %v42 = vsel %vm40, %v28, 0
    %44 = vmatprep.subr.mxu0 0.0
    %45 = vmatpush1.msra.mxu0 %v29
    %46 = vmatprep.subr.mxu0 0.0
    %47 = vmatpush1.msra.mxu0 %v30
    %48 = vmatprep.subr.mxu0 0.0
    %49 = vmatpush1.msra.mxu0 %v31
    %50 = vmatprep.subr.mxu0 0.0
    %51 = vmatpush1.msra.mxu0 %v32
    %52 = vmatprep.subr.mxu0 0.0
    %53 = vmatpush1.msra.mxu0 0.0
    %54 = vmatprep.subr.mxu0 0.0
    %55 = vmatpush1.msra.mxu0 0.0
    %56 = vmatprep.subr.mxu0 0.0
    %57 = vmatpush1.msra.mxu0 0.0
    %58 = vmatprep.subr.mxu0 0.0
    %59 = vmatpush1.msra.mxu0 0.0
    %60 = vmatprep.subr.mxu0 0.0
    %61 = vmatpush1.msra.mxu0 0.0
    %62 = vmatprep.subr.mxu0 0.0
    %63 = vmatpush1.msra.mxu0 0.0
    %64 = vmatprep.subr.mxu0 0.0
    %65 = vmatpush1.msra.mxu0 0.0
    %66 = vmatprep.subr.mxu0 0.0
    %67 = vmatpush1.msra.mxu0 0.0
    %68 = vmatprep.subr.mxu0 0.0
    %69 = vmatpush1.msra.mxu0 0.0
    %70 = vmatprep.subr.mxu0 0.0
    %71 = vmatpush1.msra.mxu0 0.0
    %72 = vmatprep.subr.mxu0 0.0
    %73 = vmatpush1.msra.mxu0 0.0
    %74 = vmatprep.subr.mxu0 0.0
    %75 = vmatpush1.msra.mxu0 0.0
    %76 = vmatprep.subr.mxu0 0.0
    %77 = vmatpush1.msra.mxu0 0.0
    %78 = vmatprep.subr.mxu0 0.0
    %79 = vmatpush1.msra.mxu0 0.0
    %80 = vmatprep.subr.mxu0 0.0
    %81 = vmatpush1.msra.mxu0 0.0
    %82 = vmatprep.subr.mxu0 0.0
    %83 = vmatpush1.msra.mxu0 0.0
    %84 = vmatprep.subr.mxu0 0.0
    %85 = vmatpush1.msra.mxu0 0.0
    %86 = vmatprep.subr.mxu0 0.0
    %87 = vmatpush1.msra.mxu0 0.0
    %88 = vmatprep.subr.mxu0 0.0
    %89 = vmatpush1.msra.mxu0 0.0
    %90 = vmatprep.subr.mxu0 0.0
    %91 = vmatpush1.msra.mxu0 0.0
    %92 = vmatprep.subr.mxu0 0.0
    %93 = vmatpush1.msra.mxu0 0.0
    %94 = vmatprep.subr.mxu0 0.0
    %95 = vmatpush1.msra.mxu0 0.0
    %96 = vmatprep.subr.mxu0 0.0
    %97 = vmatpush1.msra.mxu0 0.0
    %98 = vmatprep.subr.mxu0 0.0
    %99 = vmatpush1.msra.mxu0 0.0
    %100 = vmatprep.subr.mxu0 0.0
    %101 = vmatpush1.msra.mxu0 0.0
    %102 = vmatprep.subr.mxu0 0.0
    %103 = vmatpush1.msra.mxu0 0.0
    %104 = vmatprep.subr.mxu0 0.0
    %105 = vmatpush1.msra.mxu0 0.0
    %106 = vmatprep.subr.mxu0 0.0
    %107 = vmatpush1.msra.mxu0 0.0
    %108 = vmatprep.mubr.f32.mxu0 0.0
    %109 = vmatmul.mubr.f32.gmra.mrb[0].mxu0 %v42
    %v110 = vpop.f32.mrb[0].mxu0
    %v111 = vadd.f32 %v38, %v110
    %v112 = vpop.f32.mrb[0].mxu0
    %113 = vdwg.mxu0
    %vm114 = vcmask 517120
    %v115 = vsel %vm114, %v111, 0.0
    %v116 = vrot.slane %v115, 4
    %v117 = vadd.f32 %v115, %v116
    %v118 = vrot.slane %v117, 2
    %v119 = vadd.f32 %v117, %v118
    %v120 = vrot.slane %v119, 1
    %v121 = vadd.f32 %v119, %v120
    %v122 = vrcp.pop 2.0
    %v123 = vmul.f32 %v121, %v122
    %v124 = vsub.f32 %v111, %v123
    %v125 = vmul.f32 %v124, %v124
    %v126 = vsel %vm114, %v125, 0.0
    %v127 = vrot.slane %v126, 4
    %v128 = vadd.f32 %v126, %v127
    %v129 = vrot.slane %v128, 2
    %v130 = vadd.f32 %v128, %v129
    %v131 = vrot.slane %v130, 1
    %v132 = vadd.f32 %v130, %v131
    %v133 = vmul.f32 %v132, %v122
    %v134 = vadd.f32 %v133, 1e-05
    %v135 = vrsqrt.pop %v134
    %v136 = vmul.f32 %v124, %v135
    %v137 = vld [vmem:[%s3] sm:$0x1]
    %v139 = vlaneseq
    %v140 = vshrl.u32 %v139, 7
    %v141 = vsub.s32 0, %v140
    %v142 = vrot.slane %v137, %v141
    %v144 = vmul.f32 %v136, %v142
    %v145 = vld [vmem:[%s4] sm:$0x1]
    %v147 = vlaneseq
    %v148 = vshrl.u32 %v147, 7
    %v149 = vsub.s32 0, %v148
    %v150 = vrot.slane %v145, %v149
    %v152 = vadd.f32 %v144, %v150
    %153 = vst.msk [vmem:[#allocation2] sm:$0x3] %vm114, %v111
    %154 = vst.msk [vmem:[#allocation4] sm:$0x3] %vm114, %v152
    %v155 = vld [vmem:[%s5] sm:$0xff]
    %v156 = vld [vmem:[%s5 + $0x8] sm:$0xff]
    %v157 = vld [vmem:[%s5 + $0x10] sm:$0xff]
    %v158 = vld [vmem:[%s5 + $0x18] sm:$0xff]
    %v159 = vld [vmem:[%s5 + $0x20] sm:$0xff]
    %v160 = vld [vmem:[%s5 + $0x28] sm:$0xff]
    %v161 = vld [vmem:[%s5 + $0x30] sm:$0xff]
    %v162 = vld [vmem:[%s5 + $0x38] sm:$0xff]
    %vm163 = vcmask 523264
    %v165 = vsel %vm163, %v152, 0
    %167 = vmatprep.subr.mxu0 0.0
    %168 = vmatpush1.msra.mxu0 %v155
    %169 = vmatprep.subr.mxu0 0.0
    %170 = vmatpush1.msra.mxu0 %v156
    %171 = vmatprep.subr.mxu0 0.0
    %172 = vmatpush1.msra.mxu0 %v157
    %173 = vmatprep.subr.mxu0 0.0
    %174 = vmatpush1.msra.mxu0 %v158
    %175 = vmatprep.subr.mxu0 0.0
    %176 = vmatpush1.msra.mxu0 %v159
    %177 = vmatprep.subr.mxu0 0.0
    %178 = vmatpush1.msra.mxu0 %v160
    %179 = vmatprep.subr.mxu0 0.0
    %180 = vmatpush1.msra.mxu0 %v161
    %181 = vmatprep.subr.mxu0 0.0
    %182 = vmatpush1.msra.mxu0 %v162
    %183 = vmatprep.subr.mxu0 0.0
    %184 = vmatpush1.msra.mxu0 0.0
    %185 = vmatprep.subr.mxu0 0.0
    %186 = vmatpush1.msra.mxu0 0.0
    %187 = vmatprep.subr.mxu0 0.0
    %188 = vmatpush1.msra.mxu0 0.0
    %189 = vmatprep.subr.mxu0 0.0
    %190 = vmatpush1.msra.mxu0 0.0
    %191 = vmatprep.subr.mxu0 0.0
    %192 = vmatpush1.msra.mxu0 0.0
    %193 = vmatprep.subr.mxu0 0.0
    %194 = vmatpush1.msra.mxu0 0.0
    %195 = vmatprep.subr.mxu0 0.0
    %196 = vmatpush1.msra.mxu0 0.0
    %197 = vmatprep.subr.mxu0 0.0
    %198 = vmatpush1.msra.mxu0 0.0
    %199 = vmatprep.subr.mxu0 0.0
    %200 = vmatpush1.msra.mxu0 0.0
    %201 = vmatprep.subr.mxu0 0.0
    %202 = vmatpush1.msra.mxu0 0.0
    %203 = vmatprep.subr.mxu0 0.0
    %204 = vmatpush1.msra.mxu0 0.0
    %205 = vmatprep.subr.mxu0 0.0
    %206 = vmatpush1.msra.mxu0 0.0
    %207 = vmatprep.subr.mxu0 0.0
    %208 = vmatpush1.msra.mxu0 0.0
    %209 = vmatprep.subr.mxu0 0.0
    %210 = vmatpush1.msra.mxu0 0.0
    %211 = vmatprep.subr.mxu0 0.0
    %212 = vmatpush1.msra.mxu0 0.0
    %213 = vmatprep.subr.mxu0 0.0
    %214 = vmatpush1.msra.mxu0 0.0
    %215 = vmatprep.subr.mxu0 0.0
    %216 = vmatpush1.msra.mxu0 0.0
    %217 = vmatprep.subr.mxu0 0.0
    %218 = vmatpush1.msra.mxu0 0.0
    %219 = vmatprep.subr.mxu0 0.0
    %220 = vmatpush1.msra.mxu0 0.0
    %221 = vmatprep.subr.mxu0 0.0
    %222 = vmatpush1.msra.mxu0 0.0
    %223 = vmatprep.subr.mxu0 0.0
    %224 = vmatpush1.msra.mxu0 0.0
    %225 = vmatprep.subr.mxu0 0.0
    %226 = vmatpush1.msra.mxu0 0.0
    %227 = vmatprep.subr.mxu0 0.0
    %228 = vmatpush1.msra.mxu0 0.0
    %229 = vmatprep.subr.mxu0 0.0
    %230 = vmatpush1.msra.mxu0 0.0
    %231 = vmatprep.mubr.f32.mxu0 0.0
    %232 = vmatmul.mubr.f32.gmra.mrb[0].mxu0 %v165
    %v233 = vpop.f32.mrb[0].mxu0
    %v234 = vadd.f32 0.0, %v233
    %v235 = vpop.f32.mrb[0].mxu0
    %236 = vdwg.mxu0
    %237 = vst [vmem:[#allocation6] sm:$0x3] %v234
    // Predicated region
    $region26: #{swin_reid_forward.11} parent=1 // pred_check
      _
    $region27: #{swin_reid_forward.11} parent=1 // pred_check_branch
      %239 = sbr.rel (0) target = $region29
    $region28: #{swin_reid_forward.11} parent=1 // pred_region
      %s241 = ssub.s32 32, 32
      %242 = vsyncadd [#allocation3], %s241
      %s244 = sshll.u32 [#allocation2], 4
      %s245 = int_to_ptr.vmem [resolvable:$true] %s244
      %247 = dma.vmem_to_hbm [thread:$0]  %s245, 32, %s6, [#allocation3]
    $region29: #{swin_reid_forward.11} parent=1 // pred_fallthru
      _
    // Predicated region
    $region30: #{swin_reid_forward.11} parent=1 // pred_check
      _
    $region31: #{swin_reid_forward.11} parent=1 // pred_check_branch
      %249 = sbr.rel (0) target = $region33
    $region32: #{swin_reid_forward.11} parent=1 // pred_region
      %s251 = ssub.s32 32, 32
      %252 = vsyncadd [#allocation5], %s251
      %s254 = sshll.u32 [#allocation4], 4
      %s255 = int_to_ptr.vmem [resolvable:$true] %s254
      %257 = dma.vmem_to_hbm [thread:$0]  %s255, 32, %s7, [#allocation5]
    $region33: #{swin_reid_forward.11} parent=1 // pred_fallthru
      _
    // Predicated region
    $region34: #{swin_reid_forward.11} parent=1 // pred_check
      _
    $region35: #{swin_reid_forward.11} parent=1 // pred_check_branch
      %259 = sbr.rel (0) target = $region37
    $region36: #{swin_reid_forward.11} parent=1 // pred_region
      %s261 = ssub.s32 32, 32
      %262 = vsyncadd [#allocation5], %s261
      %s264 = sshll.u32 [#allocation6], 4
      %s265 = int_to_ptr.vmem [resolvable:$true] %s264
      %267 = dma.vmem_to_hbm [thread:$0]  %s265, 32, %s8, [#allocation5]
    $region37: #{swin_reid_forward.11} parent=1 // pred_fallthru
      _
    // Predicated region
    $region38: #{swin_reid_forward.11} parent=1 // pred_check
      _
    $region39: #{swin_reid_forward.11} parent=1 // pred_check_branch
      %269 = sbr.rel (0) target = $region41
    $region40: #{swin_reid_forward.11} parent=1 // pred_region
      %270 = dma.done [#allocation3], 32
    $region41: #{swin_reid_forward.11} parent=1 // pred_fallthru
      _
    // Predicated region
    $region42: #{swin_reid_forward.11} parent=1 // pred_check
      _
    $region43: #{swin_reid_forward.11} parent=1 // pred_check_branch
      %272 = sbr.rel (0) target = $region45
    $region44: #{swin_reid_forward.11} parent=1 // pred_region
      %273 = dma.done [#allocation5], 32
    $region45: #{swin_reid_forward.11} parent=1 // pred_fallthru
      _
    // Predicated region
    $region46: #{swin_reid_forward.11} parent=1 // pred_check
      _
    $region47: #{swin_reid_forward.11} parent=1 // pred_check_branch
      %275 = sbr.rel (0) target = $region49
    $region48: #{swin_reid_forward.11} parent=1 // pred_region
      %276 = dma.done [#allocation5], 32
    $region49: #{swin_reid_forward.11} parent=1 // pred_fallthru
      _
    %277 = vsyncpa [#allocation3], 1
    %278 = vsyncpa [#allocation5], 1

</llo_original>
